<compile_context>
chip_gen: v5e
topology: v5e:2x2
jax: 0.10.0
libtpu: 0.0.40
codegen_flags: <defaults>
</compile_context>

<pallas_src>
import jax
import jax.numpy as jnp
import numpy as np
from jax import lax
from jax.experimental import pallas as pl
from jax.experimental.pallas import tpu as pltpu


# ------------------------------ kernel factory --------------------------------

def _make_kernel(n_convs, K, H, W, n_in, nic, n_out, mxu_dtype):
    P = (K - 1) // 2
    HW = H * W
    # flat zero pad (multiple of 128 so the pad concat is pure vreg stacking)
    PAD = ((P * W + P + 127) // 128) * 128
    taps = [(kh, kw) for kh in range(K) for kw in range(K)]

    def pad_flat(x):                               # x: (C, HW) f32
        C = x.shape[0]
        z = jnp.zeros((C, PAD), jnp.float32)
        return jnp.concatenate([z, x, z], axis=1)  # (C, HW + 2*PAD)

    def shifted(xz, dh, dw):
        s = dh * W + dw
        return xz[:, PAD + s: PAD + s + HW]        # (C, HW) static lane slice

    def conv(x, w_ref, b_ref, wmask_ref, Cin, Cout):
        # w_ref: (Cout, K*K*Cin), columns ordered (kh*K + kw)*Cin + ci
        xz = pad_flat(x)
        acc = jnp.zeros((Cout, HW), jnp.float32)
        if Cin == 1:
            # degenerate contraction -> VPU outer-product accumulation
            for t, (kh, kw) in enumerate(taps):
                blk = shifted(xz, kh - P, kw - P) * wmask_ref[kw:kw + 1, :]  # (1,HW)
                acc = acc + w_ref[:, t:t + 1] * blk                          # (Cout,HW)
        else:
            taps_per_chunk = max(1, 128 // Cin)     # keep contraction <= ~128
            for c0 in range(0, len(taps), taps_per_chunk):
                chunk = taps[c0:c0 + taps_per_chunk]
                blocks = [shifted(xz, kh - P, kw - P) * wmask_ref[kw:kw + 1, :]
                          for (kh, kw) in chunk]                             # (Cin,HW) each
                slab = (jnp.concatenate(blocks, axis=0)
                        if len(blocks) > 1 else blocks[0])                   # (chunk*Cin,HW)
                wcols = w_ref[:, c0 * Cin:(c0 + len(chunk)) * Cin]           # (Cout,chunk*Cin)
                acc = acc + jnp.dot(wcols.astype(mxu_dtype),
                                    slab.astype(mxu_dtype),
                                    preferred_element_type=jnp.float32)
        return acc + b_ref[...]                     # bias (Cout, 1) broadcasts over lanes

    def maxpool3x3(x, pool_neg_ref):
        # 3x3, stride 1, padding 1 with implicit -inf padding (as F.max_pool2d)
        xz = pad_flat(x)
        m = x                                       # (0,0) tap is always valid
        for dh in (-1, 0, 1):
            for dw in (-1, 0, 1):
                if dh == 0 and dw == 0:
                    continue
                t = (dh + 1) * 3 + (dw + 1)
                sh = shifted(xz, dh, dw) + pool_neg_ref[t:t + 1, :]  # invalid -> ~-1e30
                m = jnp.maximum(m, sh)
        return m

    def kernel(x_ref, wmask_ref, pool_neg_ref, *rest):
        out_ref = rest[-1]
        wrefs = rest[:-1]            # w0,b0, w1,b1, ..., w_final, b_final

        x = x_ref[...].astype(jnp.float32)          # (n_in, HW)
        y = None
        coef = 1.0
        for i in range(n_convs):
            w_ref, b_ref = wrefs[2 * i], wrefs[2 * i + 1]
            Cin = n_in if i == 0 else nic
            a = conv(x, w_ref, b_ref, wmask_ref, Cin, nic)
            a = jnp.where(a > 0, a, 0.01 * a)       # leaky_relu(0.01)
            if i == 0:
                y = a
            else:
                y = y + coef * a                    # running weighted skip-sum
                coef = coef * 0.5
            if i < n_convs - 1:                     # last pool is unused by the module
                x = maxpool3x3(a, pool_neg_ref)

        wf_ref, bf_ref = wrefs[2 * n_convs], wrefs[2 * n_convs + 1]
        if n_out == 1:
            # 1x1 conv as a lane-dense VPU multiply + cross-sublane reduce
            out = jnp.sum(y * wf_ref[...], axis=0, keepdims=True) + bf_ref[...]
        else:
            out = lax.dot_general(wf_ref[...].astype(mxu_dtype),
                                  y.astype(mxu_dtype),
                                  (((0,), (0,)), ((), ())),
                                  preferred_element_type=jnp.float32) + bf_ref[...]
        out_ref[...] = out.astype(out_ref.dtype)    # (n_out, HW) lane-dense store

    return kernel


# ---------------------------------- wrapper ------------------------------------

def feedforward_pallas(x_nchw, params, *, kernel_size=5, mxu_dtype=jnp.float32):
    N, n_in, H, W = x_nchw.shape
    HW = H * W
    K = kernel_size
    P = (K - 1) // 2
    conv_params = params["convs"]              # list of (w (K,K,Cin_i,nic), b (nic,))
    wf, bf = params["final"]                   # (nic, n_out), (n_out,)
    n_convs = len(conv_params)
    nic = conv_params[0][0].shape[-1]
    n_out = wf.shape[-1]

    # Host-precomputed masks (constants): flat lane i -> (row, col) = (i//W, i%W).
    col = np.arange(HW) % W
    row = np.arange(HW) // W
    wmask = np.stack(
        [((col + (kw - P) >= 0) & (col + (kw - P) < W)).astype(np.float32)
         for kw in range(K)], axis=0)                                   # (K, HW)
    pool_rows = []
    for dh in (-1, 0, 1):
        for dw in (-1, 0, 1):
            valid = ((col + dw >= 0) & (col + dw < W) &
                     (row + dh >= 0) & (row + dh < H))
            pool_rows.append(np.where(valid, 0.0, -1e30).astype(np.float32))
    pool_neg = np.stack(pool_rows, axis=0)                              # (9, HW)

    # NCHW -> (N, C, H*W): already the lane-dense kernel layout (no transpose).
    x_flat = x_nchw.reshape(N, n_in, HW).astype(jnp.float32)

    flat_params = []
    in_specs = [
        pl.BlockSpec((None, n_in, HW), lambda n: (n, 0, 0)),
        pl.BlockSpec(wmask.shape, lambda n: (0, 0)),
        pl.BlockSpec(pool_neg.shape, lambda n: (0, 0)),
    ]
    for (w, b) in conv_params:                 # w is HWIO: (K, K, Cin, nic)
        cin = w.shape[2]
        w_flat = jnp.asarray(w).reshape(K * K * cin, nic).T             # (nic, K*K*Cin)
        b_col = jnp.asarray(b).reshape(nic, 1)
        flat_params += [w_flat, b_col]
        in_specs += [pl.BlockSpec(w_flat.shape, lambda n: (0, 0)),
                     pl.BlockSpec(b_col.shape, lambda n: (0, 0))]
    wf_a = jnp.asarray(wf)                                              # (nic, n_out)
    bf_col = jnp.asarray(bf).reshape(n_out, 1)
    flat_params += [wf_a, bf_col]
    in_specs += [pl.BlockSpec(wf_a.shape, lambda n: (0, 0)),
                 pl.BlockSpec(bf_col.shape, lambda n: (0, 0))]

    kernel = _make_kernel(n_convs, K, H, W, n_in, nic, n_out, mxu_dtype)
    out_flat = pl.pallas_call(
        kernel,
        out_shape=jax.ShapeDtypeStruct((N, n_out, HW), jnp.float32),
        grid=(N,),
        in_specs=in_specs,
        out_specs=pl.BlockSpec((None, n_out, HW), lambda n: (n, 0, 0)),
        compiler_params=pltpu.CompilerParams(
            dimension_semantics=("parallel",)),   # shards across the 2 TCs on v7x
    )(x_flat, jnp.asarray(wmask), jnp.asarray(pool_neg), *flat_params)
    return out_flat.reshape(N, n_out, H, W)       # back to NCHW


# ---------------------- deterministic parameter init ---------------------------

def init_params(key, n_input_channel, n_output_channel, depth, nic, kernel_size):
    convs = []
    for i in range(depth - 1):
        cin = n_input_channel if i == 0 else nic
        key, kw_, kb = jax.random.split(key, 3)
        bound = 1.0 / np.sqrt(cin * kernel_size * kernel_size)
        w = jax.random.uniform(kw_, (kernel_size, kernel_size, cin, nic),
                               jnp.float32, -bound, bound)
        b = jax.random.uniform(kb, (nic,), jnp.float32, -bound, bound)
        convs.append((w, b))
    key, kw_, kb = jax.random.split(key, 3)
    bound = 1.0 / np.sqrt(nic)
    wf = jax.random.uniform(kw_, (nic, n_output_channel), jnp.float32, -bound, bound)
    bf = jax.random.uniform(kb, (n_output_channel,), jnp.float32, -bound, bound)
    return {"convs": convs, "final": (wf, bf)}


# ------------------------------- JAX reference ----------------------------------

def reference_forward(x_nchw, params):
    act = x_nchw
    xn = []
    for (w, b) in params["convs"]:
        act = lax.conv_general_dilated(
            act, w, window_strides=(1, 1), padding="SAME",
            dimension_numbers=("NCHW", "HWIO", "NCHW"))
        act = act + b.reshape(1, -1, 1, 1)
        act = jnp.where(act > 0, act, 0.01 * act)
        xn.append(act)
        act = lax.reduce_window(
            act, -jnp.inf, lax.max,
            window_dimensions=(1, 1, 3, 3), window_strides=(1, 1, 1, 1),
            padding=((0, 0), (0, 0), (1, 1), (1, 1)))
    y = xn[0]
    s = 1.0
    for xk in xn[1:]:
        y = y + s * xk
        s = s * 0.5
    wf, bf = params["final"]
    y = jnp.einsum("nchw,co->nohw", y, wf) + bf.reshape(1, -1, 1, 1)
    return y


# ------------------------------------ main ---------------------------------------

if __name__ == "__main__":
    key = jax.random.PRNGKey(0)
    # Small config consistent with the module: depth=4 => 3 conv(5x5) layers + 1x1
    N, Cin, H, W = 2, 1, 16, 16
    depth, nic, ksize, Cout = 4, 8, 5, 1

    key, kx = jax.random.split(key)
    x = jax.random.normal(kx, (N, Cin, H, W), jnp.float32)
    params = init_params(key, Cin, Cout, depth, nic, ksize)

    out = feedforward_pallas(x, params, kernel_size=ksize)
    out = jax.block_until_ready(out)

    ref = reference_forward(x, params)
    np.testing.assert_allclose(np.asarray(out), np.asarray(ref),
                               rtol=1e-3, atol=1e-3)
    print("KERNEL_OK")
</pallas_src>

<mosaic_0001>
module attributes {stable_mosaic.version = 11 : i64} {
  func.func @kernel(%arg0: i32, %arg1: memref<1x1x256xf32, #tpu.memory_space<vmem>>, %arg2: memref<5x256xf32, #tpu.memory_space<vmem>>, %arg3: memref<9x256xf32, #tpu.memory_space<vmem>>, %arg4: memref<8x25xf32, #tpu.memory_space<vmem>>, %arg5: memref<8x1xf32, #tpu.memory_space<vmem>>, %arg6: memref<8x200xf32, #tpu.memory_space<vmem>>, %arg7: memref<8x1xf32, #tpu.memory_space<vmem>>, %arg8: memref<8x200xf32, #tpu.memory_space<vmem>>, %arg9: memref<8x1xf32, #tpu.memory_space<vmem>>, %arg10: memref<8x1xf32, #tpu.memory_space<vmem>>, %arg11: memref<1x1xf32, #tpu.memory_space<vmem>>, %arg12: memref<1x1x256xf32, #tpu.memory_space<vmem>>) attributes {dimension_semantics = [#tpu.dimension_semantics<parallel>], iteration_bounds = array<i64: 2>, scalar_prefetch = 0 : i64, scratch_operands = 0 : i64, tpu.core_type = #tpu.core_type<tc>, window_params = [{transform_indices = @transform_0, window_bounds = array<i64: 1, 1, 256>}, {pipeline_mode = #tpu.pipeline_mode<synchronous>, transform_indices = @transform_1, window_bounds = array<i64: 5, 256>}, {pipeline_mode = #tpu.pipeline_mode<synchronous>, transform_indices = @transform_2, window_bounds = array<i64: 9, 256>}, {pipeline_mode = #tpu.pipeline_mode<synchronous>, transform_indices = @transform_3, window_bounds = array<i64: 8, 25>}, {pipeline_mode = #tpu.pipeline_mode<synchronous>, transform_indices = @transform_4, window_bounds = array<i64: 8, 1>}, {pipeline_mode = #tpu.pipeline_mode<synchronous>, transform_indices = @transform_5, window_bounds = array<i64: 8, 200>}, {pipeline_mode = #tpu.pipeline_mode<synchronous>, transform_indices = @transform_6, window_bounds = array<i64: 8, 1>}, {pipeline_mode = #tpu.pipeline_mode<synchronous>, transform_indices = @transform_7, window_bounds = array<i64: 8, 200>}, {pipeline_mode = #tpu.pipeline_mode<synchronous>, transform_indices = @transform_8, window_bounds = array<i64: 8, 1>}, {pipeline_mode = #tpu.pipeline_mode<synchronous>, transform_indices = @transform_9, window_bounds = array<i64: 8, 1>}, {pipeline_mode = #tpu.pipeline_mode<synchronous>, transform_indices = @transform_10, window_bounds = array<i64: 1, 1>}, {transform_indices = @transform_11, window_bounds = array<i64: 1, 1, 256>}]} {
    %c0 = arith.constant 0 : index
    %c0_0 = arith.constant 0 : index
    %c0_1 = arith.constant 0 : index
    %0 = vector.load %arg1[%c0, %c0_0, %c0_1] : memref<1x1x256xf32, #tpu.memory_space<vmem>>, vector<1x1x256xf32>
    %1 = vector.shape_cast %0 : vector<1x1x256xf32> to vector<1x256xf32>
    %cst = arith.constant 0.000000e+00 : f32
    %2 = vector.broadcast %cst : f32 to vector<1x128xf32>
    %3 = tpu.concatenate %2, %1, %2 in 1 : vector<1x128xf32>, vector<1x256xf32>, vector<1x128xf32> -> vector<1x512xf32>
    %cst_2 = arith.constant 0.000000e+00 : f32
    %4 = vector.broadcast %cst_2 : f32 to vector<8x256xf32>
    %5 = vector.extract_strided_slice %3 {offsets = [0, 94], sizes = [1, 256], strides = [1, 1]} : vector<1x512xf32> to vector<1x256xf32>
    %c0_3 = arith.constant 0 : index
    %c0_4 = arith.constant 0 : index
    %6 = vector.load %arg2[%c0_3, %c0_4] : memref<5x256xf32, #tpu.memory_space<vmem>>, vector<1x256xf32>
    %7 = arith.mulf %5, %6 : vector<1x256xf32>
    %c0_5 = arith.constant 0 : index
    %c0_6 = arith.constant 0 : index
    %8 = vector.load %arg4[%c0_5, %c0_6] : memref<8x25xf32, #tpu.memory_space<vmem>>, vector<8x1xf32>
    %9 = vector.broadcast %8 : vector<8x1xf32> to vector<8x256xf32>
    %10 = vector.broadcast %7 : vector<1x256xf32> to vector<8x256xf32>
    %11 = arith.mulf %9, %10 : vector<8x256xf32>
    %12 = arith.addf %4, %11 : vector<8x256xf32>
    %13 = vector.extract_strided_slice %3 {offsets = [0, 95], sizes = [1, 256], strides = [1, 1]} : vector<1x512xf32> to vector<1x256xf32>
    %c1 = arith.constant 1 : index
    %c0_7 = arith.constant 0 : index
    %14 = vector.load %arg2[%c1, %c0_7] : memref<5x256xf32, #tpu.memory_space<vmem>>, vector<1x256xf32>
    %15 = arith.mulf %13, %14 : vector<1x256xf32>
    %c0_8 = arith.constant 0 : index
    %c1_9 = arith.constant 1 : index
    %16 = vector.load %arg4[%c0_8, %c1_9] : memref<8x25xf32, #tpu.memory_space<vmem>>, vector<8x1xf32>
    %17 = vector.broadcast %16 : vector<8x1xf32> to vector<8x256xf32>
    %18 = vector.broadcast %15 : vector<1x256xf32> to vector<8x256xf32>
    %19 = arith.mulf %17, %18 : vector<8x256xf32>
    %20 = arith.addf %12, %19 : vector<8x256xf32>
    %21 = vector.extract_strided_slice %3 {offsets = [0, 96], sizes = [1, 256], strides = [1, 1]} : vector<1x512xf32> to vector<1x256xf32>
    %c2 = arith.constant 2 : index
    %c0_10 = arith.constant 0 : index
    %22 = vector.load %arg2[%c2, %c0_10] : memref<5x256xf32, #tpu.memory_space<vmem>>, vector<1x256xf32>
    %23 = arith.mulf %21, %22 : vector<1x256xf32>
    %c0_11 = arith.constant 0 : index
    %c2_12 = arith.constant 2 : index
    %24 = vector.load %arg4[%c0_11, %c2_12] : memref<8x25xf32, #tpu.memory_space<vmem>>, vector<8x1xf32>
    %25 = vector.broadcast %24 : vector<8x1xf32> to vector<8x256xf32>
    %26 = vector.broadcast %23 : vector<1x256xf32> to vector<8x256xf32>
    %27 = arith.mulf %25, %26 : vector<8x256xf32>
    %28 = arith.addf %20, %27 : vector<8x256xf32>
    %29 = vector.extract_strided_slice %3 {offsets = [0, 97], sizes = [1, 256], strides = [1, 1]} : vector<1x512xf32> to vector<1x256xf32>
    %c3 = arith.constant 3 : index
    %c0_13 = arith.constant 0 : index
    %30 = vector.load %arg2[%c3, %c0_13] : memref<5x256xf32, #tpu.memory_space<vmem>>, vector<1x256xf32>
    %31 = arith.mulf %29, %30 : vector<1x256xf32>
    %c0_14 = arith.constant 0 : index
    %c3_15 = arith.constant 3 : index
    %32 = vector.load %arg4[%c0_14, %c3_15] : memref<8x25xf32, #tpu.memory_space<vmem>>, vector<8x1xf32>
    %33 = vector.broadcast %32 : vector<8x1xf32> to vector<8x256xf32>
    %34 = vector.broadcast %31 : vector<1x256xf32> to vector<8x256xf32>
    %35 = arith.mulf %33, %34 : vector<8x256xf32>
    %36 = arith.addf %28, %35 : vector<8x256xf32>
    %37 = vector.extract_strided_slice %3 {offsets = [0, 98], sizes = [1, 256], strides = [1, 1]} : vector<1x512xf32> to vector<1x256xf32>
    %c4 = arith.constant 4 : index
    %c0_16 = arith.constant 0 : index
    %38 = vector.load %arg2[%c4, %c0_16] : memref<5x256xf32, #tpu.memory_space<vmem>>, vector<1x256xf32>
    %39 = arith.mulf %37, %38 : vector<1x256xf32>
    %c0_17 = arith.constant 0 : index
    %c4_18 = arith.constant 4 : index
    %40 = vector.load %arg4[%c0_17, %c4_18] : memref<8x25xf32, #tpu.memory_space<vmem>>, vector<8x1xf32>
    %41 = vector.broadcast %40 : vector<8x1xf32> to vector<8x256xf32>
    %42 = vector.broadcast %39 : vector<1x256xf32> to vector<8x256xf32>
    %43 = arith.mulf %41, %42 : vector<8x256xf32>
    %44 = arith.addf %36, %43 : vector<8x256xf32>
    %45 = vector.extract_strided_slice %3 {offsets = [0, 110], sizes = [1, 256], strides = [1, 1]} : vector<1x512xf32> to vector<1x256xf32>
    %c0_19 = arith.constant 0 : index
    %c0_20 = arith.constant 0 : index
    %46 = vector.load %arg2[%c0_19, %c0_20] : memref<5x256xf32, #tpu.memory_space<vmem>>, vector<1x256xf32>
    %47 = arith.mulf %45, %46 : vector<1x256xf32>
    %c0_21 = arith.constant 0 : index
    %c5 = arith.constant 5 : index
    %48 = vector.load %arg4[%c0_21, %c5] : memref<8x25xf32, #tpu.memory_space<vmem>>, vector<8x1xf32>
    %49 = vector.broadcast %48 : vector<8x1xf32> to vector<8x256xf32>
    %50 = vector.broadcast %47 : vector<1x256xf32> to vector<8x256xf32>
    %51 = arith.mulf %49, %50 : vector<8x256xf32>
    %52 = arith.addf %44, %51 : vector<8x256xf32>
    %53 = vector.extract_strided_slice %3 {offsets = [0, 111], sizes = [1, 256], strides = [1, 1]} : vector<1x512xf32> to vector<1x256xf32>
    %c1_22 = arith.constant 1 : index
    %c0_23 = arith.constant 0 : index
    %54 = vector.load %arg2[%c1_22, %c0_23] : memref<5x256xf32, #tpu.memory_space<vmem>>, vector<1x256xf32>
    %55 = arith.mulf %53, %54 : vector<1x256xf32>
    %c0_24 = arith.constant 0 : index
    %c6 = arith.constant 6 : index
    %56 = vector.load %arg4[%c0_24, %c6] : memref<8x25xf32, #tpu.memory_space<vmem>>, vector<8x1xf32>
    %57 = vector.broadcast %56 : vector<8x1xf32> to vector<8x256xf32>
    %58 = vector.broadcast %55 : vector<1x256xf32> to vector<8x256xf32>
    %59 = arith.mulf %57, %58 : vector<8x256xf32>
    %60 = arith.addf %52, %59 : vector<8x256xf32>
    %61 = vector.extract_strided_slice %3 {offsets = [0, 112], sizes = [1, 256], strides = [1, 1]} : vector<1x512xf32> to vector<1x256xf32>
    %c2_25 = arith.constant 2 : index
    %c0_26 = arith.constant 0 : index
    %62 = vector.load %arg2[%c2_25, %c0_26] : memref<5x256xf32, #tpu.memory_space<vmem>>, vector<1x256xf32>
    %63 = arith.mulf %61, %62 : vector<1x256xf32>
    %c0_27 = arith.constant 0 : index
    %c7 = arith.constant 7 : index
    %64 = vector.load %arg4[%c0_27, %c7] : memref<8x25xf32, #tpu.memory_space<vmem>>, vector<8x1xf32>
    %65 = vector.broadcast %64 : vector<8x1xf32> to vector<8x256xf32>
    %66 = vector.broadcast %63 : vector<1x256xf32> to vector<8x256xf32>
    %67 = arith.mulf %65, %66 : vector<8x256xf32>
    %68 = arith.addf %60, %67 : vector<8x256xf32>
    %69 = vector.extract_strided_slice %3 {offsets = [0, 113], sizes = [1, 256], strides = [1, 1]} : vector<1x512xf32> to vector<1x256xf32>
    %c3_28 = arith.constant 3 : index
    %c0_29 = arith.constant 0 : index
    %70 = vector.load %arg2[%c3_28, %c0_29] : memref<5x256xf32, #tpu.memory_space<vmem>>, vector<1x256xf32>
    %71 = arith.mulf %69, %70 : vector<1x256xf32>
    %c0_30 = arith.constant 0 : index
    %c8 = arith.constant 8 : index
    %72 = vector.load %arg4[%c0_30, %c8] : memref<8x25xf32, #tpu.memory_space<vmem>>, vector<8x1xf32>
    %73 = vector.broadcast %72 : vector<8x1xf32> to vector<8x256xf32>
    %74 = vector.broadcast %71 : vector<1x256xf32> to vector<8x256xf32>
    %75 = arith.mulf %73, %74 : vector<8x256xf32>
    %76 = arith.addf %68, %75 : vector<8x256xf32>
    %77 = vector.extract_strided_slice %3 {offsets = [0, 114], sizes = [1, 256], strides = [1, 1]} : vector<1x512xf32> to vector<1x256xf32>
    %c4_31 = arith.constant 4 : index
    %c0_32 = arith.constant 0 : index
    %78 = vector.load %arg2[%c4_31, %c0_32] : memref<5x256xf32, #tpu.memory_space<vmem>>, vector<1x256xf32>
    %79 = arith.mulf %77, %78 : vector<1x256xf32>
    %c0_33 = arith.constant 0 : index
    %c9 = arith.constant 9 : index
    %80 = vector.load %arg4[%c0_33, %c9] : memref<8x25xf32, #tpu.memory_space<vmem>>, vector<8x1xf32>
    %81 = vector.broadcast %80 : vector<8x1xf32> to vector<8x256xf32>
    %82 = vector.broadcast %79 : vector<1x256xf32> to vector<8x256xf32>
    %83 = arith.mulf %81, %82 : vector<8x256xf32>
    %84 = arith.addf %76, %83 : vector<8x256xf32>
    %85 = vector.extract_strided_slice %3 {offsets = [0, 126], sizes = [1, 256], strides = [1, 1]} : vector<1x512xf32> to vector<1x256xf32>
    %c0_34 = arith.constant 0 : index
    %c0_35 = arith.constant 0 : index
    %86 = vector.load %arg2[%c0_34, %c0_35] : memref<5x256xf32, #tpu.memory_space<vmem>>, vector<1x256xf32>
    %87 = arith.mulf %85, %86 : vector<1x256xf32>
    %c0_36 = arith.constant 0 : index
    %c10 = arith.constant 10 : index
    %88 = vector.load %arg4[%c0_36, %c10] : memref<8x25xf32, #tpu.memory_space<vmem>>, vector<8x1xf32>
    %89 = vector.broadcast %88 : vector<8x1xf32> to vector<8x256xf32>
    %90 = vector.broadcast %87 : vector<1x256xf32> to vector<8x256xf32>
    %91 = arith.mulf %89, %90 : vector<8x256xf32>
    %92 = arith.addf %84, %91 : vector<8x256xf32>
    %93 = vector.extract_strided_slice %3 {offsets = [0, 127], sizes = [1, 256], strides = [1, 1]} : vector<1x512xf32> to vector<1x256xf32>
    %c1_37 = arith.constant 1 : index
    %c0_38 = arith.constant 0 : index
    %94 = vector.load %arg2[%c1_37, %c0_38] : memref<5x256xf32, #tpu.memory_space<vmem>>, vector<1x256xf32>
    %95 = arith.mulf %93, %94 : vector<1x256xf32>
    %c0_39 = arith.constant 0 : index
    %c11 = arith.constant 11 : index
    %96 = vector.load %arg4[%c0_39, %c11] : memref<8x25xf32, #tpu.memory_space<vmem>>, vector<8x1xf32>
    %97 = vector.broadcast %96 : vector<8x1xf32> to vector<8x256xf32>
    %98 = vector.broadcast %95 : vector<1x256xf32> to vector<8x256xf32>
    %99 = arith.mulf %97, %98 : vector<8x256xf32>
    %100 = arith.addf %92, %99 : vector<8x256xf32>
    %101 = vector.extract_strided_slice %3 {offsets = [0, 128], sizes = [1, 256], strides = [1, 1]} : vector<1x512xf32> to vector<1x256xf32>
    %c2_40 = arith.constant 2 : index
    %c0_41 = arith.constant 0 : index
    %102 = vector.load %arg2[%c2_40, %c0_41] : memref<5x256xf32, #tpu.memory_space<vmem>>, vector<1x256xf32>
    %103 = arith.mulf %101, %102 : vector<1x256xf32>
    %c0_42 = arith.constant 0 : index
    %c12 = arith.constant 12 : index
    %104 = vector.load %arg4[%c0_42, %c12] : memref<8x25xf32, #tpu.memory_space<vmem>>, vector<8x1xf32>
    %105 = vector.broadcast %104 : vector<8x1xf32> to vector<8x256xf32>
    %106 = vector.broadcast %103 : vector<1x256xf32> to vector<8x256xf32>
    %107 = arith.mulf %105, %106 : vector<8x256xf32>
    %108 = arith.addf %100, %107 : vector<8x256xf32>
    %109 = vector.extract_strided_slice %3 {offsets = [0, 129], sizes = [1, 256], strides = [1, 1]} : vector<1x512xf32> to vector<1x256xf32>
    %c3_43 = arith.constant 3 : index
    %c0_44 = arith.constant 0 : index
    %110 = vector.load %arg2[%c3_43, %c0_44] : memref<5x256xf32, #tpu.memory_space<vmem>>, vector<1x256xf32>
    %111 = arith.mulf %109, %110 : vector<1x256xf32>
    %c0_45 = arith.constant 0 : index
    %c13 = arith.constant 13 : index
    %112 = vector.load %arg4[%c0_45, %c13] : memref<8x25xf32, #tpu.memory_space<vmem>>, vector<8x1xf32>
    %113 = vector.broadcast %112 : vector<8x1xf32> to vector<8x256xf32>
    %114 = vector.broadcast %111 : vector<1x256xf32> to vector<8x256xf32>
    %115 = arith.mulf %113, %114 : vector<8x256xf32>
    %116 = arith.addf %108, %115 : vector<8x256xf32>
    %117 = vector.extract_strided_slice %3 {offsets = [0, 130], sizes = [1, 256], strides = [1, 1]} : vector<1x512xf32> to vector<1x256xf32>
    %c4_46 = arith.constant 4 : index
    %c0_47 = arith.constant 0 : index
    %118 = vector.load %arg2[%c4_46, %c0_47] : memref<5x256xf32, #tpu.memory_space<vmem>>, vector<1x256xf32>
    %119 = arith.mulf %117, %118 : vector<1x256xf32>
    %c0_48 = arith.constant 0 : index
    %c14 = arith.constant 14 : index
    %120 = vector.load %arg4[%c0_48, %c14] : memref<8x25xf32, #tpu.memory_space<vmem>>, vector<8x1xf32>
    %121 = vector.broadcast %120 : vector<8x1xf32> to vector<8x256xf32>
    %122 = vector.broadcast %119 : vector<1x256xf32> to vector<8x256xf32>
    %123 = arith.mulf %121, %122 : vector<8x256xf32>
    %124 = arith.addf %116, %123 : vector<8x256xf32>
    %125 = vector.extract_strided_slice %3 {offsets = [0, 142], sizes = [1, 256], strides = [1, 1]} : vector<1x512xf32> to vector<1x256xf32>
    %c0_49 = arith.constant 0 : index
    %c0_50 = arith.constant 0 : index
    %126 = vector.load %arg2[%c0_49, %c0_50] : memref<5x256xf32, #tpu.memory_space<vmem>>, vector<1x256xf32>
    %127 = arith.mulf %125, %126 : vector<1x256xf32>
    %c0_51 = arith.constant 0 : index
    %c15 = arith.constant 15 : index
    %128 = vector.load %arg4[%c0_51, %c15] : memref<8x25xf32, #tpu.memory_space<vmem>>, vector<8x1xf32>
    %129 = vector.broadcast %128 : vector<8x1xf32> to vector<8x256xf32>
    %130 = vector.broadcast %127 : vector<1x256xf32> to vector<8x256xf32>
    %131 = arith.mulf %129, %130 : vector<8x256xf32>
    %132 = arith.addf %124, %131 : vector<8x256xf32>
    %133 = vector.extract_strided_slice %3 {offsets = [0, 143], sizes = [1, 256], strides = [1, 1]} : vector<1x512xf32> to vector<1x256xf32>
    %c1_52 = arith.constant 1 : index
    %c0_53 = arith.constant 0 : index
    %134 = vector.load %arg2[%c1_52, %c0_53] : memref<5x256xf32, #tpu.memory_space<vmem>>, vector<1x256xf32>
    %135 = arith.mulf %133, %134 : vector<1x256xf32>
    %c0_54 = arith.constant 0 : index
    %c16 = arith.constant 16 : index
    %136 = vector.load %arg4[%c0_54, %c16] : memref<8x25xf32, #tpu.memory_space<vmem>>, vector<8x1xf32>
    %137 = vector.broadcast %136 : vector<8x1xf32> to vector<8x256xf32>
    %138 = vector.broadcast %135 : vector<1x256xf32> to vector<8x256xf32>
    %139 = arith.mulf %137, %138 : vector<8x256xf32>
    %140 = arith.addf %132, %139 : vector<8x256xf32>
    %141 = vector.extract_strided_slice %3 {offsets = [0, 144], sizes = [1, 256], strides = [1, 1]} : vector<1x512xf32> to vector<1x256xf32>
    %c2_55 = arith.constant 2 : index
    %c0_56 = arith.constant 0 : index
    %142 = vector.load %arg2[%c2_55, %c0_56] : memref<5x256xf32, #tpu.memory_space<vmem>>, vector<1x256xf32>
    %143 = arith.mulf %141, %142 : vector<1x256xf32>
    %c0_57 = arith.constant 0 : index
    %c17 = arith.constant 17 : index
    %144 = vector.load %arg4[%c0_57, %c17] : memref<8x25xf32, #tpu.memory_space<vmem>>, vector<8x1xf32>
    %145 = vector.broadcast %144 : vector<8x1xf32> to vector<8x256xf32>
    %146 = vector.broadcast %143 : vector<1x256xf32> to vector<8x256xf32>
    %147 = arith.mulf %145, %146 : vector<8x256xf32>
    %148 = arith.addf %140, %147 : vector<8x256xf32>
    %149 = vector.extract_strided_slice %3 {offsets = [0, 145], sizes = [1, 256], strides = [1, 1]} : vector<1x512xf32> to vector<1x256xf32>
    %c3_58 = arith.constant 3 : index
    %c0_59 = arith.constant 0 : index
    %150 = vector.load %arg2[%c3_58, %c0_59] : memref<5x256xf32, #tpu.memory_space<vmem>>, vector<1x256xf32>
    %151 = arith.mulf %149, %150 : vector<1x256xf32>
    %c0_60 = arith.constant 0 : index
    %c18 = arith.constant 18 : index
    %152 = vector.load %arg4[%c0_60, %c18] : memref<8x25xf32, #tpu.memory_space<vmem>>, vector<8x1xf32>
    %153 = vector.broadcast %152 : vector<8x1xf32> to vector<8x256xf32>
    %154 = vector.broadcast %151 : vector<1x256xf32> to vector<8x256xf32>
    %155 = arith.mulf %153, %154 : vector<8x256xf32>
    %156 = arith.addf %148, %155 : vector<8x256xf32>
    %157 = vector.extract_strided_slice %3 {offsets = [0, 146], sizes = [1, 256], strides = [1, 1]} : vector<1x512xf32> to vector<1x256xf32>
    %c4_61 = arith.constant 4 : index
    %c0_62 = arith.constant 0 : index
    %158 = vector.load %arg2[%c4_61, %c0_62] : memref<5x256xf32, #tpu.memory_space<vmem>>, vector<1x256xf32>
    %159 = arith.mulf %157, %158 : vector<1x256xf32>
    %c0_63 = arith.constant 0 : index
    %c19 = arith.constant 19 : index
    %160 = vector.load %arg4[%c0_63, %c19] : memref<8x25xf32, #tpu.memory_space<vmem>>, vector<8x1xf32>
    %161 = vector.broadcast %160 : vector<8x1xf32> to vector<8x256xf32>
    %162 = vector.broadcast %159 : vector<1x256xf32> to vector<8x256xf32>
    %163 = arith.mulf %161, %162 : vector<8x256xf32>
    %164 = arith.addf %156, %163 : vector<8x256xf32>
    %165 = vector.extract_strided_slice %3 {offsets = [0, 158], sizes = [1, 256], strides = [1, 1]} : vector<1x512xf32> to vector<1x256xf32>
    %c0_64 = arith.constant 0 : index
    %c0_65 = arith.constant 0 : index
    %166 = vector.load %arg2[%c0_64, %c0_65] : memref<5x256xf32, #tpu.memory_space<vmem>>, vector<1x256xf32>
    %167 = arith.mulf %165, %166 : vector<1x256xf32>
    %c0_66 = arith.constant 0 : index
    %c20 = arith.constant 20 : index
    %168 = vector.load %arg4[%c0_66, %c20] : memref<8x25xf32, #tpu.memory_space<vmem>>, vector<8x1xf32>
    %169 = vector.broadcast %168 : vector<8x1xf32> to vector<8x256xf32>
    %170 = vector.broadcast %167 : vector<1x256xf32> to vector<8x256xf32>
    %171 = arith.mulf %169, %170 : vector<8x256xf32>
    %172 = arith.addf %164, %171 : vector<8x256xf32>
    %173 = vector.extract_strided_slice %3 {offsets = [0, 159], sizes = [1, 256], strides = [1, 1]} : vector<1x512xf32> to vector<1x256xf32>
    %c1_67 = arith.constant 1 : index
    %c0_68 = arith.constant 0 : index
    %174 = vector.load %arg2[%c1_67, %c0_68] : memref<5x256xf32, #tpu.memory_space<vmem>>, vector<1x256xf32>
    %175 = arith.mulf %173, %174 : vector<1x256xf32>
    %c0_69 = arith.constant 0 : index
    %c21 = arith.constant 21 : index
    %176 = vector.load %arg4[%c0_69, %c21] : memref<8x25xf32, #tpu.memory_space<vmem>>, vector<8x1xf32>
    %177 = vector.broadcast %176 : vector<8x1xf32> to vector<8x256xf32>
    %178 = vector.broadcast %175 : vector<1x256xf32> to vector<8x256xf32>
    %179 = arith.mulf %177, %178 : vector<8x256xf32>
    %180 = arith.addf %172, %179 : vector<8x256xf32>
    %181 = vector.extract_strided_slice %3 {offsets = [0, 160], sizes = [1, 256], strides = [1, 1]} : vector<1x512xf32> to vector<1x256xf32>
    %c2_70 = arith.constant 2 : index
    %c0_71 = arith.constant 0 : index
    %182 = vector.load %arg2[%c2_70, %c0_71] : memref<5x256xf32, #tpu.memory_space<vmem>>, vector<1x256xf32>
    %183 = arith.mulf %181, %182 : vector<1x256xf32>
    %c0_72 = arith.constant 0 : index
    %c22 = arith.constant 22 : index
    %184 = vector.load %arg4[%c0_72, %c22] : memref<8x25xf32, #tpu.memory_space<vmem>>, vector<8x1xf32>
    %185 = vector.broadcast %184 : vector<8x1xf32> to vector<8x256xf32>
    %186 = vector.broadcast %183 : vector<1x256xf32> to vector<8x256xf32>
    %187 = arith.mulf %185, %186 : vector<8x256xf32>
    %188 = arith.addf %180, %187 : vector<8x256xf32>
    %189 = vector.extract_strided_slice %3 {offsets = [0, 161], sizes = [1, 256], strides = [1, 1]} : vector<1x512xf32> to vector<1x256xf32>
    %c3_73 = arith.constant 3 : index
    %c0_74 = arith.constant 0 : index
    %190 = vector.load %arg2[%c3_73, %c0_74] : memref<5x256xf32, #tpu.memory_space<vmem>>, vector<1x256xf32>
    %191 = arith.mulf %189, %190 : vector<1x256xf32>
    %c0_75 = arith.constant 0 : index
    %c23 = arith.constant 23 : index
    %192 = vector.load %arg4[%c0_75, %c23] : memref<8x25xf32, #tpu.memory_space<vmem>>, vector<8x1xf32>
    %193 = vector.broadcast %192 : vector<8x1xf32> to vector<8x256xf32>
    %194 = vector.broadcast %191 : vector<1x256xf32> to vector<8x256xf32>
    %195 = arith.mulf %193, %194 : vector<8x256xf32>
    %196 = arith.addf %188, %195 : vector<8x256xf32>
    %197 = vector.extract_strided_slice %3 {offsets = [0, 162], sizes = [1, 256], strides = [1, 1]} : vector<1x512xf32> to vector<1x256xf32>
    %c4_76 = arith.constant 4 : index
    %c0_77 = arith.constant 0 : index
    %198 = vector.load %arg2[%c4_76, %c0_77] : memref<5x256xf32, #tpu.memory_space<vmem>>, vector<1x256xf32>
    %199 = arith.mulf %197, %198 : vector<1x256xf32>
    %c0_78 = arith.constant 0 : index
    %c24 = arith.constant 24 : index
    %200 = vector.load %arg4[%c0_78, %c24] : memref<8x25xf32, #tpu.memory_space<vmem>>, vector<8x1xf32>
    %201 = vector.broadcast %200 : vector<8x1xf32> to vector<8x256xf32>
    %202 = vector.broadcast %199 : vector<1x256xf32> to vector<8x256xf32>
    %203 = arith.mulf %201, %202 : vector<8x256xf32>
    %204 = arith.addf %196, %203 : vector<8x256xf32>
    %c0_79 = arith.constant 0 : index
    %c0_80 = arith.constant 0 : index
    %205 = vector.load %arg5[%c0_79, %c0_80] : memref<8x1xf32, #tpu.memory_space<vmem>>, vector<8x1xf32>
    %206 = vector.broadcast %205 : vector<8x1xf32> to vector<8x256xf32>
    %207 = arith.addf %204, %206 : vector<8x256xf32>
    %cst_81 = arith.constant 0.000000e+00 : f32
    %208 = vector.broadcast %cst_81 : f32 to vector<8x256xf32>
    %209 = arith.cmpf ogt, %207, %208 : vector<8x256xf32>
    %cst_82 = arith.constant 0.00999999977 : f32
    %210 = vector.broadcast %cst_82 : f32 to vector<8x256xf32>
    %211 = arith.mulf %210, %207 : vector<8x256xf32>
    %212 = arith.select %209, %207, %211 : vector<8x256xi1>, vector<8x256xf32>
    %cst_83 = arith.constant 0.000000e+00 : f32
    %213 = vector.broadcast %cst_83 : f32 to vector<8x128xf32>
    %214 = tpu.concatenate %213, %212, %213 in 1 : vector<8x128xf32>, vector<8x256xf32>, vector<8x128xf32> -> vector<8x512xf32>
    %215 = vector.extract_strided_slice %214 {offsets = [0, 111], sizes = [8, 256], strides = [1, 1]} : vector<8x512xf32> to vector<8x256xf32>
    %c0_84 = arith.constant 0 : index
    %c0_85 = arith.constant 0 : index
    %216 = vector.load %arg3[%c0_84, %c0_85] : memref<9x256xf32, #tpu.memory_space<vmem>>, vector<1x256xf32>
    %217 = vector.broadcast %216 : vector<1x256xf32> to vector<8x256xf32>
    %218 = arith.addf %215, %217 : vector<8x256xf32>
    %219 = arith.maximumf %212, %218 : vector<8x256xf32>
    %220 = vector.extract_strided_slice %214 {offsets = [0, 112], sizes = [8, 256], strides = [1, 1]} : vector<8x512xf32> to vector<8x256xf32>
    %c1_86 = arith.constant 1 : index
    %c0_87 = arith.constant 0 : index
    %221 = vector.load %arg3[%c1_86, %c0_87] : memref<9x256xf32, #tpu.memory_space<vmem>>, vector<1x256xf32>
    %222 = vector.broadcast %221 : vector<1x256xf32> to vector<8x256xf32>
    %223 = arith.addf %220, %222 : vector<8x256xf32>
    %224 = arith.maximumf %219, %223 : vector<8x256xf32>
    %225 = vector.extract_strided_slice %214 {offsets = [0, 113], sizes = [8, 256], strides = [1, 1]} : vector<8x512xf32> to vector<8x256xf32>
    %c2_88 = arith.constant 2 : index
    %c0_89 = arith.constant 0 : index
    %226 = vector.load %arg3[%c2_88, %c0_89] : memref<9x256xf32, #tpu.memory_space<vmem>>, vector<1x256xf32>
    %227 = vector.broadcast %226 : vector<1x256xf32> to vector<8x256xf32>
    %228 = arith.addf %225, %227 : vector<8x256xf32>
    %229 = arith.maximumf %224, %228 : vector<8x256xf32>
    %230 = vector.extract_strided_slice %214 {offsets = [0, 127], sizes = [8, 256], strides = [1, 1]} : vector<8x512xf32> to vector<8x256xf32>
    %c3_90 = arith.constant 3 : index
    %c0_91 = arith.constant 0 : index
    %231 = vector.load %arg3[%c3_90, %c0_91] : memref<9x256xf32, #tpu.memory_space<vmem>>, vector<1x256xf32>
    %232 = vector.broadcast %231 : vector<1x256xf32> to vector<8x256xf32>
    %233 = arith.addf %230, %232 : vector<8x256xf32>
    %234 = arith.maximumf %229, %233 : vector<8x256xf32>
    %235 = vector.extract_strided_slice %214 {offsets = [0, 129], sizes = [8, 256], strides = [1, 1]} : vector<8x512xf32> to vector<8x256xf32>
    %c5_92 = arith.constant 5 : index
    %c0_93 = arith.constant 0 : index
    %236 = vector.load %arg3[%c5_92, %c0_93] : memref<9x256xf32, #tpu.memory_space<vmem>>, vector<1x256xf32>
    %237 = vector.broadcast %236 : vector<1x256xf32> to vector<8x256xf32>
    %238 = arith.addf %235, %237 : vector<8x256xf32>
    %239 = arith.maximumf %234, %238 : vector<8x256xf32>
    %240 = vector.extract_strided_slice %214 {offsets = [0, 143], sizes = [8, 256], strides = [1, 1]} : vector<8x512xf32> to vector<8x256xf32>
    %c6_94 = arith.constant 6 : index
    %c0_95 = arith.constant 0 : index
    %241 = vector.load %arg3[%c6_94, %c0_95] : memref<9x256xf32, #tpu.memory_space<vmem>>, vector<1x256xf32>
    %242 = vector.broadcast %241 : vector<1x256xf32> to vector<8x256xf32>
    %243 = arith.addf %240, %242 : vector<8x256xf32>
    %244 = arith.maximumf %239, %243 : vector<8x256xf32>
    %245 = vector.extract_strided_slice %214 {offsets = [0, 144], sizes = [8, 256], strides = [1, 1]} : vector<8x512xf32> to vector<8x256xf32>
    %c7_96 = arith.constant 7 : index
    %c0_97 = arith.constant 0 : index
    %246 = vector.load %arg3[%c7_96, %c0_97] : memref<9x256xf32, #tpu.memory_space<vmem>>, vector<1x256xf32>
    %247 = vector.broadcast %246 : vector<1x256xf32> to vector<8x256xf32>
    %248 = arith.addf %245, %247 : vector<8x256xf32>
    %249 = arith.maximumf %244, %248 : vector<8x256xf32>
    %250 = vector.extract_strided_slice %214 {offsets = [0, 145], sizes = [8, 256], strides = [1, 1]} : vector<8x512xf32> to vector<8x256xf32>
    %c8_98 = arith.constant 8 : index
    %c0_99 = arith.constant 0 : index
    %251 = vector.load %arg3[%c8_98, %c0_99] : memref<9x256xf32, #tpu.memory_space<vmem>>, vector<1x256xf32>
    %252 = vector.broadcast %251 : vector<1x256xf32> to vector<8x256xf32>
    %253 = arith.addf %250, %252 : vector<8x256xf32>
    %254 = arith.maximumf %249, %253 : vector<8x256xf32>
    %cst_100 = arith.constant 0.000000e+00 : f32
    %255 = vector.broadcast %cst_100 : f32 to vector<8x128xf32>
    %256 = tpu.concatenate %255, %254, %255 in 1 : vector<8x128xf32>, vector<8x256xf32>, vector<8x128xf32> -> vector<8x512xf32>
    %cst_101 = arith.constant 0.000000e+00 : f32
    %257 = vector.broadcast %cst_101 : f32 to vector<8x256xf32>
    %258 = vector.extract_strided_slice %256 {offsets = [0, 94], sizes = [8, 256], strides = [1, 1]} : vector<8x512xf32> to vector<8x256xf32>
    %c0_102 = arith.constant 0 : index
    %c0_103 = arith.constant 0 : index
    %259 = vector.load %arg2[%c0_102, %c0_103] : memref<5x256xf32, #tpu.memory_space<vmem>>, vector<1x256xf32>
    %260 = vector.broadcast %259 : vector<1x256xf32> to vector<8x256xf32>
    %261 = arith.mulf %258, %260 : vector<8x256xf32>
    %262 = vector.extract_strided_slice %256 {offsets = [0, 95], sizes = [8, 256], strides = [1, 1]} : vector<8x512xf32> to vector<8x256xf32>
    %c1_104 = arith.constant 1 : index
    %c0_105 = arith.constant 0 : index
    %263 = vector.load %arg2[%c1_104, %c0_105] : memref<5x256xf32, #tpu.memory_space<vmem>>, vector<1x256xf32>
    %264 = vector.broadcast %263 : vector<1x256xf32> to vector<8x256xf32>
    %265 = arith.mulf %262, %264 : vector<8x256xf32>
    %266 = vector.extract_strided_slice %256 {offsets = [0, 96], sizes = [8, 256], strides = [1, 1]} : vector<8x512xf32> to vector<8x256xf32>
    %c2_106 = arith.constant 2 : index
    %c0_107 = arith.constant 0 : index
    %267 = vector.load %arg2[%c2_106, %c0_107] : memref<5x256xf32, #tpu.memory_space<vmem>>, vector<1x256xf32>
    %268 = vector.broadcast %267 : vector<1x256xf32> to vector<8x256xf32>
    %269 = arith.mulf %266, %268 : vector<8x256xf32>
    %270 = vector.extract_strided_slice %256 {offsets = [0, 97], sizes = [8, 256], strides = [1, 1]} : vector<8x512xf32> to vector<8x256xf32>
    %c3_108 = arith.constant 3 : index
    %c0_109 = arith.constant 0 : index
    %271 = vector.load %arg2[%c3_108, %c0_109] : memref<5x256xf32, #tpu.memory_space<vmem>>, vector<1x256xf32>
    %272 = vector.broadcast %271 : vector<1x256xf32> to vector<8x256xf32>
    %273 = arith.mulf %270, %272 : vector<8x256xf32>
    %274 = vector.extract_strided_slice %256 {offsets = [0, 98], sizes = [8, 256], strides = [1, 1]} : vector<8x512xf32> to vector<8x256xf32>
    %c4_110 = arith.constant 4 : index
    %c0_111 = arith.constant 0 : index
    %275 = vector.load %arg2[%c4_110, %c0_111] : memref<5x256xf32, #tpu.memory_space<vmem>>, vector<1x256xf32>
    %276 = vector.broadcast %275 : vector<1x256xf32> to vector<8x256xf32>
    %277 = arith.mulf %274, %276 : vector<8x256xf32>
    %278 = vector.extract_strided_slice %256 {offsets = [0, 110], sizes = [8, 256], strides = [1, 1]} : vector<8x512xf32> to vector<8x256xf32>
    %c0_112 = arith.constant 0 : index
    %c0_113 = arith.constant 0 : index
    %279 = vector.load %arg2[%c0_112, %c0_113] : memref<5x256xf32, #tpu.memory_space<vmem>>, vector<1x256xf32>
    %280 = vector.broadcast %279 : vector<1x256xf32> to vector<8x256xf32>
    %281 = arith.mulf %278, %280 : vector<8x256xf32>
    %282 = vector.extract_strided_slice %256 {offsets = [0, 111], sizes = [8, 256], strides = [1, 1]} : vector<8x512xf32> to vector<8x256xf32>
    %c1_114 = arith.constant 1 : index
    %c0_115 = arith.constant 0 : index
    %283 = vector.load %arg2[%c1_114, %c0_115] : memref<5x256xf32, #tpu.memory_space<vmem>>, vector<1x256xf32>
    %284 = vector.broadcast %283 : vector<1x256xf32> to vector<8x256xf32>
    %285 = arith.mulf %282, %284 : vector<8x256xf32>
    %286 = vector.extract_strided_slice %256 {offsets = [0, 112], sizes = [8, 256], strides = [1, 1]} : vector<8x512xf32> to vector<8x256xf32>
    %c2_116 = arith.constant 2 : index
    %c0_117 = arith.constant 0 : index
    %287 = vector.load %arg2[%c2_116, %c0_117] : memref<5x256xf32, #tpu.memory_space<vmem>>, vector<1x256xf32>
    %288 = vector.broadcast %287 : vector<1x256xf32> to vector<8x256xf32>
    %289 = arith.mulf %286, %288 : vector<8x256xf32>
    %290 = vector.extract_strided_slice %256 {offsets = [0, 113], sizes = [8, 256], strides = [1, 1]} : vector<8x512xf32> to vector<8x256xf32>
    %c3_118 = arith.constant 3 : index
    %c0_119 = arith.constant 0 : index
    %291 = vector.load %arg2[%c3_118, %c0_119] : memref<5x256xf32, #tpu.memory_space<vmem>>, vector<1x256xf32>
    %292 = vector.broadcast %291 : vector<1x256xf32> to vector<8x256xf32>
    %293 = arith.mulf %290, %292 : vector<8x256xf32>
    %294 = vector.extract_strided_slice %256 {offsets = [0, 114], sizes = [8, 256], strides = [1, 1]} : vector<8x512xf32> to vector<8x256xf32>
    %c4_120 = arith.constant 4 : index
    %c0_121 = arith.constant 0 : index
    %295 = vector.load %arg2[%c4_120, %c0_121] : memref<5x256xf32, #tpu.memory_space<vmem>>, vector<1x256xf32>
    %296 = vector.broadcast %295 : vector<1x256xf32> to vector<8x256xf32>
    %297 = arith.mulf %294, %296 : vector<8x256xf32>
    %298 = vector.extract_strided_slice %256 {offsets = [0, 126], sizes = [8, 256], strides = [1, 1]} : vector<8x512xf32> to vector<8x256xf32>
    %c0_122 = arith.constant 0 : index
    %c0_123 = arith.constant 0 : index
    %299 = vector.load %arg2[%c0_122, %c0_123] : memref<5x256xf32, #tpu.memory_space<vmem>>, vector<1x256xf32>
    %300 = vector.broadcast %299 : vector<1x256xf32> to vector<8x256xf32>
    %301 = arith.mulf %298, %300 : vector<8x256xf32>
    %302 = vector.extract_strided_slice %256 {offsets = [0, 127], sizes = [8, 256], strides = [1, 1]} : vector<8x512xf32> to vector<8x256xf32>
    %c1_124 = arith.constant 1 : index
    %c0_125 = arith.constant 0 : index
    %303 = vector.load %arg2[%c1_124, %c0_125] : memref<5x256xf32, #tpu.memory_space<vmem>>, vector<1x256xf32>
    %304 = vector.broadcast %303 : vector<1x256xf32> to vector<8x256xf32>
    %305 = arith.mulf %302, %304 : vector<8x256xf32>
    %306 = vector.extract_strided_slice %256 {offsets = [0, 128], sizes = [8, 256], strides = [1, 1]} : vector<8x512xf32> to vector<8x256xf32>
    %c2_126 = arith.constant 2 : index
    %c0_127 = arith.constant 0 : index
    %307 = vector.load %arg2[%c2_126, %c0_127] : memref<5x256xf32, #tpu.memory_space<vmem>>, vector<1x256xf32>
    %308 = vector.broadcast %307 : vector<1x256xf32> to vector<8x256xf32>
    %309 = arith.mulf %306, %308 : vector<8x256xf32>
    %310 = vector.extract_strided_slice %256 {offsets = [0, 129], sizes = [8, 256], strides = [1, 1]} : vector<8x512xf32> to vector<8x256xf32>
    %c3_128 = arith.constant 3 : index
    %c0_129 = arith.constant 0 : index
    %311 = vector.load %arg2[%c3_128, %c0_129] : memref<5x256xf32, #tpu.memory_space<vmem>>, vector<1x256xf32>
    %312 = vector.broadcast %311 : vector<1x256xf32> to vector<8x256xf32>
    %313 = arith.mulf %310, %312 : vector<8x256xf32>
    %314 = vector.extract_strided_slice %256 {offsets = [0, 130], sizes = [8, 256], strides = [1, 1]} : vector<8x512xf32> to vector<8x256xf32>
    %c4_130 = arith.constant 4 : index
    %c0_131 = arith.constant 0 : index
    %315 = vector.load %arg2[%c4_130, %c0_131] : memref<5x256xf32, #tpu.memory_space<vmem>>, vector<1x256xf32>
    %316 = vector.broadcast %315 : vector<1x256xf32> to vector<8x256xf32>
    %317 = arith.mulf %314, %316 : vector<8x256xf32>
    %318 = vector.extract_strided_slice %256 {offsets = [0, 142], sizes = [8, 256], strides = [1, 1]} : vector<8x512xf32> to vector<8x256xf32>
    %c0_132 = arith.constant 0 : index
    %c0_133 = arith.constant 0 : index
    %319 = vector.load %arg2[%c0_132, %c0_133] : memref<5x256xf32, #tpu.memory_space<vmem>>, vector<1x256xf32>
    %320 = vector.broadcast %319 : vector<1x256xf32> to vector<8x256xf32>
    %321 = arith.mulf %318, %320 : vector<8x256xf32>
    %322 = tpu.concatenate %261, %265, %269, %273, %277, %281, %285, %289, %293, %297, %301, %305, %309, %313, %317, %321 in 0 : vector<8x256xf32>, vector<8x256xf32>, vector<8x256xf32>, vector<8x256xf32>, vector<8x256xf32>, vector<8x256xf32>, vector<8x256xf32>, vector<8x256xf32>, vector<8x256xf32>, vector<8x256xf32>, vector<8x256xf32>, vector<8x256xf32>, vector<8x256xf32>, vector<8x256xf32>, vector<8x256xf32>, vector<8x256xf32> -> vector<128x256xf32>
    %c0_134 = arith.constant 0 : index
    %c0_135 = arith.constant 0 : index
    %323 = vector.load %arg6[%c0_134, %c0_135] : memref<8x200xf32, #tpu.memory_space<vmem>>, vector<8x128xf32>
    %cst_136 = arith.constant dense<0.000000e+00> : vector<8x256xf32>
    %324 = tpu.matmul %323, %322, %cst_136 {dimension_numbers = #tpu.dot_dimension_numbers<[1], [0], [0], [1], [0, 0, 1, 1], [], []>} : vector<8x128xf32>, vector<128x256xf32>, vector<8x256xf32> -> vector<8x256xf32>
    %325 = arith.addf %257, %324 : vector<8x256xf32>
    %326 = vector.extract_strided_slice %256 {offsets = [0, 143], sizes = [8, 256], strides = [1, 1]} : vector<8x512xf32> to vector<8x256xf32>
    %c1_137 = arith.constant 1 : index
    %c0_138 = arith.constant 0 : index
    %327 = vector.load %arg2[%c1_137, %c0_138] : memref<5x256xf32, #tpu.memory_space<vmem>>, vector<1x256xf32>
    %328 = vector.broadcast %327 : vector<1x256xf32> to vector<8x256xf32>
    %329 = arith.mulf %326, %328 : vector<8x256xf32>
    %330 = vector.extract_strided_slice %256 {offsets = [0, 144], sizes = [8, 256], strides = [1, 1]} : vector<8x512xf32> to vector<8x256xf32>
    %c2_139 = arith.constant 2 : index
    %c0_140 = arith.constant 0 : index
    %331 = vector.load %arg2[%c2_139, %c0_140] : memref<5x256xf32, #tpu.memory_space<vmem>>, vector<1x256xf32>
    %332 = vector.broadcast %331 : vector<1x256xf32> to vector<8x256xf32>
    %333 = arith.mulf %330, %332 : vector<8x256xf32>
    %334 = vector.extract_strided_slice %256 {offsets = [0, 145], sizes = [8, 256], strides = [1, 1]} : vector<8x512xf32> to vector<8x256xf32>
    %c3_141 = arith.constant 3 : index
    %c0_142 = arith.constant 0 : index
    %335 = vector.load %arg2[%c3_141, %c0_142] : memref<5x256xf32, #tpu.memory_space<vmem>>, vector<1x256xf32>
    %336 = vector.broadcast %335 : vector<1x256xf32> to vector<8x256xf32>
    %337 = arith.mulf %334, %336 : vector<8x256xf32>
    %338 = vector.extract_strided_slice %256 {offsets = [0, 146], sizes = [8, 256], strides = [1, 1]} : vector<8x512xf32> to vector<8x256xf32>
    %c4_143 = arith.constant 4 : index
    %c0_144 = arith.constant 0 : index
    %339 = vector.load %arg2[%c4_143, %c0_144] : memref<5x256xf32, #tpu.memory_space<vmem>>, vector<1x256xf32>
    %340 = vector.broadcast %339 : vector<1x256xf32> to vector<8x256xf32>
    %341 = arith.mulf %338, %340 : vector<8x256xf32>
    %342 = vector.extract_strided_slice %256 {offsets = [0, 158], sizes = [8, 256], strides = [1, 1]} : vector<8x512xf32> to vector<8x256xf32>
    %c0_145 = arith.constant 0 : index
    %c0_146 = arith.constant 0 : index
    %343 = vector.load %arg2[%c0_145, %c0_146] : memref<5x256xf32, #tpu.memory_space<vmem>>, vector<1x256xf32>
    %344 = vector.broadcast %343 : vector<1x256xf32> to vector<8x256xf32>
    %345 = arith.mulf %342, %344 : vector<8x256xf32>
    %346 = vector.extract_strided_slice %256 {offsets = [0, 159], sizes = [8, 256], strides = [1, 1]} : vector<8x512xf32> to vector<8x256xf32>
    %c1_147 = arith.constant 1 : index
    %c0_148 = arith.constant 0 : index
    %347 = vector.load %arg2[%c1_147, %c0_148] : memref<5x256xf32, #tpu.memory_space<vmem>>, vector<1x256xf32>
    %348 = vector.broadcast %347 : vector<1x256xf32> to vector<8x256xf32>
    %349 = arith.mulf %346, %348 : vector<8x256xf32>
    %350 = vector.extract_strided_slice %256 {offsets = [0, 160], sizes = [8, 256], strides = [1, 1]} : vector<8x512xf32> to vector<8x256xf32>
    %c2_149 = arith.constant 2 : index
    %c0_150 = arith.constant 0 : index
    %351 = vector.load %arg2[%c2_149, %c0_150] : memref<5x256xf32, #tpu.memory_space<vmem>>, vector<1x256xf32>
    %352 = vector.broadcast %351 : vector<1x256xf32> to vector<8x256xf32>
    %353 = arith.mulf %350, %352 : vector<8x256xf32>
    %354 = vector.extract_strided_slice %256 {offsets = [0, 161], sizes = [8, 256], strides = [1, 1]} : vector<8x512xf32> to vector<8x256xf32>
    %c3_151 = arith.constant 3 : index
    %c0_152 = arith.constant 0 : index
    %355 = vector.load %arg2[%c3_151, %c0_152] : memref<5x256xf32, #tpu.memory_space<vmem>>, vector<1x256xf32>
    %356 = vector.broadcast %355 : vector<1x256xf32> to vector<8x256xf32>
    %357 = arith.mulf %354, %356 : vector<8x256xf32>
    %358 = vector.extract_strided_slice %256 {offsets = [0, 162], sizes = [8, 256], strides = [1, 1]} : vector<8x512xf32> to vector<8x256xf32>
    %c4_153 = arith.constant 4 : index
    %c0_154 = arith.constant 0 : index
    %359 = vector.load %arg2[%c4_153, %c0_154] : memref<5x256xf32, #tpu.memory_space<vmem>>, vector<1x256xf32>
    %360 = vector.broadcast %359 : vector<1x256xf32> to vector<8x256xf32>
    %361 = arith.mulf %358, %360 : vector<8x256xf32>
    %362 = tpu.concatenate %329, %333, %337, %341, %345, %349, %353, %357, %361 in 0 : vector<8x256xf32>, vector<8x256xf32>, vector<8x256xf32>, vector<8x256xf32>, vector<8x256xf32>, vector<8x256xf32>, vector<8x256xf32>, vector<8x256xf32>, vector<8x256xf32> -> vector<72x256xf32>
    %c0_155 = arith.constant 0 : index
    %c128 = arith.constant 128 : index
    %363 = vector.load %arg6[%c0_155, %c128] : memref<8x200xf32, #tpu.memory_space<vmem>>, vector<8x72xf32>
    %cst_156 = arith.constant dense<0.000000e+00> : vector<8x256xf32>
    %364 = tpu.matmul %363, %362, %cst_156 {dimension_numbers = #tpu.dot_dimension_numbers<[1], [0], [0], [1], [0, 0, 1, 1], [], []>} : vector<8x72xf32>, vector<72x256xf32>, vector<8x256xf32> -> vector<8x256xf32>
    %365 = arith.addf %325, %364 : vector<8x256xf32>
    %c0_157 = arith.constant 0 : index
    %c0_158 = arith.constant 0 : index
    %366 = vector.load %arg7[%c0_157, %c0_158] : memref<8x1xf32, #tpu.memory_space<vmem>>, vector<8x1xf32>
    %367 = vector.broadcast %366 : vector<8x1xf32> to vector<8x256xf32>
    %368 = arith.addf %365, %367 : vector<8x256xf32>
    %cst_159 = arith.constant 0.000000e+00 : f32
    %369 = vector.broadcast %cst_159 : f32 to vector<8x256xf32>
    %370 = arith.cmpf ogt, %368, %369 : vector<8x256xf32>
    %cst_160 = arith.constant 0.00999999977 : f32
    %371 = vector.broadcast %cst_160 : f32 to vector<8x256xf32>
    %372 = arith.mulf %371, %368 : vector<8x256xf32>
    %373 = arith.select %370, %368, %372 : vector<8x256xi1>, vector<8x256xf32>
    %cst_161 = arith.constant 1.000000e+00 : f32
    %374 = vector.broadcast %cst_161 : f32 to vector<8x256xf32>
    %375 = arith.mulf %374, %373 : vector<8x256xf32>
    %376 = arith.addf %212, %375 : vector<8x256xf32>
    %cst_162 = arith.constant 0.000000e+00 : f32
    %377 = vector.broadcast %cst_162 : f32 to vector<8x128xf32>
    %378 = tpu.concatenate %377, %373, %377 in 1 : vector<8x128xf32>, vector<8x256xf32>, vector<8x128xf32> -> vector<8x512xf32>
    %379 = vector.extract_strided_slice %378 {offsets = [0, 111], sizes = [8, 256], strides = [1, 1]} : vector<8x512xf32> to vector<8x256xf32>
    %c0_163 = arith.constant 0 : index
    %c0_164 = arith.constant 0 : index
    %380 = vector.load %arg3[%c0_163, %c0_164] : memref<9x256xf32, #tpu.memory_space<vmem>>, vector<1x256xf32>
    %381 = vector.broadcast %380 : vector<1x256xf32> to vector<8x256xf32>
    %382 = arith.addf %379, %381 : vector<8x256xf32>
    %383 = arith.maximumf %373, %382 : vector<8x256xf32>
    %384 = vector.extract_strided_slice %378 {offsets = [0, 112], sizes = [8, 256], strides = [1, 1]} : vector<8x512xf32> to vector<8x256xf32>
    %c1_165 = arith.constant 1 : index
    %c0_166 = arith.constant 0 : index
    %385 = vector.load %arg3[%c1_165, %c0_166] : memref<9x256xf32, #tpu.memory_space<vmem>>, vector<1x256xf32>
    %386 = vector.broadcast %385 : vector<1x256xf32> to vector<8x256xf32>
    %387 = arith.addf %384, %386 : vector<8x256xf32>
    %388 = arith.maximumf %383, %387 : vector<8x256xf32>
    %389 = vector.extract_strided_slice %378 {offsets = [0, 113], sizes = [8, 256], strides = [1, 1]} : vector<8x512xf32> to vector<8x256xf32>
    %c2_167 = arith.constant 2 : index
    %c0_168 = arith.constant 0 : index
    %390 = vector.load %arg3[%c2_167, %c0_168] : memref<9x256xf32, #tpu.memory_space<vmem>>, vector<1x256xf32>
    %391 = vector.broadcast %390 : vector<1x256xf32> to vector<8x256xf32>
    %392 = arith.addf %389, %391 : vector<8x256xf32>
    %393 = arith.maximumf %388, %392 : vector<8x256xf32>
    %394 = vector.extract_strided_slice %378 {offsets = [0, 127], sizes = [8, 256], strides = [1, 1]} : vector<8x512xf32> to vector<8x256xf32>
    %c3_169 = arith.constant 3 : index
    %c0_170 = arith.constant 0 : index
    %395 = vector.load %arg3[%c3_169, %c0_170] : memref<9x256xf32, #tpu.memory_space<vmem>>, vector<1x256xf32>
    %396 = vector.broadcast %395 : vector<1x256xf32> to vector<8x256xf32>
    %397 = arith.addf %394, %396 : vector<8x256xf32>
    %398 = arith.maximumf %393, %397 : vector<8x256xf32>
    %399 = vector.extract_strided_slice %378 {offsets = [0, 129], sizes = [8, 256], strides = [1, 1]} : vector<8x512xf32> to vector<8x256xf32>
    %c5_171 = arith.constant 5 : index
    %c0_172 = arith.constant 0 : index
    %400 = vector.load %arg3[%c5_171, %c0_172] : memref<9x256xf32, #tpu.memory_space<vmem>>, vector<1x256xf32>
    %401 = vector.broadcast %400 : vector<1x256xf32> to vector<8x256xf32>
    %402 = arith.addf %399, %401 : vector<8x256xf32>
    %403 = arith.maximumf %398, %402 : vector<8x256xf32>
    %404 = vector.extract_strided_slice %378 {offsets = [0, 143], sizes = [8, 256], strides = [1, 1]} : vector<8x512xf32> to vector<8x256xf32>
    %c6_173 = arith.constant 6 : index
    %c0_174 = arith.constant 0 : index
    %405 = vector.load %arg3[%c6_173, %c0_174] : memref<9x256xf32, #tpu.memory_space<vmem>>, vector<1x256xf32>
    %406 = vector.broadcast %405 : vector<1x256xf32> to vector<8x256xf32>
    %407 = arith.addf %404, %406 : vector<8x256xf32>
    %408 = arith.maximumf %403, %407 : vector<8x256xf32>
    %409 = vector.extract_strided_slice %378 {offsets = [0, 144], sizes = [8, 256], strides = [1, 1]} : vector<8x512xf32> to vector<8x256xf32>
    %c7_175 = arith.constant 7 : index
    %c0_176 = arith.constant 0 : index
    %410 = vector.load %arg3[%c7_175, %c0_176] : memref<9x256xf32, #tpu.memory_space<vmem>>, vector<1x256xf32>
    %411 = vector.broadcast %410 : vector<1x256xf32> to vector<8x256xf32>
    %412 = arith.addf %409, %411 : vector<8x256xf32>
    %413 = arith.maximumf %408, %412 : vector<8x256xf32>
    %414 = vector.extract_strided_slice %378 {offsets = [0, 145], sizes = [8, 256], strides = [1, 1]} : vector<8x512xf32> to vector<8x256xf32>
    %c8_177 = arith.constant 8 : index
    %c0_178 = arith.constant 0 : index
    %415 = vector.load %arg3[%c8_177, %c0_178] : memref<9x256xf32, #tpu.memory_space<vmem>>, vector<1x256xf32>
    %416 = vector.broadcast %415 : vector<1x256xf32> to vector<8x256xf32>
    %417 = arith.addf %414, %416 : vector<8x256xf32>
    %418 = arith.maximumf %413, %417 : vector<8x256xf32>
    %cst_179 = arith.constant 0.000000e+00 : f32
    %419 = vector.broadcast %cst_179 : f32 to vector<8x128xf32>
    %420 = tpu.concatenate %419, %418, %419 in 1 : vector<8x128xf32>, vector<8x256xf32>, vector<8x128xf32> -> vector<8x512xf32>
    %cst_180 = arith.constant 0.000000e+00 : f32
    %421 = vector.broadcast %cst_180 : f32 to vector<8x256xf32>
    %422 = vector.extract_strided_slice %420 {offsets = [0, 94], sizes = [8, 256], strides = [1, 1]} : vector<8x512xf32> to vector<8x256xf32>
    %c0_181 = arith.constant 0 : index
    %c0_182 = arith.constant 0 : index
    %423 = vector.load %arg2[%c0_181, %c0_182] : memref<5x256xf32, #tpu.memory_space<vmem>>, vector<1x256xf32>
    %424 = vector.broadcast %423 : vector<1x256xf32> to vector<8x256xf32>
    %425 = arith.mulf %422, %424 : vector<8x256xf32>
    %426 = vector.extract_strided_slice %420 {offsets = [0, 95], sizes = [8, 256], strides = [1, 1]} : vector<8x512xf32> to vector<8x256xf32>
    %c1_183 = arith.constant 1 : index
    %c0_184 = arith.constant 0 : index
    %427 = vector.load %arg2[%c1_183, %c0_184] : memref<5x256xf32, #tpu.memory_space<vmem>>, vector<1x256xf32>
    %428 = vector.broadcast %427 : vector<1x256xf32> to vector<8x256xf32>
    %429 = arith.mulf %426, %428 : vector<8x256xf32>
    %430 = vector.extract_strided_slice %420 {offsets = [0, 96], sizes = [8, 256], strides = [1, 1]} : vector<8x512xf32> to vector<8x256xf32>
    %c2_185 = arith.constant 2 : index
    %c0_186 = arith.constant 0 : index
    %431 = vector.load %arg2[%c2_185, %c0_186] : memref<5x256xf32, #tpu.memory_space<vmem>>, vector<1x256xf32>
    %432 = vector.broadcast %431 : vector<1x256xf32> to vector<8x256xf32>
    %433 = arith.mulf %430, %432 : vector<8x256xf32>
    %434 = vector.extract_strided_slice %420 {offsets = [0, 97], sizes = [8, 256], strides = [1, 1]} : vector<8x512xf32> to vector<8x256xf32>
    %c3_187 = arith.constant 3 : index
    %c0_188 = arith.constant 0 : index
    %435 = vector.load %arg2[%c3_187, %c0_188] : memref<5x256xf32, #tpu.memory_space<vmem>>, vector<1x256xf32>
    %436 = vector.broadcast %435 : vector<1x256xf32> to vector<8x256xf32>
    %437 = arith.mulf %434, %436 : vector<8x256xf32>
    %438 = vector.extract_strided_slice %420 {offsets = [0, 98], sizes = [8, 256], strides = [1, 1]} : vector<8x512xf32> to vector<8x256xf32>
    %c4_189 = arith.constant 4 : index
    %c0_190 = arith.constant 0 : index
    %439 = vector.load %arg2[%c4_189, %c0_190] : memref<5x256xf32, #tpu.memory_space<vmem>>, vector<1x256xf32>
    %440 = vector.broadcast %439 : vector<1x256xf32> to vector<8x256xf32>
    %441 = arith.mulf %438, %440 : vector<8x256xf32>
    %442 = vector.extract_strided_slice %420 {offsets = [0, 110], sizes = [8, 256], strides = [1, 1]} : vector<8x512xf32> to vector<8x256xf32>
    %c0_191 = arith.constant 0 : index
    %c0_192 = arith.constant 0 : index
    %443 = vector.load %arg2[%c0_191, %c0_192] : memref<5x256xf32, #tpu.memory_space<vmem>>, vector<1x256xf32>
    %444 = vector.broadcast %443 : vector<1x256xf32> to vector<8x256xf32>
    %445 = arith.mulf %442, %444 : vector<8x256xf32>
    %446 = vector.extract_strided_slice %420 {offsets = [0, 111], sizes = [8, 256], strides = [1, 1]} : vector<8x512xf32> to vector<8x256xf32>
    %c1_193 = arith.constant 1 : index
    %c0_194 = arith.constant 0 : index
    %447 = vector.load %arg2[%c1_193, %c0_194] : memref<5x256xf32, #tpu.memory_space<vmem>>, vector<1x256xf32>
    %448 = vector.broadcast %447 : vector<1x256xf32> to vector<8x256xf32>
    %449 = arith.mulf %446, %448 : vector<8x256xf32>
    %450 = vector.extract_strided_slice %420 {offsets = [0, 112], sizes = [8, 256], strides = [1, 1]} : vector<8x512xf32> to vector<8x256xf32>
    %c2_195 = arith.constant 2 : index
    %c0_196 = arith.constant 0 : index
    %451 = vector.load %arg2[%c2_195, %c0_196] : memref<5x256xf32, #tpu.memory_space<vmem>>, vector<1x256xf32>
    %452 = vector.broadcast %451 : vector<1x256xf32> to vector<8x256xf32>
    %453 = arith.mulf %450, %452 : vector<8x256xf32>
    %454 = vector.extract_strided_slice %420 {offsets = [0, 113], sizes = [8, 256], strides = [1, 1]} : vector<8x512xf32> to vector<8x256xf32>
    %c3_197 = arith.constant 3 : index
    %c0_198 = arith.constant 0 : index
    %455 = vector.load %arg2[%c3_197, %c0_198] : memref<5x256xf32, #tpu.memory_space<vmem>>, vector<1x256xf32>
    %456 = vector.broadcast %455 : vector<1x256xf32> to vector<8x256xf32>
    %457 = arith.mulf %454, %456 : vector<8x256xf32>
    %458 = vector.extract_strided_slice %420 {offsets = [0, 114], sizes = [8, 256], strides = [1, 1]} : vector<8x512xf32> to vector<8x256xf32>
    %c4_199 = arith.constant 4 : index
    %c0_200 = arith.constant 0 : index
    %459 = vector.load %arg2[%c4_199, %c0_200] : memref<5x256xf32, #tpu.memory_space<vmem>>, vector<1x256xf32>
    %460 = vector.broadcast %459 : vector<1x256xf32> to vector<8x256xf32>
    %461 = arith.mulf %458, %460 : vector<8x256xf32>
    %462 = vector.extract_strided_slice %420 {offsets = [0, 126], sizes = [8, 256], strides = [1, 1]} : vector<8x512xf32> to vector<8x256xf32>
    %c0_201 = arith.constant 0 : index
    %c0_202 = arith.constant 0 : index
    %463 = vector.load %arg2[%c0_201, %c0_202] : memref<5x256xf32, #tpu.memory_space<vmem>>, vector<1x256xf32>
    %464 = vector.broadcast %463 : vector<1x256xf32> to vector<8x256xf32>
    %465 = arith.mulf %462, %464 : vector<8x256xf32>
    %466 = vector.extract_strided_slice %420 {offsets = [0, 127], sizes = [8, 256], strides = [1, 1]} : vector<8x512xf32> to vector<8x256xf32>
    %c1_203 = arith.constant 1 : index
    %c0_204 = arith.constant 0 : index
    %467 = vector.load %arg2[%c1_203, %c0_204] : memref<5x256xf32, #tpu.memory_space<vmem>>, vector<1x256xf32>
    %468 = vector.broadcast %467 : vector<1x256xf32> to vector<8x256xf32>
    %469 = arith.mulf %466, %468 : vector<8x256xf32>
    %470 = vector.extract_strided_slice %420 {offsets = [0, 128], sizes = [8, 256], strides = [1, 1]} : vector<8x512xf32> to vector<8x256xf32>
    %c2_205 = arith.constant 2 : index
    %c0_206 = arith.constant 0 : index
    %471 = vector.load %arg2[%c2_205, %c0_206] : memref<5x256xf32, #tpu.memory_space<vmem>>, vector<1x256xf32>
    %472 = vector.broadcast %471 : vector<1x256xf32> to vector<8x256xf32>
    %473 = arith.mulf %470, %472 : vector<8x256xf32>
    %474 = vector.extract_strided_slice %420 {offsets = [0, 129], sizes = [8, 256], strides = [1, 1]} : vector<8x512xf32> to vector<8x256xf32>
    %c3_207 = arith.constant 3 : index
    %c0_208 = arith.constant 0 : index
    %475 = vector.load %arg2[%c3_207, %c0_208] : memref<5x256xf32, #tpu.memory_space<vmem>>, vector<1x256xf32>
    %476 = vector.broadcast %475 : vector<1x256xf32> to vector<8x256xf32>
    %477 = arith.mulf %474, %476 : vector<8x256xf32>
    %478 = vector.extract_strided_slice %420 {offsets = [0, 130], sizes = [8, 256], strides = [1, 1]} : vector<8x512xf32> to vector<8x256xf32>
    %c4_209 = arith.constant 4 : index
    %c0_210 = arith.constant 0 : index
    %479 = vector.load %arg2[%c4_209, %c0_210] : memref<5x256xf32, #tpu.memory_space<vmem>>, vector<1x256xf32>
    %480 = vector.broadcast %479 : vector<1x256xf32> to vector<8x256xf32>
    %481 = arith.mulf %478, %480 : vector<8x256xf32>
    %482 = vector.extract_strided_slice %420 {offsets = [0, 142], sizes = [8, 256], strides = [1, 1]} : vector<8x512xf32> to vector<8x256xf32>
    %c0_211 = arith.constant 0 : index
    %c0_212 = arith.constant 0 : index
    %483 = vector.load %arg2[%c0_211, %c0_212] : memref<5x256xf32, #tpu.memory_space<vmem>>, vector<1x256xf32>
    %484 = vector.broadcast %483 : vector<1x256xf32> to vector<8x256xf32>
    %485 = arith.mulf %482, %484 : vector<8x256xf32>
    %486 = tpu.concatenate %425, %429, %433, %437, %441, %445, %449, %453, %457, %461, %465, %469, %473, %477, %481, %485 in 0 : vector<8x256xf32>, vector<8x256xf32>, vector<8x256xf32>, vector<8x256xf32>, vector<8x256xf32>, vector<8x256xf32>, vector<8x256xf32>, vector<8x256xf32>, vector<8x256xf32>, vector<8x256xf32>, vector<8x256xf32>, vector<8x256xf32>, vector<8x256xf32>, vector<8x256xf32>, vector<8x256xf32>, vector<8x256xf32> -> vector<128x256xf32>
    %c0_213 = arith.constant 0 : index
    %c0_214 = arith.constant 0 : index
    %487 = vector.load %arg8[%c0_213, %c0_214] : memref<8x200xf32, #tpu.memory_space<vmem>>, vector<8x128xf32>
    %cst_215 = arith.constant dense<0.000000e+00> : vector<8x256xf32>
    %488 = tpu.matmul %487, %486, %cst_215 {dimension_numbers = #tpu.dot_dimension_numbers<[1], [0], [0], [1], [0, 0, 1, 1], [], []>} : vector<8x128xf32>, vector<128x256xf32>, vector<8x256xf32> -> vector<8x256xf32>
    %489 = arith.addf %421, %488 : vector<8x256xf32>
    %490 = vector.extract_strided_slice %420 {offsets = [0, 143], sizes = [8, 256], strides = [1, 1]} : vector<8x512xf32> to vector<8x256xf32>
    %c1_216 = arith.constant 1 : index
    %c0_217 = arith.constant 0 : index
    %491 = vector.load %arg2[%c1_216, %c0_217] : memref<5x256xf32, #tpu.memory_space<vmem>>, vector<1x256xf32>
    %492 = vector.broadcast %491 : vector<1x256xf32> to vector<8x256xf32>
    %493 = arith.mulf %490, %492 : vector<8x256xf32>
    %494 = vector.extract_strided_slice %420 {offsets = [0, 144], sizes = [8, 256], strides = [1, 1]} : vector<8x512xf32> to vector<8x256xf32>
    %c2_218 = arith.constant 2 : index
    %c0_219 = arith.constant 0 : index
    %495 = vector.load %arg2[%c2_218, %c0_219] : memref<5x256xf32, #tpu.memory_space<vmem>>, vector<1x256xf32>
    %496 = vector.broadcast %495 : vector<1x256xf32> to vector<8x256xf32>
    %497 = arith.mulf %494, %496 : vector<8x256xf32>
    %498 = vector.extract_strided_slice %420 {offsets = [0, 145], sizes = [8, 256], strides = [1, 1]} : vector<8x512xf32> to vector<8x256xf32>
    %c3_220 = arith.constant 3 : index
    %c0_221 = arith.constant 0 : index
    %499 = vector.load %arg2[%c3_220, %c0_221] : memref<5x256xf32, #tpu.memory_space<vmem>>, vector<1x256xf32>
    %500 = vector.broadcast %499 : vector<1x256xf32> to vector<8x256xf32>
    %501 = arith.mulf %498, %500 : vector<8x256xf32>
    %502 = vector.extract_strided_slice %420 {offsets = [0, 146], sizes = [8, 256], strides = [1, 1]} : vector<8x512xf32> to vector<8x256xf32>
    %c4_222 = arith.constant 4 : index
    %c0_223 = arith.constant 0 : index
    %503 = vector.load %arg2[%c4_222, %c0_223] : memref<5x256xf32, #tpu.memory_space<vmem>>, vector<1x256xf32>
    %504 = vector.broadcast %503 : vector<1x256xf32> to vector<8x256xf32>
    %505 = arith.mulf %502, %504 : vector<8x256xf32>
    %506 = vector.extract_strided_slice %420 {offsets = [0, 158], sizes = [8, 256], strides = [1, 1]} : vector<8x512xf32> to vector<8x256xf32>
    %c0_224 = arith.constant 0 : index
    %c0_225 = arith.constant 0 : index
    %507 = vector.load %arg2[%c0_224, %c0_225] : memref<5x256xf32, #tpu.memory_space<vmem>>, vector<1x256xf32>
    %508 = vector.broadcast %507 : vector<1x256xf32> to vector<8x256xf32>
    %509 = arith.mulf %506, %508 : vector<8x256xf32>
    %510 = vector.extract_strided_slice %420 {offsets = [0, 159], sizes = [8, 256], strides = [1, 1]} : vector<8x512xf32> to vector<8x256xf32>
    %c1_226 = arith.constant 1 : index
    %c0_227 = arith.constant 0 : index
    %511 = vector.load %arg2[%c1_226, %c0_227] : memref<5x256xf32, #tpu.memory_space<vmem>>, vector<1x256xf32>
    %512 = vector.broadcast %511 : vector<1x256xf32> to vector<8x256xf32>
    %513 = arith.mulf %510, %512 : vector<8x256xf32>
    %514 = vector.extract_strided_slice %420 {offsets = [0, 160], sizes = [8, 256], strides = [1, 1]} : vector<8x512xf32> to vector<8x256xf32>
    %c2_228 = arith.constant 2 : index
    %c0_229 = arith.constant 0 : index
    %515 = vector.load %arg2[%c2_228, %c0_229] : memref<5x256xf32, #tpu.memory_space<vmem>>, vector<1x256xf32>
    %516 = vector.broadcast %515 : vector<1x256xf32> to vector<8x256xf32>
    %517 = arith.mulf %514, %516 : vector<8x256xf32>
    %518 = vector.extract_strided_slice %420 {offsets = [0, 161], sizes = [8, 256], strides = [1, 1]} : vector<8x512xf32> to vector<8x256xf32>
    %c3_230 = arith.constant 3 : index
    %c0_231 = arith.constant 0 : index
    %519 = vector.load %arg2[%c3_230, %c0_231] : memref<5x256xf32, #tpu.memory_space<vmem>>, vector<1x256xf32>
    %520 = vector.broadcast %519 : vector<1x256xf32> to vector<8x256xf32>
    %521 = arith.mulf %518, %520 : vector<8x256xf32>
    %522 = vector.extract_strided_slice %420 {offsets = [0, 162], sizes = [8, 256], strides = [1, 1]} : vector<8x512xf32> to vector<8x256xf32>
    %c4_232 = arith.constant 4 : index
    %c0_233 = arith.constant 0 : index
    %523 = vector.load %arg2[%c4_232, %c0_233] : memref<5x256xf32, #tpu.memory_space<vmem>>, vector<1x256xf32>
    %524 = vector.broadcast %523 : vector<1x256xf32> to vector<8x256xf32>
    %525 = arith.mulf %522, %524 : vector<8x256xf32>
    %526 = tpu.concatenate %493, %497, %501, %505, %509, %513, %517, %521, %525 in 0 : vector<8x256xf32>, vector<8x256xf32>, vector<8x256xf32>, vector<8x256xf32>, vector<8x256xf32>, vector<8x256xf32>, vector<8x256xf32>, vector<8x256xf32>, vector<8x256xf32> -> vector<72x256xf32>
    %c0_234 = arith.constant 0 : index
    %c128_235 = arith.constant 128 : index
    %527 = vector.load %arg8[%c0_234, %c128_235] : memref<8x200xf32, #tpu.memory_space<vmem>>, vector<8x72xf32>
    %cst_236 = arith.constant dense<0.000000e+00> : vector<8x256xf32>
    %528 = tpu.matmul %527, %526, %cst_236 {dimension_numbers = #tpu.dot_dimension_numbers<[1], [0], [0], [1], [0, 0, 1, 1], [], []>} : vector<8x72xf32>, vector<72x256xf32>, vector<8x256xf32> -> vector<8x256xf32>
    %529 = arith.addf %489, %528 : vector<8x256xf32>
    %c0_237 = arith.constant 0 : index
    %c0_238 = arith.constant 0 : index
    %530 = vector.load %arg9[%c0_237, %c0_238] : memref<8x1xf32, #tpu.memory_space<vmem>>, vector<8x1xf32>
    %531 = vector.broadcast %530 : vector<8x1xf32> to vector<8x256xf32>
    %532 = arith.addf %529, %531 : vector<8x256xf32>
    %cst_239 = arith.constant 0.000000e+00 : f32
    %533 = vector.broadcast %cst_239 : f32 to vector<8x256xf32>
    %534 = arith.cmpf ogt, %532, %533 : vector<8x256xf32>
    %cst_240 = arith.constant 0.00999999977 : f32
    %535 = vector.broadcast %cst_240 : f32 to vector<8x256xf32>
    %536 = arith.mulf %535, %532 : vector<8x256xf32>
    %537 = arith.select %534, %532, %536 : vector<8x256xi1>, vector<8x256xf32>
    %cst_241 = arith.constant 5.000000e-01 : f32
    %538 = vector.broadcast %cst_241 : f32 to vector<8x256xf32>
    %539 = arith.mulf %538, %537 : vector<8x256xf32>
    %540 = arith.addf %376, %539 : vector<8x256xf32>
    %c0_242 = arith.constant 0 : index
    %c0_243 = arith.constant 0 : index
    %541 = vector.load %arg10[%c0_242, %c0_243] : memref<8x1xf32, #tpu.memory_space<vmem>>, vector<8x1xf32>
    %542 = vector.broadcast %541 : vector<8x1xf32> to vector<8x256xf32>
    %543 = arith.mulf %540, %542 : vector<8x256xf32>
    %cst_244 = arith.constant dense<0.000000e+00> : vector<256xf32>
    %544 = vector.multi_reduction <add>, %543, %cst_244 [0] : vector<8x256xf32> to vector<256xf32>
    %545 = vector.shape_cast %544 : vector<256xf32> to vector<1x256xf32>
    %c0_245 = arith.constant 0 : index
    %c0_246 = arith.constant 0 : index
    %546 = vector.load %arg11[%c0_245, %c0_246] : memref<1x1xf32, #tpu.memory_space<vmem>>, vector<1x1xf32>
    %547 = vector.broadcast %546 : vector<1x1xf32> to vector<1x256xf32>
    %548 = arith.addf %545, %547 : vector<1x256xf32>
    %c0_247 = arith.constant 0 : index
    %c0_248 = arith.constant 0 : index
    %c0_249 = arith.constant 0 : index
    %549 = vector.load %arg12[%c0_247, %c0_248, %c0_249] : memref<1x1x256xf32, #tpu.memory_space<vmem>>, vector<1x1x256xf32>
    %550 = vector.shape_cast %549 : vector<1x1x256xf32> to vector<1x256xf32>
    %551 = vector.shape_cast %548 : vector<1x256xf32> to vector<1x1x256xf32>
    tpu.vector_store %arg12[%c0_247, %c0_248, %c0_249], %551 {strides = array<i32>} : memref<1x1x256xf32, #tpu.memory_space<vmem>>, vector<1x1x256xf32>,
    return
  }
  func.func @transform_0(%arg0: i32) -> (i32, i32, i32) {
    %c0_i32 = arith.constant 0 : i32
    %c0_i32_0 = arith.constant 0 : i32
    %c0_i32_1 = arith.constant 0 : i32
    return %arg0, %c0_i32, %c0_i32_0 : i32, i32, i32
  }
  func.func @transform_1(%arg0: i32) -> (i32, i32) {
    %c0_i32 = arith.constant 0 : i32
    %c0_i32_0 = arith.constant 0 : i32
    %c0_i32_1 = arith.constant 0 : i32
    return %c0_i32, %c0_i32_0 : i32, i32
  }
  func.func @transform_2(%arg0: i32) -> (i32, i32) {
    %c0_i32 = arith.constant 0 : i32
    %c0_i32_0 = arith.constant 0 : i32
    %c0_i32_1 = arith.constant 0 : i32
    return %c0_i32, %c0_i32_0 : i32, i32
  }
  func.func @transform_3(%arg0: i32) -> (i32, i32) {
    %c0_i32 = arith.constant 0 : i32
    %c0_i32_0 = arith.constant 0 : i32
    %c0_i32_1 = arith.constant 0 : i32
    return %c0_i32, %c0_i32_0 : i32, i32
  }
  func.func @transform_4(%arg0: i32) -> (i32, i32) {
    %c0_i32 = arith.constant 0 : i32
    %c0_i32_0 = arith.constant 0 : i32
    %c0_i32_1 = arith.constant 0 : i32
    return %c0_i32, %c0_i32_0 : i32, i32
  }
  func.func @transform_5(%arg0: i32) -> (i32, i32) {
    %c0_i32 = arith.constant 0 : i32
    %c0_i32_0 = arith.constant 0 : i32
    %c0_i32_1 = arith.constant 0 : i32
    return %c0_i32, %c0_i32_0 : i32, i32
  }
  func.func @transform_6(%arg0: i32) -> (i32, i32) {
    %c0_i32 = arith.constant 0 : i32
    %c0_i32_0 = arith.constant 0 : i32
    %c0_i32_1 = arith.constant 0 : i32
    return %c0_i32, %c0_i32_0 : i32, i32
  }
  func.func @transform_7(%arg0: i32) -> (i32, i32) {
    %c0_i32 = arith.constant 0 : i32
    %c0_i32_0 = arith.constant 0 : i32
    %c0_i32_1 = arith.constant 0 : i32
    return %c0_i32, %c0_i32_0 : i32, i32
  }
  func.func @transform_8(%arg0: i32) -> (i32, i32) {
    %c0_i32 = arith.constant 0 : i32
    %c0_i32_0 = arith.constant 0 : i32
    %c0_i32_1 = arith.constant 0 : i32
    return %c0_i32, %c0_i32_0 : i32, i32
  }
  func.func @transform_9(%arg0: i32) -> (i32, i32) {
    %c0_i32 = arith.constant 0 : i32
    %c0_i32_0 = arith.constant 0 : i32
    %c0_i32_1 = arith.constant 0 : i32
    return %c0_i32, %c0_i32_0 : i32, i32
  }
  func.func @transform_10(%arg0: i32) -> (i32, i32) {
    %c0_i32 = arith.constant 0 : i32
    %c0_i32_0 = arith.constant 0 : i32
    %c0_i32_1 = arith.constant 0 : i32
    return %c0_i32, %c0_i32_0 : i32, i32
  }
  func.func @transform_11(%arg0: i32) -> (i32, i32, i32) {
    %c0_i32 = arith.constant 0 : i32
    %c0_i32_0 = arith.constant 0 : i32
    %c0_i32_1 = arith.constant 0 : i32
    return %arg0, %c0_i32, %c0_i32_0 : i32, i32, i32
  }
}

</mosaic_0001>

<llo_original>
// kernel: tpu_custom_call.1
$region0: #{tpu_custom_call.1}
  #allocation0 [shape = 'u32[]', space=smem, size = 0x4, offset = 0x4, fixed_abs, tag = 'smem constant byte address 0x4 - core index']
  #allocation1 [shape = 'u32[72,128]{1,0:T(1,128)}', space=vmem, size = 0x9000, scoped, tag = 'internal scratch']
  #allocation2 [shape = 'f32[1,1]{1,0:T(1,128)S(1)}', space=vmem, size = 0x200, scoped, tag = 'scoped memory for tpu_custom_call.1']
  %s0 = inlined_call_operand.hbm [shape: f32[2,1,256], index: 0, kind: input, shape index: {}]
  %s1 = inlined_call_operand.vmem [shape: f32[5,256], index: 1, kind: input, shape index: {}]
  %s2 = inlined_call_operand.hbm [shape: f32[9,256], index: 2, kind: input, shape index: {}]
  %s3 = inlined_call_operand.hbm [shape: f32[8,25], index: 3, kind: input, shape index: {}]
  %s4 = inlined_call_operand.vmem [shape: f32[8,1], index: 4, kind: input, shape index: {}]
  %s5 = inlined_call_operand.vmem [shape: f32[8,200], index: 5, kind: input, shape index: {}]
  %s6 = inlined_call_operand.vmem [shape: f32[8,1], index: 6, kind: input, shape index: {}]
  %s7 = inlined_call_operand.hbm [shape: f32[8,200], index: 7, kind: input, shape index: {}]
  %s8 = inlined_call_operand.vmem [shape: f32[8,1], index: 8, kind: input, shape index: {}]
  %s9 = inlined_call_operand.vmem [shape: f32[8,1], index: 9, kind: input, shape index: {}]
  %s10 = inlined_call_operand.<no memory space> [shape: f32[1,1], index: 10, kind: input, shape index: {}]
  %s11 = inlined_call_operand.hbm [shape: f32[2,1,256], index: 11, kind: output, shape index: {}]
  %s12 = sld [smem:[#allocation0]]
  $region93: #{tpu_custom_call.1} parent=0
    _
  %s14 = ssub.s32 1, %s12
  %s15 = scalar_select 0, %s14, %s12
  %v16 = vstv %s10
  %17 = vst [vmem:[#allocation2] sm:$0x1] %v16
  $region1: #{tpu_custom_call.1} parent=0
    #allocation3 [shape = 'u8[2048]{0}', space=vmem, size = 0x800, scoped, tag = 'input window, operand 0']
    #allocation4 [shape = 's32[2]{0}', space=sflag, size = 0x8, scoped, tag = 'scoped memory for tpu_custom_call.1']
    #allocation5 [shape = 's32[2]{0}', space=sflag, size = 0x8, scoped, tag = 'scoped memory for tpu_custom_call.1']
    #allocation6 [shape = 'u8[16384]{0}', space=vmem, size = 0x4000, scoped, tag = 'input window, operand 2, single buffered']
    #allocation7 [shape = 's32[1]{0}', space=sflag, size = 0x4, scoped, tag = 'scoped memory for tpu_custom_call.1']
    #allocation8 [shape = 'u8[4096]{0}', space=vmem, size = 0x1000, scoped, tag = 'input window, operand 3, single buffered']
    #allocation9 [shape = 'u8[8192]{0}', space=vmem, size = 0x2000, scoped, tag = 'input window, operand 7, single buffered']
    #allocation10 [shape = 's32[1]{0}', space=sflag, size = 0x4, scoped, tag = 'scoped memory for tpu_custom_call.1']
    #allocation11 [shape = 'u8[2048]{0}', space=vmem, size = 0x800, scoped, tag = 'output window, operand 0']
    %18 = vsyncpa [#allocation4], 0
    %s19 = scalar_lea.sflag [#allocation4], 1
    %20 = vsyncpa %s19, 0
    %21 = vsyncpa [#allocation7], 0
    %22 = vsyncpa [#allocation10], 0
    %23 = vsyncpa [#allocation5], 0
    %s24 = scalar_lea.sflag [#allocation5], 1
    %25 = vsyncpa %s24, 0
    loop: start=0, step=1, limit=4
    $region2: #{tpu_custom_call.1} parent=1 // loop_pre_header
      _
    $region3: #{tpu_custom_call.1} parent=1 // loop_header
      %s27 = sphi 0, %s31
      %p28 = scmp.ge.s32.totalorder %s27, 4
      %s37 = sphi 0, %s39
      %s40 = sphi 0, %s37
      %s41 = sphi 0, %s40
      %s57 = sphi 0, %s41
      %s61 = sphi 0, %s61
      %s63 = sphi 0, %s61
      %s64 = sphi 0, %s63
      %s78 = sphi 0, %s64
      %s82 = sphi 0, %s82
      %s84 = sphi 0, %s82
      %s85 = sphi 0, %s84
      %s99 = sphi 0, %s85
      %s103 = sphi 0, %s103
      %s105 = sphi 0, %s103
      %s106 = sphi 0, %s105
      %s120 = sphi 0, %s106
      %s124 = sphi 0, %s124
      %s126 = sphi 0, %s124
      %s127 = sphi 0, %s126
      %s141 = sphi 0, %s127
      %s145 = sphi 0, %s145
      %s147 = sphi 0, %s145
      %s148 = sphi 0, %s147
      %s162 = sphi 0, %s148
      %s166 = sphi 0, %s166
      %s168 = sphi 0, %s166
      %s169 = sphi 0, %s168
      %s183 = sphi 0, %s169
      %s187 = sphi 0, %s187
      %s189 = sphi 0, %s187
      %s190 = sphi 0, %s189
      %s204 = sphi 0, %s190
      %s208 = sphi 0, %s208
      %s210 = sphi 0, %s208
      %s211 = sphi 0, %s210
      %s225 = sphi 0, %s211
      %s229 = sphi 0, %s229
      %s231 = sphi 0, %s229
      %s232 = sphi 0, %s231
      %s246 = sphi 0, %s232
      %s250 = sphi 0, %s250
      %s252 = sphi 0, %s250
      %s253 = sphi 0, %s252
      %s267 = sphi 0, %s253
      %s273 = sphi 0, %s275
      %s276 = sphi 0, %s273
      %s277 = sphi 0, %s276
      %s293 = sphi 0, %s277
    $region4: #{tpu_custom_call.1} parent=1 // loop_header_branch
      %30 = sbr.rel (%p28) target = $region8
    $region5: #{tpu_custom_call.1} parent=1 // loop_body
      %s32 = ssub.s32 %s27, 1
      %s33 = ssub.s32 %s27, 2
      %s34 = sadd.s32 %s27, 1
      %s35 = ssub.s32 %s27, %s34
      %p36 = scmp.eq.s32.totalorder %s35, 0
      %s38 = sadd.s32 %s37, 1
      %s39 = scalar_select %p36, %s37, %s38
      %p42 = pneg %p36
      %p43 = scmp.eq.s32.totalorder %s27, 1
      %p44 = por %p42, %p43
      %p45 = scmp.ne.s32.totalorder %s37, %s40
      %p46 = scmp.eq.s32.totalorder %s27, 0
      %p47 = por %p45, %p46
      %p48 = scmp.ne.s32.totalorder %s37, %s40
      %p49 = scmp.eq.s32.totalorder %s32, 1
      %p50 = por %p48, %p49
      %p51 = scmp.ne.s32.totalorder %s40, %s41
      %p52 = scmp.eq.s32.totalorder %s32, 0
      %p53 = por %p51, %p52
      %p54 = scmp.ne.s32.totalorder %s40, %s41
      %p55 = scmp.eq.s32.totalorder %s33, 1
      %p56 = por %p54, %p55
      %p58 = scmp.ne.s32.totalorder %s41, %s57
      %p59 = scmp.eq.s32.totalorder %s33, 0
      %p60 = por %p58, %p59
      %s62 = sadd.s32 %s61, 1
      %p65 = scmp.eq.s32.totalorder %s27, 1
      %p66 = scmp.ne.s32.totalorder %s61, %s63
      %p67 = scmp.eq.s32.totalorder %s27, 0
      %p68 = por %p66, %p67
      %p69 = scmp.ne.s32.totalorder %s61, %s63
      %p70 = scmp.eq.s32.totalorder %s32, 1
      %p71 = por %p69, %p70
      %p72 = scmp.ne.s32.totalorder %s63, %s64
      %p73 = scmp.eq.s32.totalorder %s32, 0
      %p74 = por %p72, %p73
      %p75 = scmp.ne.s32.totalorder %s63, %s64
      %p76 = scmp.eq.s32.totalorder %s33, 1
      %p77 = por %p75, %p76
      %p79 = scmp.ne.s32.totalorder %s64, %s78
      %p80 = scmp.eq.s32.totalorder %s33, 0
      %p81 = por %p79, %p80
      %s83 = sadd.s32 %s82, 1
      %p86 = scmp.eq.s32.totalorder %s27, 1
      %p87 = scmp.ne.s32.totalorder %s82, %s84
      %p88 = scmp.eq.s32.totalorder %s27, 0
      %p89 = por %p87, %p88
      %p90 = scmp.ne.s32.totalorder %s82, %s84
      %p91 = scmp.eq.s32.totalorder %s32, 1
      %p92 = por %p90, %p91
      %p93 = scmp.ne.s32.totalorder %s84, %s85
      %p94 = scmp.eq.s32.totalorder %s32, 0
      %p95 = por %p93, %p94
      %p96 = scmp.ne.s32.totalorder %s84, %s85
      %p97 = scmp.eq.s32.totalorder %s33, 1
      %p98 = por %p96, %p97
      %p100 = scmp.ne.s32.totalorder %s85, %s99
      %p101 = scmp.eq.s32.totalorder %s33, 0
      %p102 = por %p100, %p101
      %s104 = sadd.s32 %s103, 1
      %p107 = scmp.eq.s32.totalorder %s27, 1
      %p108 = scmp.ne.s32.totalorder %s103, %s105
      %p109 = scmp.eq.s32.totalorder %s27, 0
      %p110 = por %p108, %p109
      %p111 = scmp.ne.s32.totalorder %s103, %s105
      %p112 = scmp.eq.s32.totalorder %s32, 1
      %p113 = por %p111, %p112
      %p114 = scmp.ne.s32.totalorder %s105, %s106
      %p115 = scmp.eq.s32.totalorder %s32, 0
      %p116 = por %p114, %p115
      %p117 = scmp.ne.s32.totalorder %s105, %s106
      %p118 = scmp.eq.s32.totalorder %s33, 1
      %p119 = por %p117, %p118
      %p121 = scmp.ne.s32.totalorder %s106, %s120
      %p122 = scmp.eq.s32.totalorder %s33, 0
      %p123 = por %p121, %p122
      %s125 = sadd.s32 %s124, 1
      %p128 = scmp.eq.s32.totalorder %s27, 1
      %p129 = scmp.ne.s32.totalorder %s124, %s126
      %p130 = scmp.eq.s32.totalorder %s27, 0
      %p131 = por %p129, %p130
      %p132 = scmp.ne.s32.totalorder %s124, %s126
      %p133 = scmp.eq.s32.totalorder %s32, 1
      %p134 = por %p132, %p133
      %p135 = scmp.ne.s32.totalorder %s126, %s127
      %p136 = scmp.eq.s32.totalorder %s32, 0
      %p137 = por %p135, %p136
      %p138 = scmp.ne.s32.totalorder %s126, %s127
      %p139 = scmp.eq.s32.totalorder %s33, 1
      %p140 = por %p138, %p139
      %p142 = scmp.ne.s32.totalorder %s127, %s141
      %p143 = scmp.eq.s32.totalorder %s33, 0
      %p144 = por %p142, %p143
      %s146 = sadd.s32 %s145, 1
      %p149 = scmp.eq.s32.totalorder %s27, 1
      %p150 = scmp.ne.s32.totalorder %s145, %s147
      %p151 = scmp.eq.s32.totalorder %s27, 0
      %p152 = por %p150, %p151
      %p153 = scmp.ne.s32.totalorder %s145, %s147
      %p154 = scmp.eq.s32.totalorder %s32, 1
      %p155 = por %p153, %p154
      %p156 = scmp.ne.s32.totalorder %s147, %s148
      %p157 = scmp.eq.s32.totalorder %s32, 0
      %p158 = por %p156, %p157
      %p159 = scmp.ne.s32.totalorder %s147, %s148
      %p160 = scmp.eq.s32.totalorder %s33, 1
      %p161 = por %p159, %p160
      %p163 = scmp.ne.s32.totalorder %s148, %s162
      %p164 = scmp.eq.s32.totalorder %s33, 0
      %p165 = por %p163, %p164
      %s167 = sadd.s32 %s166, 1
      %p170 = scmp.eq.s32.totalorder %s27, 1
      %p171 = scmp.ne.s32.totalorder %s166, %s168
      %p172 = scmp.eq.s32.totalorder %s27, 0
      %p173 = por %p171, %p172
      %p174 = scmp.ne.s32.totalorder %s166, %s168
      %p175 = scmp.eq.s32.totalorder %s32, 1
      %p176 = por %p174, %p175
      %p177 = scmp.ne.s32.totalorder %s168, %s169
      %p178 = scmp.eq.s32.totalorder %s32, 0
      %p179 = por %p177, %p178
      %p180 = scmp.ne.s32.totalorder %s168, %s169
      %p181 = scmp.eq.s32.totalorder %s33, 1
      %p182 = por %p180, %p181
      %p184 = scmp.ne.s32.totalorder %s169, %s183
      %p185 = scmp.eq.s32.totalorder %s33, 0
      %p186 = por %p184, %p185
      %s188 = sadd.s32 %s187, 1
      %p191 = scmp.eq.s32.totalorder %s27, 1
      %p192 = scmp.ne.s32.totalorder %s187, %s189
      %p193 = scmp.eq.s32.totalorder %s27, 0
      %p194 = por %p192, %p193
      %p195 = scmp.ne.s32.totalorder %s187, %s189
      %p196 = scmp.eq.s32.totalorder %s32, 1
      %p197 = por %p195, %p196
      %p198 = scmp.ne.s32.totalorder %s189, %s190
      %p199 = scmp.eq.s32.totalorder %s32, 0
      %p200 = por %p198, %p199
      %p201 = scmp.ne.s32.totalorder %s189, %s190
      %p202 = scmp.eq.s32.totalorder %s33, 1
      %p203 = por %p201, %p202
      %p205 = scmp.ne.s32.totalorder %s190, %s204
      %p206 = scmp.eq.s32.totalorder %s33, 0
      %p207 = por %p205, %p206
      %s209 = sadd.s32 %s208, 1
      %p212 = scmp.eq.s32.totalorder %s27, 1
      %p213 = scmp.ne.s32.totalorder %s208, %s210
      %p214 = scmp.eq.s32.totalorder %s27, 0
      %p215 = por %p213, %p214
      %p216 = scmp.ne.s32.totalorder %s208, %s210
      %p217 = scmp.eq.s32.totalorder %s32, 1
      %p218 = por %p216, %p217
      %p219 = scmp.ne.s32.totalorder %s210, %s211
      %p220 = scmp.eq.s32.totalorder %s32, 0
      %p221 = por %p219, %p220
      %p222 = scmp.ne.s32.totalorder %s210, %s211
      %p223 = scmp.eq.s32.totalorder %s33, 1
      %p224 = por %p222, %p223
      %p226 = scmp.ne.s32.totalorder %s211, %s225
      %p227 = scmp.eq.s32.totalorder %s33, 0
      %p228 = por %p226, %p227
      %s230 = sadd.s32 %s229, 1
      %p233 = scmp.eq.s32.totalorder %s27, 1
      %p234 = scmp.ne.s32.totalorder %s229, %s231
      %p235 = scmp.eq.s32.totalorder %s27, 0
      %p236 = por %p234, %p235
      %p237 = scmp.ne.s32.totalorder %s229, %s231
      %p238 = scmp.eq.s32.totalorder %s32, 1
      %p239 = por %p237, %p238
      %p240 = scmp.ne.s32.totalorder %s231, %s232
      %p241 = scmp.eq.s32.totalorder %s32, 0
      %p242 = por %p240, %p241
      %p243 = scmp.ne.s32.totalorder %s231, %s232
      %p244 = scmp.eq.s32.totalorder %s33, 1
      %p245 = por %p243, %p244
      %p247 = scmp.ne.s32.totalorder %s232, %s246
      %p248 = scmp.eq.s32.totalorder %s33, 0
      %p249 = por %p247, %p248
      %s251 = sadd.s32 %s250, 1
      %p254 = scmp.eq.s32.totalorder %s27, 1
      %p255 = scmp.ne.s32.totalorder %s250, %s252
      %p256 = scmp.eq.s32.totalorder %s27, 0
      %p257 = por %p255, %p256
      %p258 = scmp.ne.s32.totalorder %s250, %s252
      %p259 = scmp.eq.s32.totalorder %s32, 1
      %p260 = por %p258, %p259
      %p261 = scmp.ne.s32.totalorder %s252, %s253
      %p262 = scmp.eq.s32.totalorder %s32, 0
      %p263 = por %p261, %p262
      %p264 = scmp.ne.s32.totalorder %s252, %s253
      %p265 = scmp.eq.s32.totalorder %s33, 1
      %p266 = por %p264, %p265
      %p268 = scmp.ne.s32.totalorder %s253, %s267
      %p269 = scmp.eq.s32.totalorder %s33, 0
      %p270 = por %p268, %p269
      %s271 = ssub.s32 %s27, %s34
      %p272 = scmp.eq.s32.totalorder %s271, 0
      %s274 = sadd.s32 %s273, 1
      %s275 = scalar_select %p272, %s273, %s274
      %p278 = pneg %p272
      %p279 = scmp.eq.s32.totalorder %s27, 1
      %p280 = por %p278, %p279
      %p281 = scmp.ne.s32.totalorder %s273, %s276
      %p282 = scmp.eq.s32.totalorder %s27, 0
      %p283 = por %p281, %p282
      %p284 = scmp.ne.s32.totalorder %s273, %s276
      %p285 = scmp.eq.s32.totalorder %s32, 1
      %p286 = por %p284, %p285
      %p287 = scmp.ne.s32.totalorder %s276, %s277
      %p288 = scmp.eq.s32.totalorder %s32, 0
      %p289 = por %p287, %p288
      %p290 = scmp.ne.s32.totalorder %s276, %s277
      %p291 = scmp.eq.s32.totalorder %s33, 1
      %p292 = por %p290, %p291
      %p294 = scmp.ne.s32.totalorder %s277, %s293
      %p295 = scmp.eq.s32.totalorder %s33, 0
      %p296 = por %p294, %p295
      %p297 = scmp.le.s32.totalorder 1, %s27
      %p298 = scmp.lt.s32.totalorder %s27, 3
      %p299 = pnand %p297, %p298
      %p300 = pneg %p299
      // Predicated region
      $region9: #{tpu_custom_call.1} parent=5 // pred_check
        _
      $region10: #{tpu_custom_call.1} parent=5 // pred_check_branch
        %302 = sbr.rel (%p299) target = $region12
      $region11: #{tpu_custom_call.1} parent=5 // pred_region
        %s303 = ssub.s32 %s27, 1
        // Predicated region
        $region13: #{tpu_custom_call.1} parent=11 // pred_check
          %p304 = pneg %p74
        $region14: #{tpu_custom_call.1} parent=11 // pred_check_branch
          %306 = sbr.rel (%p304) target = $region16
        $region15: #{tpu_custom_call.1} parent=11 // pred_region
          _
        $region16: #{tpu_custom_call.1} parent=11 // pred_fallthru
          _
        // Predicated region
        $region17: #{tpu_custom_call.1} parent=11 // pred_check
          %p307 = pneg %p95
        $region18: #{tpu_custom_call.1} parent=11 // pred_check_branch
          %309 = sbr.rel (%p307) target = $region20
        $region19: #{tpu_custom_call.1} parent=11 // pred_region
          %311 = vsyncadd [#allocation7], 0
          %s312 = sshll.u32 %s2, 4
          %s313 = int_to_ptr.hbm [resolvable:$true] %s312
          %s314 = sshll.u32 [#allocation6], 4
          %s315 = int_to_ptr.vmem [resolvable:$true] %s314
          %320 = dma.hbm_to_vmem [thread:$0]  %s313, 512, %s315, [#allocation7], 256, 256, 16
        $region20: #{tpu_custom_call.1} parent=11 // pred_fallthru
          _
        // Predicated region
        $region21: #{tpu_custom_call.1} parent=11 // pred_check
          %p321 = pneg %p116
        $region22: #{tpu_custom_call.1} parent=11 // pred_check_branch
          %323 = sbr.rel (%p321) target = $region24
        $region23: #{tpu_custom_call.1} parent=11 // pred_region
          %325 = vsyncadd [#allocation7], 0
          %s327 = sshll.u32 %s3, 4
          %s328 = int_to_ptr.hbm [resolvable:$true] %s327
          %s329 = sshll.u32 [#allocation8], 4
          %s330 = int_to_ptr.vmem [resolvable:$true] %s329
          %332 = dma.hbm_to_vmem [thread:$0]  %s328, 128, %s330, [#allocation7]
        $region24: #{tpu_custom_call.1} parent=11 // pred_fallthru
          _
        // Predicated region
        $region25: #{tpu_custom_call.1} parent=11 // pred_check
          %p333 = pneg %p137
        $region26: #{tpu_custom_call.1} parent=11 // pred_check_branch
          %335 = sbr.rel (%p333) target = $region28
        $region27: #{tpu_custom_call.1} parent=11 // pred_region
          _
        $region28: #{tpu_custom_call.1} parent=11 // pred_fallthru
          _
        // Predicated region
        $region29: #{tpu_custom_call.1} parent=11 // pred_check
          %p336 = pneg %p158
        $region30: #{tpu_custom_call.1} parent=11 // pred_check_branch
          %338 = sbr.rel (%p336) target = $region32
        $region31: #{tpu_custom_call.1} parent=11 // pred_region
          _
        $region32: #{tpu_custom_call.1} parent=11 // pred_fallthru
          _
        // Predicated region
        $region33: #{tpu_custom_call.1} parent=11 // pred_check
          %p339 = pneg %p179
        $region34: #{tpu_custom_call.1} parent=11 // pred_check_branch
          %341 = sbr.rel (%p339) target = $region36
        $region35: #{tpu_custom_call.1} parent=11 // pred_region
          _
        $region36: #{tpu_custom_call.1} parent=11 // pred_fallthru
          _
        // Predicated region
        $region37: #{tpu_custom_call.1} parent=11 // pred_check
          %p342 = pneg %p200
        $region38: #{tpu_custom_call.1} parent=11 // pred_check_branch
          %344 = sbr.rel (%p342) target = $region40
        $region39: #{tpu_custom_call.1} parent=11 // pred_region
          %346 = vsyncadd [#allocation10], 0
          %s348 = sshll.u32 %s7, 4
          %s349 = int_to_ptr.hbm [resolvable:$true] %s348
          %s350 = sshll.u32 [#allocation9], 4
          %s351 = int_to_ptr.vmem [resolvable:$true] %s350
          %353 = dma.hbm_to_vmem [thread:$0]  %s349, 256, %s351, [#allocation10]
        $region40: #{tpu_custom_call.1} parent=11 // pred_fallthru
          _
        // Predicated region
        $region41: #{tpu_custom_call.1} parent=11 // pred_check
          %p354 = pneg %p221
        $region42: #{tpu_custom_call.1} parent=11 // pred_check_branch
          %356 = sbr.rel (%p354) target = $region44
        $region43: #{tpu_custom_call.1} parent=11 // pred_region
          _
        $region44: #{tpu_custom_call.1} parent=11 // pred_fallthru
          _
        // Predicated region
        $region45: #{tpu_custom_call.1} parent=11 // pred_check
          %p357 = pneg %p242
        $region46: #{tpu_custom_call.1} parent=11 // pred_check_branch
          %359 = sbr.rel (%p357) target = $region48
        $region47: #{tpu_custom_call.1} parent=11 // pred_region
          _
        $region48: #{tpu_custom_call.1} parent=11 // pred_fallthru
          _
        // Predicated region
        $region49: #{tpu_custom_call.1} parent=11 // pred_check
          %p360 = pneg %p263
        $region50: #{tpu_custom_call.1} parent=11 // pred_check_branch
          %362 = sbr.rel (%p360) target = $region52
        $region51: #{tpu_custom_call.1} parent=11 // pred_region
          _
        $region52: #{tpu_custom_call.1} parent=11 // pred_fallthru
          _
      $region12: #{tpu_custom_call.1} parent=5 // pred_fallthru
        _
      %p363 = scmp.lt.s32.totalorder %s27, 2
      // Predicated region
      $region53: #{tpu_custom_call.1} parent=5 // pred_check
        %p364 = pneg %p363
      $region54: #{tpu_custom_call.1} parent=5 // pred_check_branch
        %366 = sbr.rel (%p364) target = $region56
      $region55: #{tpu_custom_call.1} parent=5 // pred_region
        // Predicated region
        $region57: #{tpu_custom_call.1} parent=55 // pred_check
          %p367 = pneg %p47
        $region58: #{tpu_custom_call.1} parent=55 // pred_check_branch
          %369 = sbr.rel (%p367) target = $region60
        $region59: #{tpu_custom_call.1} parent=55 // pred_region
          %s370 = sand.u32 %s37, 1
          %s371 = scalar_lea.sflag [#allocation4], %s370
          %s372 = sand.u32 %s37, 1
          %s373 = smul.addr %s372, 2
          %s374 = scalar_lea.vmem [#allocation3], %s373
          %376 = vsyncadd %s371, 0
          %s377 = smul.addr %s27, 2
          %s378 = scalar_lea.hbm %s0, %s377
          %s380 = sshll.u32 %s378, 4
          %s381 = int_to_ptr.hbm [resolvable:$true] %s380
          %s382 = sshll.u32 %s374, 4
          %s383 = int_to_ptr.vmem [resolvable:$true] %s382
          %385 = dma.hbm_to_vmem [thread:$0]  %s381, 32, %s383, %s371
        $region60: #{tpu_custom_call.1} parent=55 // pred_fallthru
          _
      $region56: #{tpu_custom_call.1} parent=5 // pred_fallthru
        _
      %p386 = scmp.le.s32.totalorder 1, %s27
      %p387 = scmp.lt.s32.totalorder %s27, 3
      %p388 = pnand %p386, %p387
      %p389 = pneg %p388
      // Predicated region
      $region61: #{tpu_custom_call.1} parent=5 // pred_check
        _
      $region62: #{tpu_custom_call.1} parent=5 // pred_check_branch
        %391 = sbr.rel (%p388) target = $region64
      $region63: #{tpu_custom_call.1} parent=5 // pred_region
        %s392 = ssub.s32 %s27, 1
        %s393 = sand.u32 %s40, 1
        %s394 = scalar_lea.sflag [#allocation4], %s393
        %s395 = sand.u32 %s40, 1
        %s396 = smul.addr %s395, 2
        %s397 = scalar_lea.vmem [#allocation3], %s396
        // Predicated region
        $region65: #{tpu_custom_call.1} parent=63 // pred_check
          %p398 = pneg %p53
        $region66: #{tpu_custom_call.1} parent=63 // pred_check_branch
          %400 = sbr.rel (%p398) target = $region68
        $region67: #{tpu_custom_call.1} parent=63 // pred_region
          %402 = dma.done %s394, 32
        $region68: #{tpu_custom_call.1} parent=63 // pred_fallthru
          _
        // Predicated region
        $region69: #{tpu_custom_call.1} parent=63 // pred_check
          %p403 = pneg %p95
        $region70: #{tpu_custom_call.1} parent=63 // pred_check_branch
          %405 = sbr.rel (%p403) target = $region72
        $region71: #{tpu_custom_call.1} parent=63 // pred_region
          %407 = dma.done [#allocation7], 512
        $region72: #{tpu_custom_call.1} parent=63 // pred_fallthru
          _
        // Predicated region
        $region73: #{tpu_custom_call.1} parent=63 // pred_check
          %p408 = pneg %p116
        $region74: #{tpu_custom_call.1} parent=63 // pred_check_branch
          %410 = sbr.rel (%p408) target = $region76
        $region75: #{tpu_custom_call.1} parent=63 // pred_region
          %412 = dma.done [#allocation7], 128
        $region76: #{tpu_custom_call.1} parent=63 // pred_fallthru
          _
        // Predicated region
        $region77: #{tpu_custom_call.1} parent=63 // pred_check
          %p413 = pneg %p200
        $region78: #{tpu_custom_call.1} parent=63 // pred_check_branch
          %415 = sbr.rel (%p413) target = $region80
        $region79: #{tpu_custom_call.1} parent=63 // pred_region
          %417 = dma.done [#allocation10], 256
        $region80: #{tpu_custom_call.1} parent=63 // pred_fallthru
          _
        %s418 = sand.u32 %s40, 1
        %s419 = scalar_lea.sflag [#allocation4], %s418
        %s420 = sand.u32 %s40, 1
        %s421 = smul.addr %s420, 2
        %s422 = scalar_lea.vmem [#allocation3], %s421
        %p423 = pneg %p53
        %p424 = pneg %p50
        %p425 = pneg %p74
        %p426 = pneg %p71
        %p427 = pneg %p95
        %p428 = pneg %p92
        %p429 = pneg %p116
        %p430 = pneg %p113
        %p431 = pneg %p137
        %p432 = pneg %p134
        %p433 = pneg %p158
        %p434 = pneg %p155
        %p435 = pneg %p179
        %p436 = pneg %p176
        %p437 = pneg %p200
        %p438 = pneg %p197
        %p439 = pneg %p221
        %p440 = pneg %p218
        %p441 = pneg %p242
        %p442 = pneg %p239
        %p443 = pneg %p263
        %p444 = pneg %p260
        %p445 = pneg %p289
        %p446 = pneg %p286
        %s447 = sand.u32 %s276, 1
        %s448 = scalar_lea.sflag [#allocation5], %s447
        %s449 = sand.u32 %s276, 1
        %s450 = smul.addr %s449, 2
        %s451 = scalar_lea.vmem [#allocation11], %s450
        %v452 = vld [vmem:[%s397] sm:$0x3]
        %v454 = vperm.slane %v452, 0
        %v455 = vperm.slane %v452, 1
        %v458 = vld [vmem:[%s1] ss:$8 sm:$0x3]
        %v460 = vperm.slane %v458, 0
        %v461 = vperm.slane %v458, 1
        %462 = vrot.lane.b32.xlu0 %v460, 94
        %v463 = vpop.permute.xlu0 %462
        %464 = vrot.lane.b32.xlu0 %v461, 94
        %v465 = vpop.permute.xlu0 %464
        %vm466 = vcmask 769024
        %v467 = vsel %vm466, %v463, %v465
        %v471 = vmul.f32 %v463, 0.0
        %v472 = vmul.f32 %v454, %v467
        %v473 = vmul.f32 %v455, %v465
        %v474 = vld [vmem:[#allocation8] sm:$0xff]
        %476 = vset.pattern.permute.xlu0 0
        %477 = vperm.xlu0 %476, %v474
        %v478 = vpop.permute.xlu0 %477
        %v480 = vperm.slane %v471, 0
        %v481 = vperm.slane %v472, 0
        %v482 = vperm.slane %v473, 0
        %v483 = vmul.f32 %v478, %v480
        %v484 = vmul.f32 %v478, %v481
        %v485 = vmul.f32 %v478, %v482
        %v486 = vadd.f32 %v483, 0.0
        %v487 = vadd.f32 %v484, 0.0
        %v488 = vadd.f32 %v485, 0.0
        %s489 = scalar_lea.vmem %s1, 1
        %v490 = vld [vmem:[%s489] ss:$8 sm:$0x3]
        %v492 = vperm.slane %v490, 0
        %v493 = vperm.slane %v490, 1
        %494 = vrot.lane.b32.xlu0 %v492, 95
        %v495 = vpop.permute.xlu0 %494
        %496 = vrot.lane.b32.xlu0 %v493, 95
        %v497 = vpop.permute.xlu0 %496
        %vm498 = vcmask 777216
        %v499 = vsel %vm498, %v495, %v497
        %v503 = vmul.f32 %v495, 0.0
        %v504 = vmul.f32 %v454, %v499
        %v505 = vmul.f32 %v455, %v497
        %506 = vset.pattern.permute.xlu0 1
        %507 = vperm.xlu0 %506, %v474
        %v508 = vpop.permute.xlu0 %507
        %v510 = vperm.slane %v503, 0
        %v511 = vperm.slane %v504, 0
        %v512 = vperm.slane %v505, 0
        %v513 = vmul.f32 %v508, %v510
        %v514 = vmul.f32 %v508, %v511
        %v515 = vmul.f32 %v508, %v512
        %519 = vrot.lane.b32.xlu0 %v513, 127
        %v520 = vpop.permute.xlu0 %519
        %521 = vrot.lane.b32.xlu0 %v514, 127
        %v522 = vpop.permute.xlu0 %521
        %523 = vrot.lane.b32.xlu0 %v515, 127
        %v524 = vpop.permute.xlu0 %523
        %vm525 = vcmask 1039360
        %v526 = vsel %vm525, %v520, %v522
        %v527 = vsel %vm525, %v522, %v524
        %v531 = vadd.f32 %v486, %v526
        %v532 = vadd.f32 %v487, %v527
        %v533 = vadd.f32 %v488, %v524
        %s534 = scalar_lea.vmem %s1, 2
        %v535 = vld [vmem:[%s534] ss:$8 sm:$0x3]
        %v537 = vperm.slane %v535, 0
        %v538 = vperm.slane %v535, 1
        %539 = vrot.lane.b32.xlu0 %v537, 96
        %v540 = vpop.permute.xlu0 %539
        %541 = vrot.lane.b32.xlu0 %v538, 96
        %v542 = vpop.permute.xlu0 %541
        %vm543 = vcmask 785408
        %v544 = vsel %vm543, %v540, %v542
        %v548 = vmul.f32 %v540, 0.0
        %v549 = vmul.f32 %v454, %v544
        %v550 = vmul.f32 %v455, %v542
        %551 = vset.pattern.permute.xlu0 2
        %552 = vperm.xlu0 %551, %v474
        %v553 = vpop.permute.xlu0 %552
        %v555 = vperm.slane %v548, 0
        %v556 = vperm.slane %v549, 0
        %v557 = vperm.slane %v550, 0
        %v558 = vmul.f32 %v553, %v555
        %v559 = vmul.f32 %v553, %v556
        %v560 = vmul.f32 %v553, %v557
        %564 = vrot.lane.b32.xlu0 %v558, 126
        %v565 = vpop.permute.xlu0 %564
        %566 = vrot.lane.b32.xlu0 %v559, 126
        %v567 = vpop.permute.xlu0 %566
        %568 = vrot.lane.b32.xlu0 %v560, 126
        %v569 = vpop.permute.xlu0 %568
        %vm570 = vcmask 1031168
        %v571 = vsel %vm570, %v565, %v567
        %v572 = vsel %vm570, %v567, %v569
        %v576 = vadd.f32 %v531, %v571
        %v577 = vadd.f32 %v532, %v572
        %v578 = vadd.f32 %v533, %v569
        %s579 = scalar_lea.vmem %s1, 3
        %v580 = vld [vmem:[%s579] ss:$8 sm:$0x3]
        %v582 = vperm.slane %v580, 0
        %v583 = vperm.slane %v580, 1
        %584 = vrot.lane.b32.xlu0 %v582, 97
        %v585 = vpop.permute.xlu0 %584
        %586 = vrot.lane.b32.xlu0 %v583, 97
        %v587 = vpop.permute.xlu0 %586
        %vm588 = vcmask 793600
        %v589 = vsel %vm588, %v585, %v587
        %v593 = vmul.f32 %v585, 0.0
        %v594 = vmul.f32 %v454, %v589
        %v595 = vmul.f32 %v455, %v587
        %596 = vset.pattern.permute.xlu0 3
        %597 = vperm.xlu0 %596, %v474
        %v598 = vpop.permute.xlu0 %597
        %v600 = vperm.slane %v593, 0
        %v601 = vperm.slane %v594, 0
        %v602 = vperm.slane %v595, 0
        %v603 = vmul.f32 %v598, %v600
        %v604 = vmul.f32 %v598, %v601
        %v605 = vmul.f32 %v598, %v602
        %609 = vrot.lane.b32.xlu0 %v603, 125
        %v610 = vpop.permute.xlu0 %609
        %611 = vrot.lane.b32.xlu0 %v604, 125
        %v612 = vpop.permute.xlu0 %611
        %613 = vrot.lane.b32.xlu0 %v605, 125
        %v614 = vpop.permute.xlu0 %613
        %vm615 = vcmask 1022976
        %v616 = vsel %vm615, %v610, %v612
        %v617 = vsel %vm615, %v612, %v614
        %v621 = vadd.f32 %v576, %v616
        %v622 = vadd.f32 %v577, %v617
        %v623 = vadd.f32 %v578, %v614
        %s624 = scalar_lea.vmem %s1, 4
        %v625 = vld [vmem:[%s624] ss:$8 sm:$0x3]
        %v627 = vperm.slane %v625, 0
        %v628 = vperm.slane %v625, 1
        %629 = vrot.lane.b32.xlu0 %v627, 98
        %v630 = vpop.permute.xlu0 %629
        %631 = vrot.lane.b32.xlu0 %v628, 98
        %v632 = vpop.permute.xlu0 %631
        %vm633 = vcmask 801792
        %v634 = vsel %vm633, %v630, %v632
        %v638 = vmul.f32 %v630, 0.0
        %v639 = vmul.f32 %v454, %v634
        %v640 = vmul.f32 %v455, %v632
        %641 = vset.pattern.permute.xlu0 4
        %642 = vperm.xlu0 %641, %v474
        %v643 = vpop.permute.xlu0 %642
        %v645 = vperm.slane %v638, 0
        %v646 = vperm.slane %v639, 0
        %v647 = vperm.slane %v640, 0
        %v648 = vmul.f32 %v643, %v645
        %v649 = vmul.f32 %v643, %v646
        %v650 = vmul.f32 %v643, %v647
        %654 = vrot.lane.b32.xlu0 %v648, 124
        %v655 = vpop.permute.xlu0 %654
        %656 = vrot.lane.b32.xlu0 %v649, 124
        %v657 = vpop.permute.xlu0 %656
        %658 = vrot.lane.b32.xlu0 %v650, 124
        %v659 = vpop.permute.xlu0 %658
        %vm660 = vcmask 1014784
        %v661 = vsel %vm660, %v655, %v657
        %v662 = vsel %vm660, %v657, %v659
        %v666 = vadd.f32 %v621, %v661
        %v667 = vadd.f32 %v622, %v662
        %v668 = vadd.f32 %v623, %v659
        %669 = vrot.lane.b32.xlu0 %v460, 110
        %v670 = vpop.permute.xlu0 %669
        %671 = vrot.lane.b32.xlu0 %v461, 110
        %v672 = vpop.permute.xlu0 %671
        %vm673 = vcmask 900096
        %v674 = vsel %vm673, %v670, %v672
        %v678 = vmul.f32 %v670, 0.0
        %v679 = vmul.f32 %v454, %v674
        %v680 = vmul.f32 %v455, %v672
        %681 = vset.pattern.permute.xlu0 5
        %682 = vperm.xlu0 %681, %v474
        %v683 = vpop.permute.xlu0 %682
        %v685 = vperm.slane %v678, 0
        %v686 = vperm.slane %v679, 0
        %v687 = vperm.slane %v680, 0
        %v688 = vmul.f32 %v683, %v685
        %v689 = vmul.f32 %v683, %v686
        %v690 = vmul.f32 %v683, %v687
        %694 = vrot.lane.b32.xlu0 %v688, 112
        %v695 = vpop.permute.xlu0 %694
        %696 = vrot.lane.b32.xlu0 %v689, 112
        %v697 = vpop.permute.xlu0 %696
        %698 = vrot.lane.b32.xlu0 %v690, 112
        %v699 = vpop.permute.xlu0 %698
        %vm700 = vcmask 916480
        %v701 = vsel %vm700, %v695, %v697
        %v702 = vsel %vm700, %v697, %v699
        %v706 = vadd.f32 %v666, %v701
        %v707 = vadd.f32 %v667, %v702
        %v708 = vadd.f32 %v668, %v699
        %709 = vrot.lane.b32.xlu0 %v492, 111
        %v710 = vpop.permute.xlu0 %709
        %711 = vrot.lane.b32.xlu0 %v493, 111
        %v712 = vpop.permute.xlu0 %711
        %vm713 = vcmask 908288
        %v714 = vsel %vm713, %v710, %v712
        %v718 = vmul.f32 %v710, 0.0
        %v719 = vmul.f32 %v454, %v714
        %v720 = vmul.f32 %v455, %v712
        %721 = vset.pattern.permute.xlu0 6
        %722 = vperm.xlu0 %721, %v474
        %v723 = vpop.permute.xlu0 %722
        %v725 = vperm.slane %v718, 0
        %v726 = vperm.slane %v719, 0
        %v727 = vperm.slane %v720, 0
        %v728 = vmul.f32 %v723, %v725
        %v729 = vmul.f32 %v723, %v726
        %v730 = vmul.f32 %v723, %v727
        %734 = vrot.lane.b32.xlu0 %v728, 111
        %v735 = vpop.permute.xlu0 %734
        %736 = vrot.lane.b32.xlu0 %v729, 111
        %v737 = vpop.permute.xlu0 %736
        %738 = vrot.lane.b32.xlu0 %v730, 111
        %v739 = vpop.permute.xlu0 %738
        %v740 = vsel %vm713, %v735, %v737
        %v741 = vsel %vm713, %v737, %v739
        %v745 = vadd.f32 %v706, %v740
        %v746 = vadd.f32 %v707, %v741
        %v747 = vadd.f32 %v708, %v739
        %748 = vrot.lane.b32.xlu0 %v537, 112
        %v749 = vpop.permute.xlu0 %748
        %750 = vrot.lane.b32.xlu0 %v538, 112
        %v751 = vpop.permute.xlu0 %750
        %v752 = vsel %vm700, %v749, %v751
        %v756 = vmul.f32 %v749, 0.0
        %v757 = vmul.f32 %v454, %v752
        %v758 = vmul.f32 %v455, %v751
        %759 = vset.pattern.permute.xlu0 7
        %760 = vperm.xlu0 %759, %v474
        %v761 = vpop.permute.xlu0 %760
        %v763 = vperm.slane %v756, 0
        %v764 = vperm.slane %v757, 0
        %v765 = vperm.slane %v758, 0
        %v766 = vmul.f32 %v761, %v763
        %v767 = vmul.f32 %v761, %v764
        %v768 = vmul.f32 %v761, %v765
        %772 = vrot.lane.b32.xlu0 %v766, 110
        %v773 = vpop.permute.xlu0 %772
        %774 = vrot.lane.b32.xlu0 %v767, 110
        %v775 = vpop.permute.xlu0 %774
        %776 = vrot.lane.b32.xlu0 %v768, 110
        %v777 = vpop.permute.xlu0 %776
        %v778 = vsel %vm673, %v773, %v775
        %v779 = vsel %vm673, %v775, %v777
        %v783 = vadd.f32 %v745, %v778
        %v784 = vadd.f32 %v746, %v779
        %v785 = vadd.f32 %v747, %v777
        %786 = vrot.lane.b32.xlu0 %v582, 113
        %v787 = vpop.permute.xlu0 %786
        %788 = vrot.lane.b32.xlu0 %v583, 113
        %v789 = vpop.permute.xlu0 %788
        %vm790 = vcmask 924672
        %v791 = vsel %vm790, %v787, %v789
        %v795 = vmul.f32 %v787, 0.0
        %v796 = vmul.f32 %v454, %v791
        %v797 = vmul.f32 %v455, %v789
        %798 = vset.pattern.permute.xlu0 8
        %799 = vperm.xlu0 %798, %v474
        %v800 = vpop.permute.xlu0 %799
        %v802 = vperm.slane %v795, 0
        %v803 = vperm.slane %v796, 0
        %v804 = vperm.slane %v797, 0
        %v805 = vmul.f32 %v800, %v802
        %v806 = vmul.f32 %v800, %v803
        %v807 = vmul.f32 %v800, %v804
        %811 = vrot.lane.b32.xlu0 %v805, 109
        %v812 = vpop.permute.xlu0 %811
        %813 = vrot.lane.b32.xlu0 %v806, 109
        %v814 = vpop.permute.xlu0 %813
        %815 = vrot.lane.b32.xlu0 %v807, 109
        %v816 = vpop.permute.xlu0 %815
        %vm817 = vcmask 891904
        %v818 = vsel %vm817, %v812, %v814
        %v819 = vsel %vm817, %v814, %v816
        %v823 = vadd.f32 %v783, %v818
        %v824 = vadd.f32 %v784, %v819
        %v825 = vadd.f32 %v785, %v816
        %826 = vrot.lane.b32.xlu0 %v627, 114
        %v827 = vpop.permute.xlu0 %826
        %828 = vrot.lane.b32.xlu0 %v628, 114
        %v829 = vpop.permute.xlu0 %828
        %vm830 = vcmask 932864
        %v831 = vsel %vm830, %v827, %v829
        %v835 = vmul.f32 %v827, 0.0
        %v836 = vmul.f32 %v454, %v831
        %v837 = vmul.f32 %v455, %v829
        %838 = vset.pattern.permute.xlu0 9
        %839 = vperm.xlu0 %838, %v474
        %v840 = vpop.permute.xlu0 %839
        %v842 = vperm.slane %v835, 0
        %v843 = vperm.slane %v836, 0
        %v844 = vperm.slane %v837, 0
        %v845 = vmul.f32 %v840, %v842
        %v846 = vmul.f32 %v840, %v843
        %v847 = vmul.f32 %v840, %v844
        %851 = vrot.lane.b32.xlu0 %v845, 108
        %v852 = vpop.permute.xlu0 %851
        %853 = vrot.lane.b32.xlu0 %v846, 108
        %v854 = vpop.permute.xlu0 %853
        %855 = vrot.lane.b32.xlu0 %v847, 108
        %v856 = vpop.permute.xlu0 %855
        %vm857 = vcmask 883712
        %v858 = vsel %vm857, %v852, %v854
        %v859 = vsel %vm857, %v854, %v856
        %v863 = vadd.f32 %v823, %v858
        %v864 = vadd.f32 %v824, %v859
        %v865 = vadd.f32 %v825, %v856
        %866 = vrot.lane.b32.xlu0 %v460, 126
        %v867 = vpop.permute.xlu0 %866
        %868 = vrot.lane.b32.xlu0 %v461, 126
        %v869 = vpop.permute.xlu0 %868
        %v870 = vsel %vm570, %v867, %v869
        %v874 = vmul.f32 %v867, 0.0
        %v875 = vmul.f32 %v454, %v870
        %v876 = vmul.f32 %v455, %v869
        %877 = vset.pattern.permute.xlu0 10
        %878 = vperm.xlu0 %877, %v474
        %v879 = vpop.permute.xlu0 %878
        %v881 = vperm.slane %v874, 0
        %v882 = vperm.slane %v875, 0
        %v883 = vperm.slane %v876, 0
        %v884 = vmul.f32 %v879, %v881
        %v885 = vmul.f32 %v879, %v882
        %v886 = vmul.f32 %v879, %v883
        %890 = vrot.lane.b32.xlu0 %v884, 96
        %v891 = vpop.permute.xlu0 %890
        %892 = vrot.lane.b32.xlu0 %v885, 96
        %v893 = vpop.permute.xlu0 %892
        %894 = vrot.lane.b32.xlu0 %v886, 96
        %v895 = vpop.permute.xlu0 %894
        %v896 = vsel %vm543, %v891, %v893
        %v897 = vsel %vm543, %v893, %v895
        %v901 = vadd.f32 %v863, %v896
        %v902 = vadd.f32 %v864, %v897
        %v903 = vadd.f32 %v865, %v895
        %904 = vrot.lane.b32.xlu0 %v492, 127
        %v905 = vpop.permute.xlu0 %904
        %906 = vrot.lane.b32.xlu0 %v493, 127
        %v907 = vpop.permute.xlu0 %906
        %v908 = vsel %vm525, %v905, %v907
        %v912 = vmul.f32 %v905, 0.0
        %v913 = vmul.f32 %v454, %v908
        %v914 = vmul.f32 %v455, %v907
        %915 = vset.pattern.permute.xlu0 11
        %916 = vperm.xlu0 %915, %v474
        %v917 = vpop.permute.xlu0 %916
        %v919 = vperm.slane %v912, 0
        %v920 = vperm.slane %v913, 0
        %v921 = vperm.slane %v914, 0
        %v922 = vmul.f32 %v917, %v919
        %v923 = vmul.f32 %v917, %v920
        %v924 = vmul.f32 %v917, %v921
        %928 = vrot.lane.b32.xlu0 %v922, 95
        %v929 = vpop.permute.xlu0 %928
        %930 = vrot.lane.b32.xlu0 %v923, 95
        %v931 = vpop.permute.xlu0 %930
        %932 = vrot.lane.b32.xlu0 %v924, 95
        %v933 = vpop.permute.xlu0 %932
        %v934 = vsel %vm498, %v929, %v931
        %v935 = vsel %vm498, %v931, %v933
        %v939 = vadd.f32 %v901, %v934
        %v940 = vadd.f32 %v902, %v935
        %v941 = vadd.f32 %v903, %v933
        %v944 = vmul.f32 %v454, %v537
        %v945 = vmul.f32 %v455, %v538
        %946 = vset.pattern.permute.xlu0 12
        %947 = vperm.xlu0 %946, %v474
        %v948 = vpop.permute.xlu0 %947
        %v950 = vperm.slane %v944, 0
        %v951 = vperm.slane %v945, 0
        %v952 = vmul.f32 %v948, %v950
        %v953 = vmul.f32 %v948, %v951
        %956 = vrot.lane.b32.xlu0 %v952, 94
        %v957 = vpop.permute.xlu0 %956
        %958 = vrot.lane.b32.xlu0 %v953, 94
        %v959 = vpop.permute.xlu0 %958
        %v960 = vsel %vm466, %v957, %v959
        %v964 = vadd.f32 %v939, %v957
        %v965 = vadd.f32 %v940, %v960
        %v966 = vadd.f32 %v941, %v959
        %967 = vrot.lane.b32.xlu0 %v582, 1
        %v968 = vpop.permute.xlu0 %967
        %969 = vrot.lane.b32.xlu0 %v583, 1
        %v970 = vpop.permute.xlu0 %969
        %vm971 = vcmask 7168
        %v972 = vsel %vm971, %v968, %v970
        %v976 = vmul.f32 %v454, %v968
        %v977 = vmul.f32 %v455, %v972
        %v978 = vmul.f32 %v970, 0.0
        %979 = vset.pattern.permute.xlu0 13
        %980 = vperm.xlu0 %979, %v474
        %v981 = vpop.permute.xlu0 %980
        %v983 = vperm.slane %v976, 0
        %v984 = vperm.slane %v977, 0
        %v985 = vperm.slane %v978, 0
        %v986 = vmul.f32 %v981, %v983
        %v987 = vmul.f32 %v981, %v984
        %v988 = vmul.f32 %v981, %v985
        %992 = vrot.lane.b32.xlu0 %v986, 93
        %v993 = vpop.permute.xlu0 %992
        %994 = vrot.lane.b32.xlu0 %v987, 93
        %v995 = vpop.permute.xlu0 %994
        %996 = vrot.lane.b32.xlu0 %v988, 93
        %v997 = vpop.permute.xlu0 %996
        %vm998 = vcmask 760832
        %v999 = vsel %vm998, %v993, %v995
        %v1000 = vsel %vm998, %v995, %v997
        %v1004 = vadd.f32 %v964, %v993
        %v1005 = vadd.f32 %v965, %v999
        %v1006 = vadd.f32 %v966, %v1000
        %1007 = vrot.lane.b32.xlu0 %v627, 2
        %v1008 = vpop.permute.xlu0 %1007
        %1009 = vrot.lane.b32.xlu0 %v628, 2
        %v1010 = vpop.permute.xlu0 %1009
        %vm1011 = vcmask 15360
        %v1012 = vsel %vm1011, %v1008, %v1010
        %v1016 = vmul.f32 %v454, %v1008
        %v1017 = vmul.f32 %v455, %v1012
        %v1018 = vmul.f32 %v1010, 0.0
        %1019 = vset.pattern.permute.xlu0 14
        %1020 = vperm.xlu0 %1019, %v474
        %v1021 = vpop.permute.xlu0 %1020
        %v1023 = vperm.slane %v1016, 0
        %v1024 = vperm.slane %v1017, 0
        %v1025 = vperm.slane %v1018, 0
        %v1026 = vmul.f32 %v1021, %v1023
        %v1027 = vmul.f32 %v1021, %v1024
        %v1028 = vmul.f32 %v1021, %v1025
        %1032 = vrot.lane.b32.xlu0 %v1026, 92
        %v1033 = vpop.permute.xlu0 %1032
        %1034 = vrot.lane.b32.xlu0 %v1027, 92
        %v1035 = vpop.permute.xlu0 %1034
        %1036 = vrot.lane.b32.xlu0 %v1028, 92
        %v1037 = vpop.permute.xlu0 %1036
        %vm1038 = vcmask 752640
        %v1039 = vsel %vm1038, %v1033, %v1035
        %v1040 = vsel %vm1038, %v1035, %v1037
        %v1044 = vadd.f32 %v1004, %v1033
        %v1045 = vadd.f32 %v1005, %v1039
        %v1046 = vadd.f32 %v1006, %v1040
        %1047 = vrot.lane.b32.xlu0 %v460, 14
        %v1048 = vpop.permute.xlu0 %1047
        %1049 = vrot.lane.b32.xlu0 %v461, 14
        %v1050 = vpop.permute.xlu0 %1049
        %vm1051 = vcmask 113664
        %v1052 = vsel %vm1051, %v1048, %v1050
        %v1056 = vmul.f32 %v454, %v1048
        %v1057 = vmul.f32 %v455, %v1052
        %v1058 = vmul.f32 %v1050, 0.0
        %1059 = vset.pattern.permute.xlu0 15
        %1060 = vperm.xlu0 %1059, %v474
        %v1061 = vpop.permute.xlu0 %1060
        %v1063 = vperm.slane %v1056, 0
        %v1064 = vperm.slane %v1057, 0
        %v1065 = vperm.slane %v1058, 0
        %v1066 = vmul.f32 %v1061, %v1063
        %v1067 = vmul.f32 %v1061, %v1064
        %v1068 = vmul.f32 %v1061, %v1065
        %1072 = vrot.lane.b32.xlu0 %v1066, 80
        %v1073 = vpop.permute.xlu0 %1072
        %1074 = vrot.lane.b32.xlu0 %v1067, 80
        %v1075 = vpop.permute.xlu0 %1074
        %1076 = vrot.lane.b32.xlu0 %v1068, 80
        %v1077 = vpop.permute.xlu0 %1076
        %vm1078 = vcmask 654336
        %v1079 = vsel %vm1078, %v1073, %v1075
        %v1080 = vsel %vm1078, %v1075, %v1077
        %v1084 = vadd.f32 %v1044, %v1073
        %v1085 = vadd.f32 %v1045, %v1079
        %v1086 = vadd.f32 %v1046, %v1080
        %1087 = vrot.lane.b32.xlu0 %v492, 15
        %v1088 = vpop.permute.xlu0 %1087
        %1089 = vrot.lane.b32.xlu0 %v493, 15
        %v1090 = vpop.permute.xlu0 %1089
        %vm1091 = vcmask 121856
        %v1092 = vsel %vm1091, %v1088, %v1090
        %v1096 = vmul.f32 %v454, %v1088
        %v1097 = vmul.f32 %v455, %v1092
        %v1098 = vmul.f32 %v1090, 0.0
        %1099 = vset.pattern.permute.xlu0 16
        %1100 = vperm.xlu0 %1099, %v474
        %v1101 = vpop.permute.xlu0 %1100
        %v1103 = vperm.slane %v1096, 0
        %v1104 = vperm.slane %v1097, 0
        %v1105 = vperm.slane %v1098, 0
        %v1106 = vmul.f32 %v1101, %v1103
        %v1107 = vmul.f32 %v1101, %v1104
        %v1108 = vmul.f32 %v1101, %v1105
        %1112 = vrot.lane.b32.xlu0 %v1106, 79
        %v1113 = vpop.permute.xlu0 %1112
        %1114 = vrot.lane.b32.xlu0 %v1107, 79
        %v1115 = vpop.permute.xlu0 %1114
        %1116 = vrot.lane.b32.xlu0 %v1108, 79
        %v1117 = vpop.permute.xlu0 %1116
        %vm1118 = vcmask 646144
        %v1119 = vsel %vm1118, %v1113, %v1115
        %v1120 = vsel %vm1118, %v1115, %v1117
        %v1124 = vadd.f32 %v1084, %v1113
        %v1125 = vadd.f32 %v1085, %v1119
        %v1126 = vadd.f32 %v1086, %v1120
        %1127 = vrot.lane.b32.xlu0 %v537, 16
        %v1128 = vpop.permute.xlu0 %1127
        %1129 = vrot.lane.b32.xlu0 %v538, 16
        %v1130 = vpop.permute.xlu0 %1129
        %vm1131 = vcmask 130048
        %v1132 = vsel %vm1131, %v1128, %v1130
        %v1136 = vmul.f32 %v454, %v1128
        %v1137 = vmul.f32 %v455, %v1132
        %v1138 = vmul.f32 %v1130, 0.0
        %1139 = vset.pattern.permute.xlu0 17
        %1140 = vperm.xlu0 %1139, %v474
        %v1141 = vpop.permute.xlu0 %1140
        %v1143 = vperm.slane %v1136, 0
        %v1144 = vperm.slane %v1137, 0
        %v1145 = vperm.slane %v1138, 0
        %v1146 = vmul.f32 %v1141, %v1143
        %v1147 = vmul.f32 %v1141, %v1144
        %v1148 = vmul.f32 %v1141, %v1145
        %1152 = vrot.lane.b32.xlu0 %v1146, 78
        %v1153 = vpop.permute.xlu0 %1152
        %1154 = vrot.lane.b32.xlu0 %v1147, 78
        %v1155 = vpop.permute.xlu0 %1154
        %1156 = vrot.lane.b32.xlu0 %v1148, 78
        %v1157 = vpop.permute.xlu0 %1156
        %vm1158 = vcmask 637952
        %v1159 = vsel %vm1158, %v1153, %v1155
        %v1160 = vsel %vm1158, %v1155, %v1157
        %v1164 = vadd.f32 %v1124, %v1153
        %v1165 = vadd.f32 %v1125, %v1159
        %v1166 = vadd.f32 %v1126, %v1160
        %1167 = vrot.lane.b32.xlu0 %v582, 17
        %v1168 = vpop.permute.xlu0 %1167
        %1169 = vrot.lane.b32.xlu0 %v583, 17
        %v1170 = vpop.permute.xlu0 %1169
        %vm1171 = vcmask 138240
        %v1172 = vsel %vm1171, %v1168, %v1170
        %v1176 = vmul.f32 %v454, %v1168
        %v1177 = vmul.f32 %v455, %v1172
        %v1178 = vmul.f32 %v1170, 0.0
        %1179 = vset.pattern.permute.xlu0 18
        %1180 = vperm.xlu0 %1179, %v474
        %v1181 = vpop.permute.xlu0 %1180
        %v1183 = vperm.slane %v1176, 0
        %v1184 = vperm.slane %v1177, 0
        %v1185 = vperm.slane %v1178, 0
        %v1186 = vmul.f32 %v1181, %v1183
        %v1187 = vmul.f32 %v1181, %v1184
        %v1188 = vmul.f32 %v1181, %v1185
        %1192 = vrot.lane.b32.xlu0 %v1186, 77
        %v1193 = vpop.permute.xlu0 %1192
        %1194 = vrot.lane.b32.xlu0 %v1187, 77
        %v1195 = vpop.permute.xlu0 %1194
        %1196 = vrot.lane.b32.xlu0 %v1188, 77
        %v1197 = vpop.permute.xlu0 %1196
        %vm1198 = vcmask 629760
        %v1199 = vsel %vm1198, %v1193, %v1195
        %v1200 = vsel %vm1198, %v1195, %v1197
        %v1204 = vadd.f32 %v1164, %v1193
        %v1205 = vadd.f32 %v1165, %v1199
        %v1206 = vadd.f32 %v1166, %v1200
        %1207 = vrot.lane.b32.xlu0 %v627, 18
        %v1208 = vpop.permute.xlu0 %1207
        %1209 = vrot.lane.b32.xlu0 %v628, 18
        %v1210 = vpop.permute.xlu0 %1209
        %vm1211 = vcmask 146432
        %v1212 = vsel %vm1211, %v1208, %v1210
        %v1216 = vmul.f32 %v454, %v1208
        %v1217 = vmul.f32 %v455, %v1212
        %v1218 = vmul.f32 %v1210, 0.0
        %1219 = vset.pattern.permute.xlu0 19
        %1220 = vperm.xlu0 %1219, %v474
        %v1221 = vpop.permute.xlu0 %1220
        %v1223 = vperm.slane %v1216, 0
        %v1224 = vperm.slane %v1217, 0
        %v1225 = vperm.slane %v1218, 0
        %v1226 = vmul.f32 %v1221, %v1223
        %v1227 = vmul.f32 %v1221, %v1224
        %v1228 = vmul.f32 %v1221, %v1225
        %1232 = vrot.lane.b32.xlu0 %v1226, 76
        %v1233 = vpop.permute.xlu0 %1232
        %1234 = vrot.lane.b32.xlu0 %v1227, 76
        %v1235 = vpop.permute.xlu0 %1234
        %1236 = vrot.lane.b32.xlu0 %v1228, 76
        %v1237 = vpop.permute.xlu0 %1236
        %vm1238 = vcmask 621568
        %v1239 = vsel %vm1238, %v1233, %v1235
        %v1240 = vsel %vm1238, %v1235, %v1237
        %v1244 = vadd.f32 %v1204, %v1233
        %v1245 = vadd.f32 %v1205, %v1239
        %v1246 = vadd.f32 %v1206, %v1240
        %1247 = vrot.lane.b32.xlu0 %v460, 30
        %v1248 = vpop.permute.xlu0 %1247
        %1249 = vrot.lane.b32.xlu0 %v461, 30
        %v1250 = vpop.permute.xlu0 %1249
        %vm1251 = vcmask 244736
        %v1252 = vsel %vm1251, %v1248, %v1250
        %v1256 = vmul.f32 %v454, %v1248
        %v1257 = vmul.f32 %v455, %v1252
        %v1258 = vmul.f32 %v1250, 0.0
        %1259 = vset.pattern.permute.xlu0 20
        %1260 = vperm.xlu0 %1259, %v474
        %v1261 = vpop.permute.xlu0 %1260
        %v1263 = vperm.slane %v1256, 0
        %v1264 = vperm.slane %v1257, 0
        %v1265 = vperm.slane %v1258, 0
        %v1266 = vmul.f32 %v1261, %v1263
        %v1267 = vmul.f32 %v1261, %v1264
        %v1268 = vmul.f32 %v1261, %v1265
        %1272 = vrot.lane.b32.xlu0 %v1266, 64
        %v1273 = vpop.permute.xlu0 %1272
        %1274 = vrot.lane.b32.xlu0 %v1267, 64
        %v1275 = vpop.permute.xlu0 %1274
        %1276 = vrot.lane.b32.xlu0 %v1268, 64
        %v1277 = vpop.permute.xlu0 %1276
        %vm1278 = vcmask 523264
        %v1279 = vsel %vm1278, %v1273, %v1275
        %v1280 = vsel %vm1278, %v1275, %v1277
        %v1284 = vadd.f32 %v1244, %v1273
        %v1285 = vadd.f32 %v1245, %v1279
        %v1286 = vadd.f32 %v1246, %v1280
        %1287 = vrot.lane.b32.xlu0 %v492, 31
        %v1288 = vpop.permute.xlu0 %1287
        %1289 = vrot.lane.b32.xlu0 %v493, 31
        %v1290 = vpop.permute.xlu0 %1289
        %vm1291 = vcmask 252928
        %v1292 = vsel %vm1291, %v1288, %v1290
        %v1296 = vmul.f32 %v454, %v1288
        %v1297 = vmul.f32 %v455, %v1292
        %v1298 = vmul.f32 %v1290, 0.0
        %1299 = vset.pattern.permute.xlu0 21
        %1300 = vperm.xlu0 %1299, %v474
        %v1301 = vpop.permute.xlu0 %1300
        %v1303 = vperm.slane %v1296, 0
        %v1304 = vperm.slane %v1297, 0
        %v1305 = vperm.slane %v1298, 0
        %v1306 = vmul.f32 %v1301, %v1303
        %v1307 = vmul.f32 %v1301, %v1304
        %v1308 = vmul.f32 %v1301, %v1305
        %1312 = vrot.lane.b32.xlu0 %v1306, 63
        %v1313 = vpop.permute.xlu0 %1312
        %1314 = vrot.lane.b32.xlu0 %v1307, 63
        %v1315 = vpop.permute.xlu0 %1314
        %1316 = vrot.lane.b32.xlu0 %v1308, 63
        %v1317 = vpop.permute.xlu0 %1316
        %vm1318 = vcmask 515072
        %v1319 = vsel %vm1318, %v1313, %v1315
        %v1320 = vsel %vm1318, %v1315, %v1317
        %v1324 = vadd.f32 %v1284, %v1313
        %v1325 = vadd.f32 %v1285, %v1319
        %v1326 = vadd.f32 %v1286, %v1320
        %1327 = vrot.lane.b32.xlu0 %v537, 32
        %v1328 = vpop.permute.xlu0 %1327
        %1329 = vrot.lane.b32.xlu0 %v538, 32
        %v1330 = vpop.permute.xlu0 %1329
        %vm1331 = vcmask 261120
        %v1332 = vsel %vm1331, %v1328, %v1330
        %v1336 = vmul.f32 %v454, %v1328
        %v1337 = vmul.f32 %v455, %v1332
        %v1338 = vmul.f32 %v1330, 0.0
        %1339 = vset.pattern.permute.xlu0 22
        %1340 = vperm.xlu0 %1339, %v474
        %v1341 = vpop.permute.xlu0 %1340
        %v1343 = vperm.slane %v1336, 0
        %v1344 = vperm.slane %v1337, 0
        %v1345 = vperm.slane %v1338, 0
        %v1346 = vmul.f32 %v1341, %v1343
        %v1347 = vmul.f32 %v1341, %v1344
        %v1348 = vmul.f32 %v1341, %v1345
        %1352 = vrot.lane.b32.xlu0 %v1346, 62
        %v1353 = vpop.permute.xlu0 %1352
        %1354 = vrot.lane.b32.xlu0 %v1347, 62
        %v1355 = vpop.permute.xlu0 %1354
        %1356 = vrot.lane.b32.xlu0 %v1348, 62
        %v1357 = vpop.permute.xlu0 %1356
        %vm1358 = vcmask 506880
        %v1359 = vsel %vm1358, %v1353, %v1355
        %v1360 = vsel %vm1358, %v1355, %v1357
        %v1364 = vadd.f32 %v1324, %v1353
        %v1365 = vadd.f32 %v1325, %v1359
        %v1366 = vadd.f32 %v1326, %v1360
        %1367 = vrot.lane.b32.xlu0 %v582, 33
        %v1368 = vpop.permute.xlu0 %1367
        %1369 = vrot.lane.b32.xlu0 %v583, 33
        %v1370 = vpop.permute.xlu0 %1369
        %vm1371 = vcmask 269312
        %v1372 = vsel %vm1371, %v1368, %v1370
        %v1376 = vmul.f32 %v454, %v1368
        %v1377 = vmul.f32 %v455, %v1372
        %v1378 = vmul.f32 %v1370, 0.0
        %1379 = vset.pattern.permute.xlu0 23
        %1380 = vperm.xlu0 %1379, %v474
        %v1381 = vpop.permute.xlu0 %1380
        %v1383 = vperm.slane %v1376, 0
        %v1384 = vperm.slane %v1377, 0
        %v1385 = vperm.slane %v1378, 0
        %v1386 = vmul.f32 %v1381, %v1383
        %v1387 = vmul.f32 %v1381, %v1384
        %v1388 = vmul.f32 %v1381, %v1385
        %1392 = vrot.lane.b32.xlu0 %v1386, 61
        %v1393 = vpop.permute.xlu0 %1392
        %1394 = vrot.lane.b32.xlu0 %v1387, 61
        %v1395 = vpop.permute.xlu0 %1394
        %1396 = vrot.lane.b32.xlu0 %v1388, 61
        %v1397 = vpop.permute.xlu0 %1396
        %vm1398 = vcmask 498688
        %v1399 = vsel %vm1398, %v1393, %v1395
        %v1400 = vsel %vm1398, %v1395, %v1397
        %v1404 = vadd.f32 %v1364, %v1393
        %v1405 = vadd.f32 %v1365, %v1399
        %v1406 = vadd.f32 %v1366, %v1400
        %1407 = vrot.lane.b32.xlu0 %v627, 34
        %v1408 = vpop.permute.xlu0 %1407
        %1409 = vrot.lane.b32.xlu0 %v628, 34
        %v1410 = vpop.permute.xlu0 %1409
        %vm1411 = vcmask 277504
        %v1412 = vsel %vm1411, %v1408, %v1410
        %v1416 = vmul.f32 %v454, %v1408
        %v1417 = vmul.f32 %v455, %v1412
        %v1418 = vmul.f32 %v1410, 0.0
        %1419 = vset.pattern.permute.xlu0 24
        %1420 = vperm.xlu0 %1419, %v474
        %v1421 = vpop.permute.xlu0 %1420
        %v1423 = vperm.slane %v1416, 0
        %v1424 = vperm.slane %v1417, 0
        %v1425 = vperm.slane %v1418, 0
        %v1426 = vmul.f32 %v1421, %v1423
        %v1427 = vmul.f32 %v1421, %v1424
        %v1428 = vmul.f32 %v1421, %v1425
        %1432 = vrot.lane.b32.xlu0 %v1426, 60
        %v1433 = vpop.permute.xlu0 %1432
        %1434 = vrot.lane.b32.xlu0 %v1427, 60
        %v1435 = vpop.permute.xlu0 %1434
        %1436 = vrot.lane.b32.xlu0 %v1428, 60
        %v1437 = vpop.permute.xlu0 %1436
        %vm1438 = vcmask 490496
        %v1439 = vsel %vm1438, %v1433, %v1435
        %v1440 = vsel %vm1438, %v1435, %v1437
        %v1444 = vadd.f32 %v1404, %v1433
        %v1445 = vadd.f32 %v1405, %v1439
        %v1446 = vadd.f32 %v1406, %v1440
        %v1447 = vld [vmem:[%s4] sm:$0xff]
        %1449 = vset.pattern.permute.xlu0 0
        %1450 = vperm.xlu0 %1449, %v1447
        %v1451 = vpop.permute.xlu0 %1450
        %v1453 = vadd.f32 %v1444, %v1451
        %v1454 = vadd.f32 %v1445, %v1451
        %v1455 = vadd.f32 %v1446, %v1451
        %vm1456 = vcmp.gt.f32.partialorder %v1453, 0.0
        %vm1457 = vcmp.gt.f32.partialorder %v1454, 0.0
        %vm1458 = vcmp.gt.f32.partialorder %v1455, 0.0
        %v1459 = vmul.f32 %v1453, 0.01
        %v1460 = vmul.f32 %v1454, 0.01
        %v1461 = vmul.f32 %v1455, 0.01
        %v1462 = vsel %vm1456, %v1453, %v1459
        %v1463 = vsel %vm1457, %v1454, %v1460
        %v1464 = vsel %vm1458, %v1455, %v1461
        %1468 = vrot.lane.b32.xlu0 %v1462, 34
        %v1469 = vpop.permute.xlu0 %1468
        %1470 = vrot.lane.b32.xlu0 %v1463, 34
        %v1471 = vpop.permute.xlu0 %1470
        %1472 = vrot.lane.b32.xlu0 %v1464, 34
        %v1473 = vpop.permute.xlu0 %1472
        %v1474 = vsel %vm1411, %v1469, %v1471
        %v1475 = vsel %vm1411, %v1471, %v1473
        %v1478 = vld [vmem:[#allocation6] ss:$8 sm:$0x3]
        %v1480 = vperm.slane %v1478, 0
        %v1481 = vperm.slane %v1478, 1
        %1482 = vrot.lane.b32.xlu0 %v1480, 111
        %v1483 = vpop.permute.xlu0 %1482
        %1484 = vrot.lane.b32.xlu0 %v1481, 111
        %v1485 = vpop.permute.xlu0 %1484
        %v1486 = vsel %vm713, %v1483, %v1485
        %v1490 = vadd.f32 %v1483, 0.0
        %v1491 = vadd.f32 %v1474, %v1486
        %v1492 = vadd.f32 %v1475, %v1485
        %1496 = vrot.lane.b32.xlu0 %v1490, 111
        %v1497 = vpop.permute.xlu0 %1496
        %1498 = vrot.lane.b32.xlu0 %v1491, 111
        %v1499 = vpop.permute.xlu0 %1498
        %1500 = vrot.lane.b32.xlu0 %v1492, 111
        %v1501 = vpop.permute.xlu0 %1500
        %v1502 = vsel %vm713, %v1497, %v1499
        %v1503 = vsel %vm713, %v1499, %v1501
        %v1507 = vmax.f32 %v1462, %v1502
        %v1508 = vmax.f32 %v1463, %v1503
        %v1509 = vmax.f32 %v1464, %v1501
        %s1510 = scalar_lea.vmem [#allocation6], 1
        %v1511 = vld [vmem:[%s1510] ss:$8 sm:$0x3]
        %v1513 = vperm.slane %v1511, 0
        %v1514 = vperm.slane %v1511, 1
        %1515 = vrot.lane.b32.xlu0 %v1513, 112
        %v1516 = vpop.permute.xlu0 %1515
        %1517 = vrot.lane.b32.xlu0 %v1514, 112
        %v1518 = vpop.permute.xlu0 %1517
        %v1519 = vsel %vm700, %v1516, %v1518
        %v1523 = vadd.f32 %v1516, 0.0
        %v1524 = vadd.f32 %v1474, %v1519
        %v1525 = vadd.f32 %v1475, %v1518
        %1529 = vrot.lane.b32.xlu0 %v1523, 110
        %v1530 = vpop.permute.xlu0 %1529
        %1531 = vrot.lane.b32.xlu0 %v1524, 110
        %v1532 = vpop.permute.xlu0 %1531
        %1533 = vrot.lane.b32.xlu0 %v1525, 110
        %v1534 = vpop.permute.xlu0 %1533
        %v1535 = vsel %vm673, %v1530, %v1532
        %v1536 = vsel %vm673, %v1532, %v1534
        %v1540 = vmax.f32 %v1507, %v1535
        %v1541 = vmax.f32 %v1508, %v1536
        %v1542 = vmax.f32 %v1509, %v1534
        %s1543 = scalar_lea.vmem [#allocation6], 2
        %v1544 = vld [vmem:[%s1543] ss:$8 sm:$0x3]
        %v1546 = vperm.slane %v1544, 0
        %v1547 = vperm.slane %v1544, 1
        %1548 = vrot.lane.b32.xlu0 %v1546, 113
        %v1549 = vpop.permute.xlu0 %1548
        %1550 = vrot.lane.b32.xlu0 %v1547, 113
        %v1551 = vpop.permute.xlu0 %1550
        %v1552 = vsel %vm790, %v1549, %v1551
        %v1556 = vadd.f32 %v1549, 0.0
        %v1557 = vadd.f32 %v1474, %v1552
        %v1558 = vadd.f32 %v1475, %v1551
        %1562 = vrot.lane.b32.xlu0 %v1556, 109
        %v1563 = vpop.permute.xlu0 %1562
        %1564 = vrot.lane.b32.xlu0 %v1557, 109
        %v1565 = vpop.permute.xlu0 %1564
        %1566 = vrot.lane.b32.xlu0 %v1558, 109
        %v1567 = vpop.permute.xlu0 %1566
        %v1568 = vsel %vm817, %v1563, %v1565
        %v1569 = vsel %vm817, %v1565, %v1567
        %v1573 = vmax.f32 %v1540, %v1568
        %v1574 = vmax.f32 %v1541, %v1569
        %v1575 = vmax.f32 %v1542, %v1567
        %s1576 = scalar_lea.vmem [#allocation6], 3
        %v1577 = vld [vmem:[%s1576] ss:$8 sm:$0x3]
        %v1579 = vperm.slane %v1577, 0
        %v1580 = vperm.slane %v1577, 1
        %1581 = vrot.lane.b32.xlu0 %v1579, 127
        %v1582 = vpop.permute.xlu0 %1581
        %1583 = vrot.lane.b32.xlu0 %v1580, 127
        %v1584 = vpop.permute.xlu0 %1583
        %v1585 = vsel %vm525, %v1582, %v1584
        %v1589 = vadd.f32 %v1582, 0.0
        %v1590 = vadd.f32 %v1474, %v1585
        %v1591 = vadd.f32 %v1475, %v1584
        %1595 = vrot.lane.b32.xlu0 %v1589, 95
        %v1596 = vpop.permute.xlu0 %1595
        %1597 = vrot.lane.b32.xlu0 %v1590, 95
        %v1598 = vpop.permute.xlu0 %1597
        %1599 = vrot.lane.b32.xlu0 %v1591, 95
        %v1600 = vpop.permute.xlu0 %1599
        %v1601 = vsel %vm498, %v1596, %v1598
        %v1602 = vsel %vm498, %v1598, %v1600
        %v1606 = vmax.f32 %v1573, %v1601
        %v1607 = vmax.f32 %v1574, %v1602
        %v1608 = vmax.f32 %v1575, %v1600
        %s1609 = scalar_lea.vmem [#allocation6], 5
        %v1610 = vld [vmem:[%s1609] ss:$8 sm:$0x3]
        %v1612 = vperm.slane %v1610, 0
        %v1613 = vperm.slane %v1610, 1
        %1614 = vrot.lane.b32.xlu0 %v1612, 1
        %v1615 = vpop.permute.xlu0 %1614
        %1616 = vrot.lane.b32.xlu0 %v1613, 1
        %v1617 = vpop.permute.xlu0 %1616
        %v1618 = vsel %vm971, %v1615, %v1617
        %v1622 = vadd.f32 %v1474, %v1615
        %v1623 = vadd.f32 %v1475, %v1618
        %v1624 = vadd.f32 %v1617, 0.0
        %1628 = vrot.lane.b32.xlu0 %v1622, 93
        %v1629 = vpop.permute.xlu0 %1628
        %1630 = vrot.lane.b32.xlu0 %v1623, 93
        %v1631 = vpop.permute.xlu0 %1630
        %1632 = vrot.lane.b32.xlu0 %v1624, 93
        %v1633 = vpop.permute.xlu0 %1632
        %v1634 = vsel %vm998, %v1629, %v1631
        %v1635 = vsel %vm998, %v1631, %v1633
        %v1639 = vmax.f32 %v1606, %v1629
        %v1640 = vmax.f32 %v1607, %v1634
        %v1641 = vmax.f32 %v1608, %v1635
        %s1642 = scalar_lea.vmem [#allocation6], 6
        %v1643 = vld [vmem:[%s1642] ss:$8 sm:$0x3]
        %v1645 = vperm.slane %v1643, 0
        %v1646 = vperm.slane %v1643, 1
        %1647 = vrot.lane.b32.xlu0 %v1645, 15
        %v1648 = vpop.permute.xlu0 %1647
        %1649 = vrot.lane.b32.xlu0 %v1646, 15
        %v1650 = vpop.permute.xlu0 %1649
        %v1651 = vsel %vm1091, %v1648, %v1650
        %v1655 = vadd.f32 %v1474, %v1648
        %v1656 = vadd.f32 %v1475, %v1651
        %v1657 = vadd.f32 %v1650, 0.0
        %1661 = vrot.lane.b32.xlu0 %v1655, 79
        %v1662 = vpop.permute.xlu0 %1661
        %1663 = vrot.lane.b32.xlu0 %v1656, 79
        %v1664 = vpop.permute.xlu0 %1663
        %1665 = vrot.lane.b32.xlu0 %v1657, 79
        %v1666 = vpop.permute.xlu0 %1665
        %v1667 = vsel %vm1118, %v1662, %v1664
        %v1668 = vsel %vm1118, %v1664, %v1666
        %v1672 = vmax.f32 %v1639, %v1662
        %v1673 = vmax.f32 %v1640, %v1667
        %v1674 = vmax.f32 %v1641, %v1668
        %s1675 = scalar_lea.vmem [#allocation6], 7
        %v1676 = vld [vmem:[%s1675] ss:$8 sm:$0x3]
        %v1678 = vperm.slane %v1676, 0
        %v1679 = vperm.slane %v1676, 1
        %1680 = vrot.lane.b32.xlu0 %v1678, 16
        %v1681 = vpop.permute.xlu0 %1680
        %1682 = vrot.lane.b32.xlu0 %v1679, 16
        %v1683 = vpop.permute.xlu0 %1682
        %v1684 = vsel %vm1131, %v1681, %v1683
        %v1688 = vadd.f32 %v1474, %v1681
        %v1689 = vadd.f32 %v1475, %v1684
        %v1690 = vadd.f32 %v1683, 0.0
        %1694 = vrot.lane.b32.xlu0 %v1688, 78
        %v1695 = vpop.permute.xlu0 %1694
        %1696 = vrot.lane.b32.xlu0 %v1689, 78
        %v1697 = vpop.permute.xlu0 %1696
        %1698 = vrot.lane.b32.xlu0 %v1690, 78
        %v1699 = vpop.permute.xlu0 %1698
        %v1700 = vsel %vm1158, %v1695, %v1697
        %v1701 = vsel %vm1158, %v1697, %v1699
        %v1705 = vmax.f32 %v1672, %v1695
        %v1706 = vmax.f32 %v1673, %v1700
        %v1707 = vmax.f32 %v1674, %v1701
        %s1708 = scalar_lea.vmem [#allocation6], 16
        %v1709 = vld [vmem:[%s1708] ss:$8 sm:$0x3]
        %v1711 = vperm.slane %v1709, 0
        %v1712 = vperm.slane %v1709, 1
        %1713 = vrot.lane.b32.xlu0 %v1711, 17
        %v1714 = vpop.permute.xlu0 %1713
        %1715 = vrot.lane.b32.xlu0 %v1712, 17
        %v1716 = vpop.permute.xlu0 %1715
        %v1717 = vsel %vm1171, %v1714, %v1716
        %v1721 = vadd.f32 %v1474, %v1714
        %v1722 = vadd.f32 %v1475, %v1717
        %v1723 = vadd.f32 %v1716, 0.0
        %1727 = vrot.lane.b32.xlu0 %v1721, 77
        %v1728 = vpop.permute.xlu0 %1727
        %1729 = vrot.lane.b32.xlu0 %v1722, 77
        %v1730 = vpop.permute.xlu0 %1729
        %1731 = vrot.lane.b32.xlu0 %v1723, 77
        %v1732 = vpop.permute.xlu0 %1731
        %v1733 = vsel %vm1198, %v1728, %v1730
        %v1734 = vsel %vm1198, %v1730, %v1732
        %v1738 = vmax.f32 %v1705, %v1728
        %v1739 = vmax.f32 %v1706, %v1733
        %v1740 = vmax.f32 %v1707, %v1734
        %1744 = vrot.lane.b32.xlu0 %v1738, 34
        %v1745 = vpop.permute.xlu0 %1744
        %1746 = vrot.lane.b32.xlu0 %v1739, 34
        %v1747 = vpop.permute.xlu0 %1746
        %1748 = vrot.lane.b32.xlu0 %v1740, 34
        %v1749 = vpop.permute.xlu0 %1748
        %v1750 = vsel %vm1411, %v1745, %v1747
        %v1751 = vsel %vm1411, %v1747, %v1749
        %v1754 = vmul.f32 %v1750, %v467
        %v1755 = vmul.f32 %v1751, %v465
        %v1756 = vmul.f32 %v1750, %v499
        %v1757 = vmul.f32 %v1751, %v497
        %v1758 = vmul.f32 %v1750, %v544
        %v1759 = vmul.f32 %v1751, %v542
        %v1760 = vmul.f32 %v1750, %v589
        %v1761 = vmul.f32 %v1751, %v587
        %v1762 = vmul.f32 %v1750, %v634
        %v1763 = vmul.f32 %v1751, %v632
        %v1764 = vmul.f32 %v1750, %v674
        %v1765 = vmul.f32 %v1751, %v672
        %v1766 = vmul.f32 %v1750, %v714
        %v1767 = vmul.f32 %v1751, %v712
        %v1768 = vmul.f32 %v1750, %v752
        %v1769 = vmul.f32 %v1751, %v751
        %v1770 = vmul.f32 %v1750, %v791
        %v1771 = vmul.f32 %v1751, %v789
        %v1772 = vmul.f32 %v1750, %v831
        %v1773 = vmul.f32 %v1751, %v829
        %v1774 = vmul.f32 %v1750, %v870
        %v1775 = vmul.f32 %v1751, %v869
        %v1776 = vmul.f32 %v1750, %v908
        %v1777 = vmul.f32 %v1751, %v907
        %v1778 = vmul.f32 %v1750, %v537
        %v1779 = vmul.f32 %v1751, %v538
        %v1780 = vmul.f32 %v1750, %v968
        %v1781 = vmul.f32 %v1751, %v972
        %v1782 = vmul.f32 %v1750, %v1008
        %v1783 = vmul.f32 %v1751, %v1012
        %v1784 = vmul.f32 %v1750, %v1048
        %v1785 = vmul.f32 %v1751, %v1052
        %1789 = vrot.lane.b32.xlu0 %v503, 127
        %v1790 = vpop.permute.xlu0 %1789
        %1791 = vrot.lane.b32.xlu0 %v1756, 127
        %v1792 = vpop.permute.xlu0 %1791
        %1793 = vrot.lane.b32.xlu0 %v1757, 127
        %v1794 = vpop.permute.xlu0 %1793
        %v1795 = vsel %vm525, %v1790, %v1792
        %v1796 = vsel %vm525, %v1792, %v1794
        %1800 = vrot.lane.b32.xlu0 %v548, 126
        %v1801 = vpop.permute.xlu0 %1800
        %1802 = vrot.lane.b32.xlu0 %v1758, 126
        %v1803 = vpop.permute.xlu0 %1802
        %1804 = vrot.lane.b32.xlu0 %v1759, 126
        %v1805 = vpop.permute.xlu0 %1804
        %v1806 = vsel %vm570, %v1801, %v1803
        %v1807 = vsel %vm570, %v1803, %v1805
        %1811 = vrot.lane.b32.xlu0 %v593, 125
        %v1812 = vpop.permute.xlu0 %1811
        %1813 = vrot.lane.b32.xlu0 %v1760, 125
        %v1814 = vpop.permute.xlu0 %1813
        %1815 = vrot.lane.b32.xlu0 %v1761, 125
        %v1816 = vpop.permute.xlu0 %1815
        %v1817 = vsel %vm615, %v1812, %v1814
        %v1818 = vsel %vm615, %v1814, %v1816
        %1822 = vrot.lane.b32.xlu0 %v638, 124
        %v1823 = vpop.permute.xlu0 %1822
        %1824 = vrot.lane.b32.xlu0 %v1762, 124
        %v1825 = vpop.permute.xlu0 %1824
        %1826 = vrot.lane.b32.xlu0 %v1763, 124
        %v1827 = vpop.permute.xlu0 %1826
        %v1828 = vsel %vm660, %v1823, %v1825
        %v1829 = vsel %vm660, %v1825, %v1827
        %1833 = vrot.lane.b32.xlu0 %v678, 112
        %v1834 = vpop.permute.xlu0 %1833
        %1835 = vrot.lane.b32.xlu0 %v1764, 112
        %v1836 = vpop.permute.xlu0 %1835
        %1837 = vrot.lane.b32.xlu0 %v1765, 112
        %v1838 = vpop.permute.xlu0 %1837
        %v1839 = vsel %vm700, %v1834, %v1836
        %v1840 = vsel %vm700, %v1836, %v1838
        %1844 = vrot.lane.b32.xlu0 %v718, 111
        %v1845 = vpop.permute.xlu0 %1844
        %1846 = vrot.lane.b32.xlu0 %v1766, 111
        %v1847 = vpop.permute.xlu0 %1846
        %1848 = vrot.lane.b32.xlu0 %v1767, 111
        %v1849 = vpop.permute.xlu0 %1848
        %v1850 = vsel %vm713, %v1845, %v1847
        %v1851 = vsel %vm713, %v1847, %v1849
        %1855 = vrot.lane.b32.xlu0 %v756, 110
        %v1856 = vpop.permute.xlu0 %1855
        %1857 = vrot.lane.b32.xlu0 %v1768, 110
        %v1858 = vpop.permute.xlu0 %1857
        %1859 = vrot.lane.b32.xlu0 %v1769, 110
        %v1860 = vpop.permute.xlu0 %1859
        %v1861 = vsel %vm673, %v1856, %v1858
        %v1862 = vsel %vm673, %v1858, %v1860
        %1866 = vrot.lane.b32.xlu0 %v795, 109
        %v1867 = vpop.permute.xlu0 %1866
        %1868 = vrot.lane.b32.xlu0 %v1770, 109
        %v1869 = vpop.permute.xlu0 %1868
        %1870 = vrot.lane.b32.xlu0 %v1771, 109
        %v1871 = vpop.permute.xlu0 %1870
        %v1872 = vsel %vm817, %v1867, %v1869
        %v1873 = vsel %vm817, %v1869, %v1871
        %1877 = vrot.lane.b32.xlu0 %v835, 108
        %v1878 = vpop.permute.xlu0 %1877
        %1879 = vrot.lane.b32.xlu0 %v1772, 108
        %v1880 = vpop.permute.xlu0 %1879
        %1881 = vrot.lane.b32.xlu0 %v1773, 108
        %v1882 = vpop.permute.xlu0 %1881
        %v1883 = vsel %vm857, %v1878, %v1880
        %v1884 = vsel %vm857, %v1880, %v1882
        %1888 = vrot.lane.b32.xlu0 %v874, 96
        %v1889 = vpop.permute.xlu0 %1888
        %1890 = vrot.lane.b32.xlu0 %v1774, 96
        %v1891 = vpop.permute.xlu0 %1890
        %1892 = vrot.lane.b32.xlu0 %v1775, 96
        %v1893 = vpop.permute.xlu0 %1892
        %v1894 = vsel %vm543, %v1889, %v1891
        %v1895 = vsel %vm543, %v1891, %v1893
        %1899 = vrot.lane.b32.xlu0 %v912, 95
        %v1900 = vpop.permute.xlu0 %1899
        %1901 = vrot.lane.b32.xlu0 %v1776, 95
        %v1902 = vpop.permute.xlu0 %1901
        %1903 = vrot.lane.b32.xlu0 %v1777, 95
        %v1904 = vpop.permute.xlu0 %1903
        %v1905 = vsel %vm498, %v1900, %v1902
        %v1906 = vsel %vm498, %v1902, %v1904
        %1909 = vrot.lane.b32.xlu0 %v1778, 94
        %v1910 = vpop.permute.xlu0 %1909
        %1911 = vrot.lane.b32.xlu0 %v1779, 94
        %v1912 = vpop.permute.xlu0 %1911
        %v1913 = vsel %vm466, %v1910, %v1912
        %1917 = vrot.lane.b32.xlu0 %v1780, 93
        %v1918 = vpop.permute.xlu0 %1917
        %1919 = vrot.lane.b32.xlu0 %v1781, 93
        %v1920 = vpop.permute.xlu0 %1919
        %1921 = vrot.lane.b32.xlu0 %v978, 93
        %v1922 = vpop.permute.xlu0 %1921
        %v1923 = vsel %vm998, %v1918, %v1920
        %v1924 = vsel %vm998, %v1920, %v1922
        %1928 = vrot.lane.b32.xlu0 %v1782, 92
        %v1929 = vpop.permute.xlu0 %1928
        %1930 = vrot.lane.b32.xlu0 %v1783, 92
        %v1931 = vpop.permute.xlu0 %1930
        %1932 = vrot.lane.b32.xlu0 %v1018, 92
        %v1933 = vpop.permute.xlu0 %1932
        %v1934 = vsel %vm1038, %v1929, %v1931
        %v1935 = vsel %vm1038, %v1931, %v1933
        %1939 = vrot.lane.b32.xlu0 %v1784, 80
        %v1940 = vpop.permute.xlu0 %1939
        %1941 = vrot.lane.b32.xlu0 %v1785, 80
        %v1942 = vpop.permute.xlu0 %1941
        %1943 = vrot.lane.b32.xlu0 %v1058, 80
        %v1944 = vpop.permute.xlu0 %1943
        %v1945 = vsel %vm1078, %v1940, %v1942
        %v1946 = vsel %vm1078, %v1942, %v1944
        %v1947 = vld [vmem:[%s5] sm:$0xff]
        %v1948 = vmul.f32 %v1750, %v1088
        %v1949 = vmul.f32 %v1751, %v1092
        %v1950 = vmul.f32 %v1750, %v1128
        %v1951 = vmul.f32 %v1751, %v1132
        %v1952 = vmul.f32 %v1750, %v1168
        %v1953 = vmul.f32 %v1751, %v1172
        %v1954 = vmul.f32 %v1750, %v1208
        %v1955 = vmul.f32 %v1751, %v1212
        %v1956 = vmul.f32 %v1750, %v1248
        %v1957 = vmul.f32 %v1751, %v1252
        %v1958 = vmul.f32 %v1750, %v1288
        %v1959 = vmul.f32 %v1751, %v1292
        %v1960 = vmul.f32 %v1750, %v1328
        %v1961 = vmul.f32 %v1751, %v1332
        %v1962 = vmul.f32 %v1750, %v1368
        %v1963 = vmul.f32 %v1751, %v1372
        %v1964 = vmul.f32 %v1750, %v1408
        %v1965 = vmul.f32 %v1751, %v1412
        %1969 = vrot.lane.b32.xlu0 %v1950, 127
        %v1970 = vpop.permute.xlu0 %1969
        %1971 = vrot.lane.b32.xlu0 %v1951, 127
        %v1972 = vpop.permute.xlu0 %1971
        %1973 = vrot.lane.b32.xlu0 %v1138, 127
        %v1974 = vpop.permute.xlu0 %1973
        %v1975 = vsel %vm525, %v1970, %v1972
        %v1976 = vsel %vm525, %v1972, %v1974
        %1980 = vrot.lane.b32.xlu0 %v1952, 126
        %v1981 = vpop.permute.xlu0 %1980
        %1982 = vrot.lane.b32.xlu0 %v1953, 126
        %v1983 = vpop.permute.xlu0 %1982
        %1984 = vrot.lane.b32.xlu0 %v1178, 126
        %v1985 = vpop.permute.xlu0 %1984
        %v1986 = vsel %vm570, %v1981, %v1983
        %v1987 = vsel %vm570, %v1983, %v1985
        %1991 = vrot.lane.b32.xlu0 %v1954, 125
        %v1992 = vpop.permute.xlu0 %1991
        %1993 = vrot.lane.b32.xlu0 %v1955, 125
        %v1994 = vpop.permute.xlu0 %1993
        %1995 = vrot.lane.b32.xlu0 %v1218, 125
        %v1996 = vpop.permute.xlu0 %1995
        %v1997 = vsel %vm615, %v1992, %v1994
        %v1998 = vsel %vm615, %v1994, %v1996
        %2002 = vrot.lane.b32.xlu0 %v1956, 113
        %v2003 = vpop.permute.xlu0 %2002
        %2004 = vrot.lane.b32.xlu0 %v1957, 113
        %v2005 = vpop.permute.xlu0 %2004
        %2006 = vrot.lane.b32.xlu0 %v1258, 113
        %v2007 = vpop.permute.xlu0 %2006
        %v2008 = vsel %vm790, %v2003, %v2005
        %v2009 = vsel %vm790, %v2005, %v2007
        %2013 = vrot.lane.b32.xlu0 %v1958, 112
        %v2014 = vpop.permute.xlu0 %2013
        %2015 = vrot.lane.b32.xlu0 %v1959, 112
        %v2016 = vpop.permute.xlu0 %2015
        %2017 = vrot.lane.b32.xlu0 %v1298, 112
        %v2018 = vpop.permute.xlu0 %2017
        %v2019 = vsel %vm700, %v2014, %v2016
        %v2020 = vsel %vm700, %v2016, %v2018
        %2024 = vrot.lane.b32.xlu0 %v1960, 111
        %v2025 = vpop.permute.xlu0 %2024
        %2026 = vrot.lane.b32.xlu0 %v1961, 111
        %v2027 = vpop.permute.xlu0 %2026
        %2028 = vrot.lane.b32.xlu0 %v1338, 111
        %v2029 = vpop.permute.xlu0 %2028
        %v2030 = vsel %vm713, %v2025, %v2027
        %v2031 = vsel %vm713, %v2027, %v2029
        %2035 = vrot.lane.b32.xlu0 %v1962, 110
        %v2036 = vpop.permute.xlu0 %2035
        %2037 = vrot.lane.b32.xlu0 %v1963, 110
        %v2038 = vpop.permute.xlu0 %2037
        %2039 = vrot.lane.b32.xlu0 %v1378, 110
        %v2040 = vpop.permute.xlu0 %2039
        %v2041 = vsel %vm673, %v2036, %v2038
        %v2042 = vsel %vm673, %v2038, %v2040
        %2046 = vrot.lane.b32.xlu0 %v1964, 109
        %v2047 = vpop.permute.xlu0 %2046
        %2048 = vrot.lane.b32.xlu0 %v1965, 109
        %v2049 = vpop.permute.xlu0 %2048
        %2050 = vrot.lane.b32.xlu0 %v1418, 109
        %v2051 = vpop.permute.xlu0 %2050
        %v2052 = vsel %vm817, %v2047, %v2049
        %v2053 = vsel %vm817, %v2049, %v2051
        %v2054 = vld [vmem:[%s5 + $0x8] sm:$0xff]
        %2058 = vrot.lane.b32.xlu0 %v1948, 113
        %v2059 = vpop.permute.xlu0 %2058
        %2060 = vrot.lane.b32.xlu0 %v1949, 113
        %v2061 = vpop.permute.xlu0 %2060
        %2062 = vrot.lane.b32.xlu0 %v1098, 113
        %v2063 = vpop.permute.xlu0 %2062
        %2064 = vrot.lane.b32.xlu0 %v1975, 113
        %v2065 = vpop.permute.xlu0 %2064
        %2066 = vrot.lane.b32.xlu0 %v1976, 113
        %v2067 = vpop.permute.xlu0 %2066
        %2068 = vrot.lane.b32.xlu0 %v1974, 113
        %v2069 = vpop.permute.xlu0 %2068
        %2070 = vrot.lane.b32.xlu0 %v1986, 113
        %v2071 = vpop.permute.xlu0 %2070
        %2072 = vrot.lane.b32.xlu0 %v1987, 113
        %v2073 = vpop.permute.xlu0 %2072
        %2074 = vrot.lane.b32.xlu0 %v1985, 113
        %v2075 = vpop.permute.xlu0 %2074
        %2076 = vrot.lane.b32.xlu0 %v1997, 113
        %v2077 = vpop.permute.xlu0 %2076
        %2078 = vrot.lane.b32.xlu0 %v1998, 113
        %v2079 = vpop.permute.xlu0 %2078
        %2080 = vrot.lane.b32.xlu0 %v1996, 113
        %v2081 = vpop.permute.xlu0 %2080
        %2082 = vrot.lane.b32.xlu0 %v2008, 113
        %v2083 = vpop.permute.xlu0 %2082
        %2084 = vrot.lane.b32.xlu0 %v2009, 113
        %v2085 = vpop.permute.xlu0 %2084
        %2086 = vrot.lane.b32.xlu0 %v2007, 113
        %v2087 = vpop.permute.xlu0 %2086
        %2088 = vrot.lane.b32.xlu0 %v2019, 113
        %v2089 = vpop.permute.xlu0 %2088
        %2090 = vrot.lane.b32.xlu0 %v2020, 113
        %v2091 = vpop.permute.xlu0 %2090
        %2092 = vrot.lane.b32.xlu0 %v2018, 113
        %v2093 = vpop.permute.xlu0 %2092
        %2094 = vrot.lane.b32.xlu0 %v2030, 113
        %v2095 = vpop.permute.xlu0 %2094
        %2096 = vrot.lane.b32.xlu0 %v2031, 113
        %v2097 = vpop.permute.xlu0 %2096
        %2098 = vrot.lane.b32.xlu0 %v2029, 113
        %v2099 = vpop.permute.xlu0 %2098
        %2100 = vrot.lane.b32.xlu0 %v2041, 113
        %v2101 = vpop.permute.xlu0 %2100
        %2102 = vrot.lane.b32.xlu0 %v2042, 113
        %v2103 = vpop.permute.xlu0 %2102
        %2104 = vrot.lane.b32.xlu0 %v2040, 113
        %v2105 = vpop.permute.xlu0 %2104
        %2106 = vrot.lane.b32.xlu0 %v2052, 113
        %v2107 = vpop.permute.xlu0 %2106
        %2108 = vrot.lane.b32.xlu0 %v2053, 113
        %v2109 = vpop.permute.xlu0 %2108
        %2110 = vrot.lane.b32.xlu0 %v2051, 113
        %v2111 = vpop.permute.xlu0 %2110
        %v2112 = vsel %vm790, %v2059, %v2061
        %v2113 = vsel %vm790, %v2061, %v2063
        %v2114 = vsel %vm790, %v2065, %v2067
        %v2115 = vsel %vm790, %v2067, %v2069
        %v2116 = vsel %vm790, %v2071, %v2073
        %v2117 = vsel %vm790, %v2073, %v2075
        %v2118 = vsel %vm790, %v2077, %v2079
        %v2119 = vsel %vm790, %v2079, %v2081
        %v2120 = vsel %vm790, %v2083, %v2085
        %v2121 = vsel %vm790, %v2085, %v2087
        %v2122 = vsel %vm790, %v2089, %v2091
        %v2123 = vsel %vm790, %v2091, %v2093
        %v2124 = vsel %vm790, %v2095, %v2097
        %v2125 = vsel %vm790, %v2097, %v2099
        %v2126 = vsel %vm790, %v2101, %v2103
        %v2127 = vsel %vm790, %v2103, %v2105
        %v2128 = vsel %vm790, %v2107, %v2109
        %v2129 = vsel %vm790, %v2109, %v2111
        %vm2148 = vcmask 588800
        %v2150 = vsel %vm2148, %v2054, 0
        %2152 = vmatpush.msra.mxu0 0.0
        %2153 = vmatpush.msra.mxu0 0.0
        %2154 = vmatpush.msra.mxu0 0.0
        %2155 = vmatpush.msra.mxu0 0.0
        %2156 = vmatpush.msra.mxu0 0.0
        %2157 = vmatpush.msra.mxu0 0.0
        %2158 = vmatpush.msra.mxu0 0.0
        %2159 = vmatpush.msra.mxu0 %v2128
        %2160 = vmatpush.msra.mxu0 %v2126
        %2161 = vmatpush.msra.mxu0 %v2124
        %2162 = vmatpush.msra.mxu0 %v2122
        %2163 = vmatpush.msra.mxu0 %v2120
        %2164 = vmatpush.msra.mxu0 %v2118
        %2165 = vmatpush.msra.mxu0 %v2116
        %2166 = vmatpush.msra.mxu0 %v2114
        %2167 = vmatpush.msra.mxu0 %v2112
        %2168 = vmatmul.f32.gmra.mxu0 %v2150
        %v2169 = vpop.f32.mrf.mxu0
        %v2170 = vadd.f32 0.0, %v2169
        %2171 = vdwg.mxu0
        %2172 = vmatpush.msra.mxu0 0.0
        %2173 = vmatpush.msra.mxu0 0.0
        %2174 = vmatpush.msra.mxu0 0.0
        %2175 = vmatpush.msra.mxu0 0.0
        %2176 = vmatpush.msra.mxu0 0.0
        %2177 = vmatpush.msra.mxu0 0.0
        %2178 = vmatpush.msra.mxu0 0.0
        %2179 = vmatpush.msra.mxu0 %v2129
        %2180 = vmatpush.msra.mxu0 %v2127
        %2181 = vmatpush.msra.mxu0 %v2125
        %2182 = vmatpush.msra.mxu0 %v2123
        %2183 = vmatpush.msra.mxu0 %v2121
        %2184 = vmatpush.msra.mxu0 %v2119
        %2185 = vmatpush.msra.mxu0 %v2117
        %2186 = vmatpush.msra.mxu0 %v2115
        %2187 = vmatpush.msra.mxu0 %v2113
        %2188 = vmatmul.f32.gmra.mxu0 %v2150
        %v2189 = vpop.f32.mrf.mxu0
        %v2190 = vadd.f32 0.0, %v2189
        %2191 = vdwg.mxu0
        %2195 = vrot.lane.b32.xlu0 %v471, 34
        %v2196 = vpop.permute.xlu0 %2195
        %2197 = vrot.lane.b32.xlu0 %v1754, 34
        %v2198 = vpop.permute.xlu0 %2197
        %2199 = vrot.lane.b32.xlu0 %v1755, 34
        %v2200 = vpop.permute.xlu0 %2199
        %2201 = vrot.lane.b32.xlu0 %v1795, 34
        %v2202 = vpop.permute.xlu0 %2201
        %2203 = vrot.lane.b32.xlu0 %v1796, 34
        %v2204 = vpop.permute.xlu0 %2203
        %2205 = vrot.lane.b32.xlu0 %v1794, 34
        %v2206 = vpop.permute.xlu0 %2205
        %2207 = vrot.lane.b32.xlu0 %v1806, 34
        %v2208 = vpop.permute.xlu0 %2207
        %2209 = vrot.lane.b32.xlu0 %v1807, 34
        %v2210 = vpop.permute.xlu0 %2209
        %2211 = vrot.lane.b32.xlu0 %v1805, 34
        %v2212 = vpop.permute.xlu0 %2211
        %2213 = vrot.lane.b32.xlu0 %v1817, 34
        %v2214 = vpop.permute.xlu0 %2213
        %2215 = vrot.lane.b32.xlu0 %v1818, 34
        %v2216 = vpop.permute.xlu0 %2215
        %2217 = vrot.lane.b32.xlu0 %v1816, 34
        %v2218 = vpop.permute.xlu0 %2217
        %2219 = vrot.lane.b32.xlu0 %v1828, 34
        %v2220 = vpop.permute.xlu0 %2219
        %2221 = vrot.lane.b32.xlu0 %v1829, 34
        %v2222 = vpop.permute.xlu0 %2221
        %2223 = vrot.lane.b32.xlu0 %v1827, 34
        %v2224 = vpop.permute.xlu0 %2223
        %2225 = vrot.lane.b32.xlu0 %v1839, 34
        %v2226 = vpop.permute.xlu0 %2225
        %2227 = vrot.lane.b32.xlu0 %v1840, 34
        %v2228 = vpop.permute.xlu0 %2227
        %2229 = vrot.lane.b32.xlu0 %v1838, 34
        %v2230 = vpop.permute.xlu0 %2229
        %2231 = vrot.lane.b32.xlu0 %v1850, 34
        %v2232 = vpop.permute.xlu0 %2231
        %2233 = vrot.lane.b32.xlu0 %v1851, 34
        %v2234 = vpop.permute.xlu0 %2233
        %2235 = vrot.lane.b32.xlu0 %v1849, 34
        %v2236 = vpop.permute.xlu0 %2235
        %2237 = vrot.lane.b32.xlu0 %v1861, 34
        %v2238 = vpop.permute.xlu0 %2237
        %2239 = vrot.lane.b32.xlu0 %v1862, 34
        %v2240 = vpop.permute.xlu0 %2239
        %2241 = vrot.lane.b32.xlu0 %v1860, 34
        %v2242 = vpop.permute.xlu0 %2241
        %2243 = vrot.lane.b32.xlu0 %v1872, 34
        %v2244 = vpop.permute.xlu0 %2243
        %2245 = vrot.lane.b32.xlu0 %v1873, 34
        %v2246 = vpop.permute.xlu0 %2245
        %2247 = vrot.lane.b32.xlu0 %v1871, 34
        %v2248 = vpop.permute.xlu0 %2247
        %2249 = vrot.lane.b32.xlu0 %v1883, 34
        %v2250 = vpop.permute.xlu0 %2249
        %2251 = vrot.lane.b32.xlu0 %v1884, 34
        %v2252 = vpop.permute.xlu0 %2251
        %2253 = vrot.lane.b32.xlu0 %v1882, 34
        %v2254 = vpop.permute.xlu0 %2253
        %2255 = vrot.lane.b32.xlu0 %v1894, 34
        %v2256 = vpop.permute.xlu0 %2255
        %2257 = vrot.lane.b32.xlu0 %v1895, 34
        %v2258 = vpop.permute.xlu0 %2257
        %2259 = vrot.lane.b32.xlu0 %v1893, 34
        %v2260 = vpop.permute.xlu0 %2259
        %2261 = vrot.lane.b32.xlu0 %v1905, 34
        %v2262 = vpop.permute.xlu0 %2261
        %2263 = vrot.lane.b32.xlu0 %v1906, 34
        %v2264 = vpop.permute.xlu0 %2263
        %2265 = vrot.lane.b32.xlu0 %v1904, 34
        %v2266 = vpop.permute.xlu0 %2265
        %2267 = vrot.lane.b32.xlu0 %v1910, 34
        %v2268 = vpop.permute.xlu0 %2267
        %2269 = vrot.lane.b32.xlu0 %v1913, 34
        %v2270 = vpop.permute.xlu0 %2269
        %2271 = vrot.lane.b32.xlu0 %v1912, 34
        %v2272 = vpop.permute.xlu0 %2271
        %2273 = vrot.lane.b32.xlu0 %v1918, 34
        %v2274 = vpop.permute.xlu0 %2273
        %2275 = vrot.lane.b32.xlu0 %v1923, 34
        %v2276 = vpop.permute.xlu0 %2275
        %2277 = vrot.lane.b32.xlu0 %v1924, 34
        %v2278 = vpop.permute.xlu0 %2277
        %2279 = vrot.lane.b32.xlu0 %v1929, 34
        %v2280 = vpop.permute.xlu0 %2279
        %2281 = vrot.lane.b32.xlu0 %v1934, 34
        %v2282 = vpop.permute.xlu0 %2281
        %2283 = vrot.lane.b32.xlu0 %v1935, 34
        %v2284 = vpop.permute.xlu0 %2283
        %2285 = vrot.lane.b32.xlu0 %v1940, 34
        %v2286 = vpop.permute.xlu0 %2285
        %2287 = vrot.lane.b32.xlu0 %v1945, 34
        %v2288 = vpop.permute.xlu0 %2287
        %2289 = vrot.lane.b32.xlu0 %v1946, 34
        %v2290 = vpop.permute.xlu0 %2289
        %v2291 = vsel %vm1411, %v2196, %v2198
        %v2292 = vsel %vm1411, %v2198, %v2200
        %v2293 = vsel %vm1411, %v2202, %v2204
        %v2294 = vsel %vm1411, %v2204, %v2206
        %v2295 = vsel %vm1411, %v2208, %v2210
        %v2296 = vsel %vm1411, %v2210, %v2212
        %v2297 = vsel %vm1411, %v2214, %v2216
        %v2298 = vsel %vm1411, %v2216, %v2218
        %v2299 = vsel %vm1411, %v2220, %v2222
        %v2300 = vsel %vm1411, %v2222, %v2224
        %v2301 = vsel %vm1411, %v2226, %v2228
        %v2302 = vsel %vm1411, %v2228, %v2230
        %v2303 = vsel %vm1411, %v2232, %v2234
        %v2304 = vsel %vm1411, %v2234, %v2236
        %v2305 = vsel %vm1411, %v2238, %v2240
        %v2306 = vsel %vm1411, %v2240, %v2242
        %v2307 = vsel %vm1411, %v2244, %v2246
        %v2308 = vsel %vm1411, %v2246, %v2248
        %v2309 = vsel %vm1411, %v2250, %v2252
        %v2310 = vsel %vm1411, %v2252, %v2254
        %v2311 = vsel %vm1411, %v2256, %v2258
        %v2312 = vsel %vm1411, %v2258, %v2260
        %v2313 = vsel %vm1411, %v2262, %v2264
        %v2314 = vsel %vm1411, %v2264, %v2266
        %v2315 = vsel %vm1411, %v2268, %v2270
        %v2316 = vsel %vm1411, %v2270, %v2272
        %v2317 = vsel %vm1411, %v2274, %v2276
        %v2318 = vsel %vm1411, %v2276, %v2278
        %v2319 = vsel %vm1411, %v2280, %v2282
        %v2320 = vsel %vm1411, %v2282, %v2284
        %v2321 = vsel %vm1411, %v2286, %v2288
        %v2322 = vsel %vm1411, %v2288, %v2290
        %2355 = vmatpush.msra.mxu0 %v2321
        %2356 = vmatpush.msra.mxu0 %v2319
        %2357 = vmatpush.msra.mxu0 %v2317
        %2358 = vmatpush.msra.mxu0 %v2315
        %2359 = vmatpush.msra.mxu0 %v2313
        %2360 = vmatpush.msra.mxu0 %v2311
        %2361 = vmatpush.msra.mxu0 %v2309
        %2362 = vmatpush.msra.mxu0 %v2307
        %2363 = vmatpush.msra.mxu0 %v2305
        %2364 = vmatpush.msra.mxu0 %v2303
        %2365 = vmatpush.msra.mxu0 %v2301
        %2366 = vmatpush.msra.mxu0 %v2299
        %2367 = vmatpush.msra.mxu0 %v2297
        %2368 = vmatpush.msra.mxu0 %v2295
        %2369 = vmatpush.msra.mxu0 %v2293
        %2370 = vmatpush.msra.mxu0 %v2291
        %2371 = vmatmul.f32.gmra.mxu0 %v1947
        %v2372 = vpop.f32.mrf.mxu0
        %v2373 = vadd.f32 %v2170, %v2372
        %2374 = vdwg.mxu0
        %2375 = vmatpush.msra.mxu0 %v2322
        %2376 = vmatpush.msra.mxu0 %v2320
        %2377 = vmatpush.msra.mxu0 %v2318
        %2378 = vmatpush.msra.mxu0 %v2316
        %2379 = vmatpush.msra.mxu0 %v2314
        %2380 = vmatpush.msra.mxu0 %v2312
        %2381 = vmatpush.msra.mxu0 %v2310
        %2382 = vmatpush.msra.mxu0 %v2308
        %2383 = vmatpush.msra.mxu0 %v2306
        %2384 = vmatpush.msra.mxu0 %v2304
        %2385 = vmatpush.msra.mxu0 %v2302
        %2386 = vmatpush.msra.mxu0 %v2300
        %2387 = vmatpush.msra.mxu0 %v2298
        %2388 = vmatpush.msra.mxu0 %v2296
        %2389 = vmatpush.msra.mxu0 %v2294
        %2390 = vmatpush.msra.mxu0 %v2292
        %2391 = vmatmul.f32.gmra.mxu0 %v1947
        %v2392 = vpop.f32.mrf.mxu0
        %v2393 = vadd.f32 %v2190, %v2392
        %2394 = vdwg.mxu0
        %v2395 = vld [vmem:[%s6] sm:$0xff]
        %2397 = vset.pattern.permute.xlu0 0
        %2398 = vperm.xlu0 %2397, %v2395
        %v2399 = vpop.permute.xlu0 %2398
        %v2401 = vadd.f32 %v2373, %v2399
        %v2402 = vadd.f32 %v2393, %v2399
        %vm2403 = vcmp.gt.f32.partialorder %v2401, 0.0
        %vm2404 = vcmp.gt.f32.partialorder %v2402, 0.0
        %v2405 = vmul.f32 %v2401, 0.01
        %v2406 = vmul.f32 %v2402, 0.01
        %v2407 = vsel %vm2403, %v2401, %v2405
        %v2408 = vsel %vm2404, %v2402, %v2406
        %2411 = vrot.lane.b32.xlu0 %v2407, 94
        %v2412 = vpop.permute.xlu0 %2411
        %2413 = vrot.lane.b32.xlu0 %v2408, 94
        %v2414 = vpop.permute.xlu0 %2413
        %v2415 = vsel %vm466, %v2412, %v2414
        %v2419 = vadd.f32 %v1462, %v2412
        %v2420 = vadd.f32 %v1463, %v2415
        %v2421 = vadd.f32 %v1464, %v2414
        %v2422 = vadd.f32 %v2407, %v1486
        %v2423 = vadd.f32 %v2408, %v1485
        %2426 = vrot.lane.b32.xlu0 %v1490, 17
        %v2427 = vpop.permute.xlu0 %2426
        %2428 = vrot.lane.b32.xlu0 %v2422, 17
        %v2429 = vpop.permute.xlu0 %2428
        %2430 = vrot.lane.b32.xlu0 %v2423, 17
        %v2431 = vpop.permute.xlu0 %2430
        %v2432 = vsel %vm1171, %v2427, %v2429
        %v2433 = vsel %vm1171, %v2429, %v2431
        %v2436 = vmax.f32 %v2407, %v2432
        %v2437 = vmax.f32 %v2408, %v2433
        %v2438 = vadd.f32 %v2407, %v1519
        %v2439 = vadd.f32 %v2408, %v1518
        %2442 = vrot.lane.b32.xlu0 %v1523, 16
        %v2443 = vpop.permute.xlu0 %2442
        %2444 = vrot.lane.b32.xlu0 %v2438, 16
        %v2445 = vpop.permute.xlu0 %2444
        %2446 = vrot.lane.b32.xlu0 %v2439, 16
        %v2447 = vpop.permute.xlu0 %2446
        %v2448 = vsel %vm1131, %v2443, %v2445
        %v2449 = vsel %vm1131, %v2445, %v2447
        %v2452 = vmax.f32 %v2436, %v2448
        %v2453 = vmax.f32 %v2437, %v2449
        %v2454 = vadd.f32 %v2407, %v1552
        %v2455 = vadd.f32 %v2408, %v1551
        %2458 = vrot.lane.b32.xlu0 %v1556, 15
        %v2459 = vpop.permute.xlu0 %2458
        %2460 = vrot.lane.b32.xlu0 %v2454, 15
        %v2461 = vpop.permute.xlu0 %2460
        %2462 = vrot.lane.b32.xlu0 %v2455, 15
        %v2463 = vpop.permute.xlu0 %2462
        %v2464 = vsel %vm1091, %v2459, %v2461
        %v2465 = vsel %vm1091, %v2461, %v2463
        %v2468 = vmax.f32 %v2452, %v2464
        %v2469 = vmax.f32 %v2453, %v2465
        %v2470 = vadd.f32 %v2407, %v1585
        %v2471 = vadd.f32 %v2408, %v1584
        %2474 = vrot.lane.b32.xlu0 %v1589, 1
        %v2475 = vpop.permute.xlu0 %2474
        %2476 = vrot.lane.b32.xlu0 %v2470, 1
        %v2477 = vpop.permute.xlu0 %2476
        %2478 = vrot.lane.b32.xlu0 %v2471, 1
        %v2479 = vpop.permute.xlu0 %2478
        %v2480 = vsel %vm971, %v2475, %v2477
        %v2481 = vsel %vm971, %v2477, %v2479
        %v2484 = vmax.f32 %v2468, %v2480
        %v2485 = vmax.f32 %v2469, %v2481
        %v2486 = vadd.f32 %v2407, %v1615
        %v2487 = vadd.f32 %v2408, %v1618
        %2490 = vrot.lane.b32.xlu0 %v2486, 127
        %v2491 = vpop.permute.xlu0 %2490
        %2492 = vrot.lane.b32.xlu0 %v2487, 127
        %v2493 = vpop.permute.xlu0 %2492
        %2494 = vrot.lane.b32.xlu0 %v1624, 127
        %v2495 = vpop.permute.xlu0 %2494
        %v2496 = vsel %vm525, %v2491, %v2493
        %v2497 = vsel %vm525, %v2493, %v2495
        %v2500 = vmax.f32 %v2484, %v2496
        %v2501 = vmax.f32 %v2485, %v2497
        %v2502 = vadd.f32 %v2407, %v1648
        %v2503 = vadd.f32 %v2408, %v1651
        %2506 = vrot.lane.b32.xlu0 %v2502, 113
        %v2507 = vpop.permute.xlu0 %2506
        %2508 = vrot.lane.b32.xlu0 %v2503, 113
        %v2509 = vpop.permute.xlu0 %2508
        %2510 = vrot.lane.b32.xlu0 %v1657, 113
        %v2511 = vpop.permute.xlu0 %2510
        %v2512 = vsel %vm790, %v2507, %v2509
        %v2513 = vsel %vm790, %v2509, %v2511
        %v2516 = vmax.f32 %v2500, %v2512
        %v2517 = vmax.f32 %v2501, %v2513
        %v2518 = vadd.f32 %v2407, %v1681
        %v2519 = vadd.f32 %v2408, %v1684
        %2522 = vrot.lane.b32.xlu0 %v2518, 112
        %v2523 = vpop.permute.xlu0 %2522
        %2524 = vrot.lane.b32.xlu0 %v2519, 112
        %v2525 = vpop.permute.xlu0 %2524
        %2526 = vrot.lane.b32.xlu0 %v1690, 112
        %v2527 = vpop.permute.xlu0 %2526
        %v2528 = vsel %vm700, %v2523, %v2525
        %v2529 = vsel %vm700, %v2525, %v2527
        %v2532 = vmax.f32 %v2516, %v2528
        %v2533 = vmax.f32 %v2517, %v2529
        %v2534 = vadd.f32 %v2407, %v1714
        %v2535 = vadd.f32 %v2408, %v1717
        %2538 = vrot.lane.b32.xlu0 %v2534, 111
        %v2539 = vpop.permute.xlu0 %2538
        %2540 = vrot.lane.b32.xlu0 %v2535, 111
        %v2541 = vpop.permute.xlu0 %2540
        %2542 = vrot.lane.b32.xlu0 %v1723, 111
        %v2543 = vpop.permute.xlu0 %2542
        %v2544 = vsel %vm713, %v2539, %v2541
        %v2545 = vsel %vm713, %v2541, %v2543
        %v2548 = vmax.f32 %v2532, %v2544
        %v2549 = vmax.f32 %v2533, %v2545
        %v2550 = vmul.f32 %v2548, %v467
        %v2551 = vmul.f32 %v2549, %v465
        %v2552 = vmul.f32 %v2548, %v499
        %v2553 = vmul.f32 %v2549, %v497
        %v2554 = vmul.f32 %v2548, %v544
        %v2555 = vmul.f32 %v2549, %v542
        %v2556 = vmul.f32 %v2548, %v589
        %v2557 = vmul.f32 %v2549, %v587
        %v2558 = vmul.f32 %v2548, %v634
        %v2559 = vmul.f32 %v2549, %v632
        %v2560 = vmul.f32 %v2548, %v674
        %v2561 = vmul.f32 %v2549, %v672
        %v2562 = vmul.f32 %v2548, %v714
        %v2563 = vmul.f32 %v2549, %v712
        %v2564 = vmul.f32 %v2548, %v752
        %v2565 = vmul.f32 %v2549, %v751
        %v2566 = vmul.f32 %v2548, %v791
        %v2567 = vmul.f32 %v2549, %v789
        %v2568 = vmul.f32 %v2548, %v831
        %v2569 = vmul.f32 %v2549, %v829
        %v2570 = vmul.f32 %v2548, %v870
        %v2571 = vmul.f32 %v2549, %v869
        %v2572 = vmul.f32 %v2548, %v908
        %v2573 = vmul.f32 %v2549, %v907
        %v2574 = vmul.f32 %v2548, %v537
        %v2575 = vmul.f32 %v2549, %v538
        %v2576 = vmul.f32 %v2548, %v968
        %v2577 = vmul.f32 %v2549, %v972
        %v2578 = vmul.f32 %v2548, %v1008
        %v2579 = vmul.f32 %v2549, %v1012
        %v2580 = vmul.f32 %v2548, %v1048
        %v2581 = vmul.f32 %v2549, %v1052
        %2584 = vrot.lane.b32.xlu0 %v2552, 127
        %v2585 = vpop.permute.xlu0 %2584
        %2586 = vrot.lane.b32.xlu0 %v2553, 127
        %v2587 = vpop.permute.xlu0 %2586
        %v2588 = vsel %vm525, %v1790, %v2585
        %v2589 = vsel %vm525, %v2585, %v2587
        %2592 = vrot.lane.b32.xlu0 %v2554, 126
        %v2593 = vpop.permute.xlu0 %2592
        %2594 = vrot.lane.b32.xlu0 %v2555, 126
        %v2595 = vpop.permute.xlu0 %2594
        %v2596 = vsel %vm570, %v1801, %v2593
        %v2597 = vsel %vm570, %v2593, %v2595
        %2600 = vrot.lane.b32.xlu0 %v2556, 125
        %v2601 = vpop.permute.xlu0 %2600
        %2602 = vrot.lane.b32.xlu0 %v2557, 125
        %v2603 = vpop.permute.xlu0 %2602
        %v2604 = vsel %vm615, %v1812, %v2601
        %v2605 = vsel %vm615, %v2601, %v2603
        %2608 = vrot.lane.b32.xlu0 %v2558, 124
        %v2609 = vpop.permute.xlu0 %2608
        %2610 = vrot.lane.b32.xlu0 %v2559, 124
        %v2611 = vpop.permute.xlu0 %2610
        %v2612 = vsel %vm660, %v1823, %v2609
        %v2613 = vsel %vm660, %v2609, %v2611
        %2616 = vrot.lane.b32.xlu0 %v2560, 112
        %v2617 = vpop.permute.xlu0 %2616
        %2618 = vrot.lane.b32.xlu0 %v2561, 112
        %v2619 = vpop.permute.xlu0 %2618
        %v2620 = vsel %vm700, %v1834, %v2617
        %v2621 = vsel %vm700, %v2617, %v2619
        %2624 = vrot.lane.b32.xlu0 %v2562, 111
        %v2625 = vpop.permute.xlu0 %2624
        %2626 = vrot.lane.b32.xlu0 %v2563, 111
        %v2627 = vpop.permute.xlu0 %2626
        %v2628 = vsel %vm713, %v1845, %v2625
        %v2629 = vsel %vm713, %v2625, %v2627
        %2632 = vrot.lane.b32.xlu0 %v2564, 110
        %v2633 = vpop.permute.xlu0 %2632
        %2634 = vrot.lane.b32.xlu0 %v2565, 110
        %v2635 = vpop.permute.xlu0 %2634
        %v2636 = vsel %vm673, %v1856, %v2633
        %v2637 = vsel %vm673, %v2633, %v2635
        %2640 = vrot.lane.b32.xlu0 %v2566, 109
        %v2641 = vpop.permute.xlu0 %2640
        %2642 = vrot.lane.b32.xlu0 %v2567, 109
        %v2643 = vpop.permute.xlu0 %2642
        %v2644 = vsel %vm817, %v1867, %v2641
        %v2645 = vsel %vm817, %v2641, %v2643
        %2648 = vrot.lane.b32.xlu0 %v2568, 108
        %v2649 = vpop.permute.xlu0 %2648
        %2650 = vrot.lane.b32.xlu0 %v2569, 108
        %v2651 = vpop.permute.xlu0 %2650
        %v2652 = vsel %vm857, %v1878, %v2649
        %v2653 = vsel %vm857, %v2649, %v2651
        %2656 = vrot.lane.b32.xlu0 %v2570, 96
        %v2657 = vpop.permute.xlu0 %2656
        %2658 = vrot.lane.b32.xlu0 %v2571, 96
        %v2659 = vpop.permute.xlu0 %2658
        %v2660 = vsel %vm543, %v1889, %v2657
        %v2661 = vsel %vm543, %v2657, %v2659
        %2664 = vrot.lane.b32.xlu0 %v2572, 95
        %v2665 = vpop.permute.xlu0 %2664
        %2666 = vrot.lane.b32.xlu0 %v2573, 95
        %v2667 = vpop.permute.xlu0 %2666
        %v2668 = vsel %vm498, %v1900, %v2665
        %v2669 = vsel %vm498, %v2665, %v2667
        %2672 = vrot.lane.b32.xlu0 %v2574, 94
        %v2673 = vpop.permute.xlu0 %2672
        %2674 = vrot.lane.b32.xlu0 %v2575, 94
        %v2675 = vpop.permute.xlu0 %2674
        %v2676 = vsel %vm466, %v2673, %v2675
        %2679 = vrot.lane.b32.xlu0 %v2576, 93
        %v2680 = vpop.permute.xlu0 %2679
        %2681 = vrot.lane.b32.xlu0 %v2577, 93
        %v2682 = vpop.permute.xlu0 %2681
        %v2683 = vsel %vm998, %v2680, %v2682
        %v2684 = vsel %vm998, %v2682, %v1922
        %2687 = vrot.lane.b32.xlu0 %v2578, 92
        %v2688 = vpop.permute.xlu0 %2687
        %2689 = vrot.lane.b32.xlu0 %v2579, 92
        %v2690 = vpop.permute.xlu0 %2689
        %v2691 = vsel %vm1038, %v2688, %v2690
        %v2692 = vsel %vm1038, %v2690, %v1933
        %2695 = vrot.lane.b32.xlu0 %v2580, 80
        %v2696 = vpop.permute.xlu0 %2695
        %2697 = vrot.lane.b32.xlu0 %v2581, 80
        %v2698 = vpop.permute.xlu0 %2697
        %v2699 = vsel %vm1078, %v2696, %v2698
        %v2700 = vsel %vm1078, %v2698, %v1944
        %v2701 = vld [vmem:[#allocation9] sm:$0xff]
        %v2702 = vmul.f32 %v2548, %v1088
        %v2703 = vmul.f32 %v2549, %v1092
        %v2704 = vmul.f32 %v2548, %v1128
        %v2705 = vmul.f32 %v2549, %v1132
        %v2706 = vmul.f32 %v2548, %v1168
        %v2707 = vmul.f32 %v2549, %v1172
        %v2708 = vmul.f32 %v2548, %v1208
        %v2709 = vmul.f32 %v2549, %v1212
        %v2710 = vmul.f32 %v2548, %v1248
        %v2711 = vmul.f32 %v2549, %v1252
        %v2712 = vmul.f32 %v2548, %v1288
        %v2713 = vmul.f32 %v2549, %v1292
        %v2714 = vmul.f32 %v2548, %v1328
        %v2715 = vmul.f32 %v2549, %v1332
        %v2716 = vmul.f32 %v2548, %v1368
        %v2717 = vmul.f32 %v2549, %v1372
        %v2718 = vmul.f32 %v2548, %v1408
        %v2719 = vmul.f32 %v2549, %v1412
        %2722 = vrot.lane.b32.xlu0 %v2704, 127
        %v2723 = vpop.permute.xlu0 %2722
        %2724 = vrot.lane.b32.xlu0 %v2705, 127
        %v2725 = vpop.permute.xlu0 %2724
        %v2726 = vsel %vm525, %v2723, %v2725
        %v2727 = vsel %vm525, %v2725, %v1974
        %2730 = vrot.lane.b32.xlu0 %v2706, 126
        %v2731 = vpop.permute.xlu0 %2730
        %2732 = vrot.lane.b32.xlu0 %v2707, 126
        %v2733 = vpop.permute.xlu0 %2732
        %v2734 = vsel %vm570, %v2731, %v2733
        %v2735 = vsel %vm570, %v2733, %v1985
        %2738 = vrot.lane.b32.xlu0 %v2708, 125
        %v2739 = vpop.permute.xlu0 %2738
        %2740 = vrot.lane.b32.xlu0 %v2709, 125
        %v2741 = vpop.permute.xlu0 %2740
        %v2742 = vsel %vm615, %v2739, %v2741
        %v2743 = vsel %vm615, %v2741, %v1996
        %2746 = vrot.lane.b32.xlu0 %v2710, 113
        %v2747 = vpop.permute.xlu0 %2746
        %2748 = vrot.lane.b32.xlu0 %v2711, 113
        %v2749 = vpop.permute.xlu0 %2748
        %v2750 = vsel %vm790, %v2747, %v2749
        %v2751 = vsel %vm790, %v2749, %v2007
        %2754 = vrot.lane.b32.xlu0 %v2712, 112
        %v2755 = vpop.permute.xlu0 %2754
        %2756 = vrot.lane.b32.xlu0 %v2713, 112
        %v2757 = vpop.permute.xlu0 %2756
        %v2758 = vsel %vm700, %v2755, %v2757
        %v2759 = vsel %vm700, %v2757, %v2018
        %2762 = vrot.lane.b32.xlu0 %v2714, 111
        %v2763 = vpop.permute.xlu0 %2762
        %2764 = vrot.lane.b32.xlu0 %v2715, 111
        %v2765 = vpop.permute.xlu0 %2764
        %v2766 = vsel %vm713, %v2763, %v2765
        %v2767 = vsel %vm713, %v2765, %v2029
        %2770 = vrot.lane.b32.xlu0 %v2716, 110
        %v2771 = vpop.permute.xlu0 %2770
        %2772 = vrot.lane.b32.xlu0 %v2717, 110
        %v2773 = vpop.permute.xlu0 %2772
        %v2774 = vsel %vm673, %v2771, %v2773
        %v2775 = vsel %vm673, %v2773, %v2040
        %2778 = vrot.lane.b32.xlu0 %v2718, 109
        %v2779 = vpop.permute.xlu0 %2778
        %2780 = vrot.lane.b32.xlu0 %v2719, 109
        %v2781 = vpop.permute.xlu0 %2780
        %v2782 = vsel %vm817, %v2779, %v2781
        %v2783 = vsel %vm817, %v2781, %v2051
        %v2784 = vld [vmem:[#allocation9 + $0x8] sm:$0xff]
        %2787 = vrot.lane.b32.xlu0 %v2702, 113
        %v2788 = vpop.permute.xlu0 %2787
        %2789 = vrot.lane.b32.xlu0 %v2703, 113
        %v2790 = vpop.permute.xlu0 %2789
        %2791 = vrot.lane.b32.xlu0 %v2726, 113
        %v2792 = vpop.permute.xlu0 %2791
        %2793 = vrot.lane.b32.xlu0 %v2727, 113
        %v2794 = vpop.permute.xlu0 %2793
        %2795 = vrot.lane.b32.xlu0 %v2734, 113
        %v2796 = vpop.permute.xlu0 %2795
        %2797 = vrot.lane.b32.xlu0 %v2735, 113
        %v2798 = vpop.permute.xlu0 %2797
        %2799 = vrot.lane.b32.xlu0 %v2742, 113
        %v2800 = vpop.permute.xlu0 %2799
        %2801 = vrot.lane.b32.xlu0 %v2743, 113
        %v2802 = vpop.permute.xlu0 %2801
        %2803 = vrot.lane.b32.xlu0 %v2750, 113
        %v2804 = vpop.permute.xlu0 %2803
        %2805 = vrot.lane.b32.xlu0 %v2751, 113
        %v2806 = vpop.permute.xlu0 %2805
        %2807 = vrot.lane.b32.xlu0 %v2758, 113
        %v2808 = vpop.permute.xlu0 %2807
        %2809 = vrot.lane.b32.xlu0 %v2759, 113
        %v2810 = vpop.permute.xlu0 %2809
        %2811 = vrot.lane.b32.xlu0 %v2766, 113
        %v2812 = vpop.permute.xlu0 %2811
        %2813 = vrot.lane.b32.xlu0 %v2767, 113
        %v2814 = vpop.permute.xlu0 %2813
        %2815 = vrot.lane.b32.xlu0 %v2774, 113
        %v2816 = vpop.permute.xlu0 %2815
        %2817 = vrot.lane.b32.xlu0 %v2775, 113
        %v2818 = vpop.permute.xlu0 %2817
        %2819 = vrot.lane.b32.xlu0 %v2782, 113
        %v2820 = vpop.permute.xlu0 %2819
        %2821 = vrot.lane.b32.xlu0 %v2783, 113
        %v2822 = vpop.permute.xlu0 %2821
        %v2823 = vsel %vm790, %v2788, %v2790
        %v2824 = vsel %vm790, %v2790, %v2063
        %v2825 = vsel %vm790, %v2792, %v2794
        %v2826 = vsel %vm790, %v2794, %v2069
        %v2827 = vsel %vm790, %v2796, %v2798
        %v2828 = vsel %vm790, %v2798, %v2075
        %v2829 = vsel %vm790, %v2800, %v2802
        %v2830 = vsel %vm790, %v2802, %v2081
        %v2831 = vsel %vm790, %v2804, %v2806
        %v2832 = vsel %vm790, %v2806, %v2087
        %v2833 = vsel %vm790, %v2808, %v2810
        %v2834 = vsel %vm790, %v2810, %v2093
        %v2835 = vsel %vm790, %v2812, %v2814
        %v2836 = vsel %vm790, %v2814, %v2099
        %v2837 = vsel %vm790, %v2816, %v2818
        %v2838 = vsel %vm790, %v2818, %v2105
        %v2839 = vsel %vm790, %v2820, %v2822
        %v2840 = vsel %vm790, %v2822, %v2111
        %v2860 = vsel %vm2148, %v2784, 0
        %2862 = vmatpush.msra.mxu0 0.0
        %2863 = vmatpush.msra.mxu0 0.0
        %2864 = vmatpush.msra.mxu0 0.0
        %2865 = vmatpush.msra.mxu0 0.0
        %2866 = vmatpush.msra.mxu0 0.0
        %2867 = vmatpush.msra.mxu0 0.0
        %2868 = vmatpush.msra.mxu0 0.0
        %2869 = vmatpush.msra.mxu0 %v2839
        %2870 = vmatpush.msra.mxu0 %v2837
        %2871 = vmatpush.msra.mxu0 %v2835
        %2872 = vmatpush.msra.mxu0 %v2833
        %2873 = vmatpush.msra.mxu0 %v2831
        %2874 = vmatpush.msra.mxu0 %v2829
        %2875 = vmatpush.msra.mxu0 %v2827
        %2876 = vmatpush.msra.mxu0 %v2825
        %2877 = vmatpush.msra.mxu0 %v2823
        %2878 = vmatmul.f32.gmra.mxu0 %v2860
        %v2879 = vpop.f32.mrf.mxu0
        %v2880 = vadd.f32 0.0, %v2879
        %2881 = vdwg.mxu0
        %2882 = vmatpush.msra.mxu0 0.0
        %2883 = vmatpush.msra.mxu0 0.0
        %2884 = vmatpush.msra.mxu0 0.0
        %2885 = vmatpush.msra.mxu0 0.0
        %2886 = vmatpush.msra.mxu0 0.0
        %2887 = vmatpush.msra.mxu0 0.0
        %2888 = vmatpush.msra.mxu0 0.0
        %2889 = vmatpush.msra.mxu0 %v2840
        %2890 = vmatpush.msra.mxu0 %v2838
        %2891 = vmatpush.msra.mxu0 %v2836
        %2892 = vmatpush.msra.mxu0 %v2834
        %2893 = vmatpush.msra.mxu0 %v2832
        %2894 = vmatpush.msra.mxu0 %v2830
        %2895 = vmatpush.msra.mxu0 %v2828
        %2896 = vmatpush.msra.mxu0 %v2826
        %2897 = vmatpush.msra.mxu0 %v2824
        %2898 = vmatmul.f32.gmra.mxu0 %v2860
        %v2899 = vpop.f32.mrf.mxu0
        %v2900 = vadd.f32 0.0, %v2899
        %2901 = vdwg.mxu0
        %2904 = vrot.lane.b32.xlu0 %v2550, 34
        %v2905 = vpop.permute.xlu0 %2904
        %2906 = vrot.lane.b32.xlu0 %v2551, 34
        %v2907 = vpop.permute.xlu0 %2906
        %2908 = vrot.lane.b32.xlu0 %v2588, 34
        %v2909 = vpop.permute.xlu0 %2908
        %2910 = vrot.lane.b32.xlu0 %v2589, 34
        %v2911 = vpop.permute.xlu0 %2910
        %2912 = vrot.lane.b32.xlu0 %v2587, 34
        %v2913 = vpop.permute.xlu0 %2912
        %2914 = vrot.lane.b32.xlu0 %v2596, 34
        %v2915 = vpop.permute.xlu0 %2914
        %2916 = vrot.lane.b32.xlu0 %v2597, 34
        %v2917 = vpop.permute.xlu0 %2916
        %2918 = vrot.lane.b32.xlu0 %v2595, 34
        %v2919 = vpop.permute.xlu0 %2918
        %2920 = vrot.lane.b32.xlu0 %v2604, 34
        %v2921 = vpop.permute.xlu0 %2920
        %2922 = vrot.lane.b32.xlu0 %v2605, 34
        %v2923 = vpop.permute.xlu0 %2922
        %2924 = vrot.lane.b32.xlu0 %v2603, 34
        %v2925 = vpop.permute.xlu0 %2924
        %2926 = vrot.lane.b32.xlu0 %v2612, 34
        %v2927 = vpop.permute.xlu0 %2926
        %2928 = vrot.lane.b32.xlu0 %v2613, 34
        %v2929 = vpop.permute.xlu0 %2928
        %2930 = vrot.lane.b32.xlu0 %v2611, 34
        %v2931 = vpop.permute.xlu0 %2930
        %2932 = vrot.lane.b32.xlu0 %v2620, 34
        %v2933 = vpop.permute.xlu0 %2932
        %2934 = vrot.lane.b32.xlu0 %v2621, 34
        %v2935 = vpop.permute.xlu0 %2934
        %2936 = vrot.lane.b32.xlu0 %v2619, 34
        %v2937 = vpop.permute.xlu0 %2936
        %2938 = vrot.lane.b32.xlu0 %v2628, 34
        %v2939 = vpop.permute.xlu0 %2938
        %2940 = vrot.lane.b32.xlu0 %v2629, 34
        %v2941 = vpop.permute.xlu0 %2940
        %2942 = vrot.lane.b32.xlu0 %v2627, 34
        %v2943 = vpop.permute.xlu0 %2942
        %2944 = vrot.lane.b32.xlu0 %v2636, 34
        %v2945 = vpop.permute.xlu0 %2944
        %2946 = vrot.lane.b32.xlu0 %v2637, 34
        %v2947 = vpop.permute.xlu0 %2946
        %2948 = vrot.lane.b32.xlu0 %v2635, 34
        %v2949 = vpop.permute.xlu0 %2948
        %2950 = vrot.lane.b32.xlu0 %v2644, 34
        %v2951 = vpop.permute.xlu0 %2950
        %2952 = vrot.lane.b32.xlu0 %v2645, 34
        %v2953 = vpop.permute.xlu0 %2952
        %2954 = vrot.lane.b32.xlu0 %v2643, 34
        %v2955 = vpop.permute.xlu0 %2954
        %2956 = vrot.lane.b32.xlu0 %v2652, 34
        %v2957 = vpop.permute.xlu0 %2956
        %2958 = vrot.lane.b32.xlu0 %v2653, 34
        %v2959 = vpop.permute.xlu0 %2958
        %2960 = vrot.lane.b32.xlu0 %v2651, 34
        %v2961 = vpop.permute.xlu0 %2960
        %2962 = vrot.lane.b32.xlu0 %v2660, 34
        %v2963 = vpop.permute.xlu0 %2962
        %2964 = vrot.lane.b32.xlu0 %v2661, 34
        %v2965 = vpop.permute.xlu0 %2964
        %2966 = vrot.lane.b32.xlu0 %v2659, 34
        %v2967 = vpop.permute.xlu0 %2966
        %2968 = vrot.lane.b32.xlu0 %v2668, 34
        %v2969 = vpop.permute.xlu0 %2968
        %2970 = vrot.lane.b32.xlu0 %v2669, 34
        %v2971 = vpop.permute.xlu0 %2970
        %2972 = vrot.lane.b32.xlu0 %v2667, 34
        %v2973 = vpop.permute.xlu0 %2972
        %2974 = vrot.lane.b32.xlu0 %v2673, 34
        %v2975 = vpop.permute.xlu0 %2974
        %2976 = vrot.lane.b32.xlu0 %v2676, 34
        %v2977 = vpop.permute.xlu0 %2976
        %2978 = vrot.lane.b32.xlu0 %v2675, 34
        %v2979 = vpop.permute.xlu0 %2978
        %2980 = vrot.lane.b32.xlu0 %v2680, 34
        %v2981 = vpop.permute.xlu0 %2980
        %2982 = vrot.lane.b32.xlu0 %v2683, 34
        %v2983 = vpop.permute.xlu0 %2982
        %2984 = vrot.lane.b32.xlu0 %v2684, 34
        %v2985 = vpop.permute.xlu0 %2984
        %2986 = vrot.lane.b32.xlu0 %v2688, 34
        %v2987 = vpop.permute.xlu0 %2986
        %2988 = vrot.lane.b32.xlu0 %v2691, 34
        %v2989 = vpop.permute.xlu0 %2988
        %2990 = vrot.lane.b32.xlu0 %v2692, 34
        %v2991 = vpop.permute.xlu0 %2990
        %2992 = vrot.lane.b32.xlu0 %v2696, 34
        %v2993 = vpop.permute.xlu0 %2992
        %2994 = vrot.lane.b32.xlu0 %v2699, 34
        %v2995 = vpop.permute.xlu0 %2994
        %2996 = vrot.lane.b32.xlu0 %v2700, 34
        %v2997 = vpop.permute.xlu0 %2996
        %v2998 = vsel %vm1411, %v2196, %v2905
        %v2999 = vsel %vm1411, %v2905, %v2907
        %v3000 = vsel %vm1411, %v2909, %v2911
        %v3001 = vsel %vm1411, %v2911, %v2913
        %v3002 = vsel %vm1411, %v2915, %v2917
        %v3003 = vsel %vm1411, %v2917, %v2919
        %v3004 = vsel %vm1411, %v2921, %v2923
        %v3005 = vsel %vm1411, %v2923, %v2925
        %v3006 = vsel %vm1411, %v2927, %v2929
        %v3007 = vsel %vm1411, %v2929, %v2931
        %v3008 = vsel %vm1411, %v2933, %v2935
        %v3009 = vsel %vm1411, %v2935, %v2937
        %v3010 = vsel %vm1411, %v2939, %v2941
        %v3011 = vsel %vm1411, %v2941, %v2943
        %v3012 = vsel %vm1411, %v2945, %v2947
        %v3013 = vsel %vm1411, %v2947, %v2949
        %v3014 = vsel %vm1411, %v2951, %v2953
        %v3015 = vsel %vm1411, %v2953, %v2955
        %v3016 = vsel %vm1411, %v2957, %v2959
        %v3017 = vsel %vm1411, %v2959, %v2961
        %v3018 = vsel %vm1411, %v2963, %v2965
        %v3019 = vsel %vm1411, %v2965, %v2967
        %v3020 = vsel %vm1411, %v2969, %v2971
        %v3021 = vsel %vm1411, %v2971, %v2973
        %v3022 = vsel %vm1411, %v2975, %v2977
        %v3023 = vsel %vm1411, %v2977, %v2979
        %v3024 = vsel %vm1411, %v2981, %v2983
        %v3025 = vsel %vm1411, %v2983, %v2985
        %v3026 = vsel %vm1411, %v2987, %v2989
        %v3027 = vsel %vm1411, %v2989, %v2991
        %v3028 = vsel %vm1411, %v2993, %v2995
        %v3029 = vsel %vm1411, %v2995, %v2997
        %3062 = vmatpush.msra.mxu0 %v3028
        %3063 = vmatpush.msra.mxu0 %v3026
        %3064 = vmatpush.msra.mxu0 %v3024
        %3065 = vmatpush.msra.mxu0 %v3022
        %3066 = vmatpush.msra.mxu0 %v3020
        %3067 = vmatpush.msra.mxu0 %v3018
        %3068 = vmatpush.msra.mxu0 %v3016
        %3069 = vmatpush.msra.mxu0 %v3014
        %3070 = vmatpush.msra.mxu0 %v3012
        %3071 = vmatpush.msra.mxu0 %v3010
        %3072 = vmatpush.msra.mxu0 %v3008
        %3073 = vmatpush.msra.mxu0 %v3006
        %3074 = vmatpush.msra.mxu0 %v3004
        %3075 = vmatpush.msra.mxu0 %v3002
        %3076 = vmatpush.msra.mxu0 %v3000
        %3077 = vmatpush.msra.mxu0 %v2998
        %3078 = vmatmul.f32.gmra.mxu0 %v2701
        %v3079 = vpop.f32.mrf.mxu0
        %v3080 = vadd.f32 %v2880, %v3079
        %3081 = vdwg.mxu0
        %3082 = vmatpush.msra.mxu0 %v3029
        %3083 = vmatpush.msra.mxu0 %v3027
        %3084 = vmatpush.msra.mxu0 %v3025
        %3085 = vmatpush.msra.mxu0 %v3023
        %3086 = vmatpush.msra.mxu0 %v3021
        %3087 = vmatpush.msra.mxu0 %v3019
        %3088 = vmatpush.msra.mxu0 %v3017
        %3089 = vmatpush.msra.mxu0 %v3015
        %3090 = vmatpush.msra.mxu0 %v3013
        %3091 = vmatpush.msra.mxu0 %v3011
        %3092 = vmatpush.msra.mxu0 %v3009
        %3093 = vmatpush.msra.mxu0 %v3007
        %3094 = vmatpush.msra.mxu0 %v3005
        %3095 = vmatpush.msra.mxu0 %v3003
        %3096 = vmatpush.msra.mxu0 %v3001
        %3097 = vmatpush.msra.mxu0 %v2999
        %3098 = vmatmul.f32.gmra.mxu0 %v2701
        %v3099 = vpop.f32.mrf.mxu0
        %v3100 = vadd.f32 %v2900, %v3099
        %3101 = vdwg.mxu0
        %v3102 = vld [vmem:[%s8] sm:$0xff]
        %3104 = vset.pattern.permute.xlu0 0
        %3105 = vperm.xlu0 %3104, %v3102
        %v3106 = vpop.permute.xlu0 %3105
        %v3108 = vadd.f32 %v3080, %v3106
        %v3109 = vadd.f32 %v3100, %v3106
        %vm3110 = vcmp.gt.f32.partialorder %v3108, 0.0
        %vm3111 = vcmp.gt.f32.partialorder %v3109, 0.0
        %v3112 = vmul.f32 %v3108, 0.01
        %v3113 = vmul.f32 %v3109, 0.01
        %v3114 = vsel %vm3110, %v3108, %v3112
        %v3115 = vsel %vm3111, %v3109, %v3113
        %v3116 = vmul.f32 %v3114, 0.5
        %v3117 = vmul.f32 %v3115, 0.5
        %3120 = vrot.lane.b32.xlu0 %v3116, 94
        %v3121 = vpop.permute.xlu0 %3120
        %3122 = vrot.lane.b32.xlu0 %v3117, 94
        %v3123 = vpop.permute.xlu0 %3122
        %v3124 = vsel %vm466, %v3121, %v3123
        %v3128 = vadd.f32 %v2419, %v3121
        %v3129 = vadd.f32 %v2420, %v3124
        %v3130 = vadd.f32 %v2421, %v3123
        %v3131 = vld [vmem:[%s9] sm:$0xff]
        %3133 = vset.pattern.permute.xlu0 0
        %3134 = vperm.xlu0 %3133, %v3131
        %v3135 = vpop.permute.xlu0 %3134
        %v3137 = vmul.f32 %v3128, %v3135
        %v3138 = vmul.f32 %v3129, %v3135
        %v3139 = vmul.f32 %v3130, %v3135
        %vm3140 = vcmask 1048304
        %v3141 = vsel %vm3140, %v3137, 0.0
        %v3142 = vrot.slane %v3141, 4
        %v3143 = vadd.f32 %v3141, %v3142
        %v3144 = vrot.slane %v3143, 2
        %v3145 = vadd.f32 %v3143, %v3144
        %v3146 = vrot.slane %v3145, 1
        %v3147 = vadd.f32 %v3145, %v3146
        %v3148 = vrot.slane %v3138, 4
        %v3149 = vadd.f32 %v3138, %v3148
        %v3150 = vrot.slane %v3149, 2
        %v3151 = vadd.f32 %v3149, %v3150
        %v3152 = vrot.slane %v3151, 1
        %v3153 = vadd.f32 %v3151, %v3152
        %v3154 = vsel %vm466, %v3139, 0.0
        %v3155 = vrot.slane %v3154, 4
        %v3156 = vadd.f32 %v3154, %v3155
        %v3157 = vrot.slane %v3156, 2
        %v3158 = vadd.f32 %v3156, %v3157
        %v3159 = vrot.slane %v3158, 1
        %v3160 = vadd.f32 %v3158, %v3159
        %v3161 = vld [vmem:[#allocation2] sm:$0x1]
        %3163 = vset.pattern.permute.xlu0 0
        %3164 = vperm.xlu0 %3163, %v3161
        %v3165 = vpop.permute.xlu0 %3164
        %v3167 = vperm.slane %v3165, 0
        %v3168 = vadd.f32 %v3147, %v3167
        %v3169 = vadd.f32 %v3153, %v3167
        %v3170 = vadd.f32 %v3160, %v3167
        %v3174 = vrot.slane %v3169, 7
        %v3175 = vrot.slane %v3170, 6
        %vm3176 = vcmask 1040384
        %v3177 = vsel %vm3176, %v3168, %v3174
        %vm3178 = vcmask 1041408
        %v3179 = vsel %vm3178, %v3177, %v3175
        %3180 = vrot.lane.b32.xlu0 %v3179, 34
        %v3181 = vpop.permute.xlu0 %3180
        %v3182 = vrot.slane %v3181, 1
        %v3183 = vsel %vm1411, %v3181, %v3182
        %v3185 = vlaneseq
        %vm3186 = vcmp.ge.s32.totalorder %v3185, 0
        %vm3187 = vcmp.lt.s32.totalorder %v3185, 256
        %vm3188 = vmand %vm3186, %vm3187
        %3189 = vst.msk [vmem:[%s451] sm:$0x3] %vm3188, %v3183
        %s3190 = sand.u32 %s276, 1
        %s3191 = scalar_lea.sflag [#allocation5], %s3190
        %s3192 = sand.u32 %s276, 1
        %s3193 = smul.addr %s3192, 2
        %s3194 = scalar_lea.vmem [#allocation11], %s3193
        // Predicated region
        $region81: #{tpu_custom_call.1} parent=63 // pred_check
          %p3195 = pneg %p286
        $region82: #{tpu_custom_call.1} parent=63 // pred_check_branch
          %3197 = sbr.rel (%p3195) target = $region84
        $region83: #{tpu_custom_call.1} parent=63 // pred_region
          %3199 = vsyncadd %s3191, 0
          %s3200 = smul.addr %s32, 2
          %s3201 = scalar_lea.hbm %s11, %s3200
          %s3203 = sshll.u32 %s3194, 4
          %s3204 = int_to_ptr.vmem [resolvable:$true] %s3203
          %s3205 = sshll.u32 %s3201, 4
          %s3206 = int_to_ptr.hbm [resolvable:$true] %s3205
          %3208 = dma.vmem_to_hbm [thread:$0]  %s3204, 32, %s3206, %s3191
        $region84: #{tpu_custom_call.1} parent=63 // pred_fallthru
          _
      $region64: #{tpu_custom_call.1} parent=5 // pred_fallthru
        _
      %p3209 = scmp.le.s32.totalorder 2, %s27
      // Predicated region
      $region85: #{tpu_custom_call.1} parent=5 // pred_check
        %p3210 = pneg %p3209
      $region86: #{tpu_custom_call.1} parent=5 // pred_check_branch
        %3212 = sbr.rel (%p3210) target = $region88
      $region87: #{tpu_custom_call.1} parent=5 // pred_region
        %s3213 = ssub.s32 %s27, 2
        // Predicated region
        $region89: #{tpu_custom_call.1} parent=87 // pred_check
          %p3214 = pneg %p292
        $region90: #{tpu_custom_call.1} parent=87 // pred_check_branch
          %3216 = sbr.rel (%p3214) target = $region92
        $region91: #{tpu_custom_call.1} parent=87 // pred_region
          %s3217 = sand.u32 %s277, 1
          %s3218 = scalar_lea.sflag [#allocation5], %s3217
          %s3219 = sand.u32 %s277, 1
          %s3220 = smul.addr %s3219, 2
          %s3221 = scalar_lea.vmem [#allocation11], %s3220
          %3223 = dma.done %s3218, 32
        $region92: #{tpu_custom_call.1} parent=87 // pred_fallthru
          _
      $region88: #{tpu_custom_call.1} parent=5 // pred_fallthru
        _
    $region6: #{tpu_custom_call.1} parent=1 // loop_footer
      %s31 = sadd.s32 1, %s27
    $region7: #{tpu_custom_call.1} parent=1 // loop_footer_branch
      %26 = sbr.rel target = $region3
    $region8: #{tpu_custom_call.1} parent=1 // loop_exit
      _
    %3224 = vsyncpa [#allocation4], 1
    %s3225 = scalar_lea.sflag [#allocation4], 1
    %3226 = vsyncpa %s3225, 1
    %3227 = vsyncpa [#allocation7], 1
    %3228 = vsyncpa [#allocation10], 1
    %3229 = vsyncpa [#allocation5], 1
    %s3230 = scalar_lea.sflag [#allocation5], 1
    %3231 = vsyncpa %s3230, 1

</llo_original>
